<compile_context>
chip_gen: v7x
topology: tpu7x:2x2x1
jax: 0.10.0
libtpu: 0.0.40
codegen_flags: <defaults>
</compile_context>

<pallas_src>
import functools

import jax
import jax.numpy as jnp
from jax import lax
from jax.experimental import pallas as pl
from jax.experimental.pallas import tpu as pltpu


def _gbm_loss_kernel(t_ref,       # SMEM (B,) int32          -- scalar prefetch
                     x_hbm,       # ANY  (B*N, C, HW)        full timeseries, stays in HBM
                     wt_ref,      # VMEM (Bt, C, HW)         Brownian sum W_t
                     bias_ref,    # VMEM (Bt, 2C, 1)         conv_b + t * time_w
                     w_ref,       # SMEM (2C, C)             1x1-conv weights (scalars)
                     out_ref,     # VMEM (1, 8, 128)         [err_sum, kl_sum] partials
                     win_buf,     # VMEM scratch (Bt, 2k+1, C, HW)
                     sem,         # DMA sems (Bt,)
                     *, k, c, win, n_total, bt, loss_type):
    b0 = pl.program_id(0) * bt

    # Gather the (2k+1, C, HW) sub-timeseries window of every batch element in
    # this block straight from HBM, offset by the prefetched t (data-dependent).
    copies = []
    for j in range(bt):
        row0 = (b0 + j) * n_total + (t_ref[b0 + j] - k)
        cp = pltpu.make_async_copy(x_hbm.at[pl.ds(row0, win)], win_buf.at[j], sem.at[j])
        cp.start()
        copies.append(cp)
    for cp in copies:
        cp.wait()

    inv_win = jnp.float32(1.0 / win)
    inv_wm1 = jnp.float32(1.0 / (win - 1))

    # Frame k-1 (the model input), all input channels -- reused by the FMA chain.
    x_mid = [win_buf[:, k - 1, j, :] for j in range(c)]          # each (Bt, HW)

    err_acc = jnp.float32(0.0)   # l1 (or l2) partial sum
    kl_acc = jnp.float32(0.0)    # KL partial sum
    for ch in range(c):
        frames = [win_buf[:, i, ch, :] for i in range(win)]      # (Bt, HW) each
        s = frames[0]
        for i in range(1, win):
            s = s + frames[i]
        gt_mu = s * inv_win                                      # torch.mean(dim=1)
        d0 = frames[0] - gt_mu
        v = d0 * d0
        for i in range(1, win):
            di = frames[i] - gt_mu
            v = v + di * di
        gt_sigma = jnp.maximum(jnp.sqrt(v * inv_wm1), 1e-7)      # clamp(std, 1e-7), unbiased

        # model(x_mid, t): 1x1 conv realized as scalar-weight FMAs on the VPU
        # (C=4 is far too small for the MXU) + precomputed per-element bias.
        p_mu = bias_ref[:, ch, :]                                # (Bt, 1) broadcasts over lanes
        p_sg = bias_ref[:, c + ch, :]
        for j in range(c):
            p_mu = p_mu + w_ref[ch, j] * x_mid[j]
            p_sg = p_sg + w_ref[c + ch, j] * x_mid[j]
        p_sg = jnp.maximum(p_sg, 1e-7)                           # clamp(err[:, C:], 1e-7)

        # GBM propagator (sign convention follows the reference: +0.5*sigma^2).
        w_t = wt_ref[:, ch, :]
        x_t = x_mid[ch] * jnp.exp(p_mu + 0.5 * p_sg * p_sg + p_sg * w_t)

        diff = x_t - frames[k]
        if loss_type == "l1":
            err_acc = err_acc + jnp.sum(jnp.abs(diff))           # .abs().mean() numerator
        else:  # "l2"
            err_acc = err_acc + jnp.sum(diff * diff)             # F.mse_loss numerator

        # KL( N(p_mu, p_sg) || N(gt_mu, gt_sigma) ); divisions moved to the EUP.
        inv_gt = pl.reciprocal(gt_sigma, approx=True)
        kl = (jnp.log(gt_sigma) - jnp.log(p_sg)
              + (p_sg * p_sg + (p_mu - gt_mu) ** 2) * (0.5 * inv_gt * inv_gt)
              - 0.5)
        kl_acc = kl_acc + jnp.sum(kl)

    # Single merged lane-dense output tile: sublane 0 = err sum, sublane 1 = KL sum.
    sub = lax.broadcasted_iota(jnp.int32, (1, 8, 128), 1)
    out_ref[...] = jnp.where(sub == 0, err_acc,
                             jnp.where(sub == 1, kl_acc, jnp.float32(0.0)))


def _pick_block_batch(b, cap=32):
    """Largest divisor of b that is <= cap.

    Cap keeps vreg pressure and per-step VMEM modest (well under v7x's smaller
    64 MiB VMEM: per-element window footprint is ~(2k+2)*C*HW*4 B).
    """
    best = 1
    for d in range(1, min(b, cap) + 1):
        if b % d == 0:
            best = d
    return best


def gbm_loss_pallas(t, x_flat, w_t, bias, conv_w, *, k, channels, n_total, batch,
                    loss_type="l1"):
    """Fused loss kernel. Returns (err_sum_total, kl_sum_total) scalars."""
    b, c = batch, channels
    hw = w_t.shape[-1]
    win = 2 * k + 1
    bt = _pick_block_batch(b)
    nb = b // bt

    kern = functools.partial(_gbm_loss_kernel, k=k, c=c, win=win,
                             n_total=n_total, bt=bt, loss_type=loss_type)

    grid_spec = pltpu.PrefetchScalarGridSpec(
        num_scalar_prefetch=1,                       # t (B,) int32 lands in SMEM
        grid=(nb,),
        in_specs=[
            pl.BlockSpec(memory_space=pl.ANY),                         # x stays in HBM
            pl.BlockSpec((bt, c, hw), lambda i, t_ref: (i, 0, 0)),     # W_t block
            pl.BlockSpec((bt, 2 * c, 1), lambda i, t_ref: (i, 0, 0)),  # conv_b + t*time_w
            pl.BlockSpec(memory_space=pltpu.MemorySpace.SMEM),         # conv_w scalars
        ],
        out_specs=pl.BlockSpec((1, 8, 128), lambda i, t_ref: (i, 0, 0)),
        scratch_shapes=[
            pltpu.VMEM((bt, win, c, hw), jnp.float32),  # gathered windows
            pltpu.SemaphoreType.DMA((bt,)),
        ],
    )

    out = pl.pallas_call(
        kern,
        out_shape=jax.ShapeDtypeStruct((nb, 8, 128), jnp.float32),
        grid_spec=grid_spec,
        compiler_params=pltpu.CompilerParams(
            dimension_semantics=("parallel",)),      # batch blocks independent (v7x: 2 TCs)
    )(t.astype(jnp.int32), x_flat, w_t, bias, conv_w)

    return jnp.sum(out[:, 0, 0]), jnp.sum(out[:, 1, 0])


def gbm_forward(x, params, key, *, image_size, channels, k, timesteps, loss_type="l1"):
    """Mirrors GBM.forward -> p_losses. x: (B, N, C, H, W) float32 frames."""
    if x.ndim == 4:                        # x[:, :, None] in the reference
        x = x[:, :, None]
    b, n, c, h, w = x.shape
    assert h == image_size and w == image_size, "image size mismatch"
    assert c == channels, "channel count mismatch"
    assert n >= timesteps - 1, "need >= timesteps-1 frames for the window gather"
    if loss_type not in ("l1", "l2"):
        raise NotImplementedError(f"loss_type={loss_type}")

    kt, kn = jax.random.split(key)
    # t ~ randint(k, timesteps - k - 1)   (upper bound exclusive, like torch.randint)
    t = jax.random.randint(kt, (b,), k, timesteps - k - 1, dtype=jnp.int32)
    t_f = t.astype(jnp.float32)

    # W_t = sum of t iid N(0,1) frames == sqrt(t) * N(0,1): same distribution,
    # avoids materializing a (B, T, C, H, W) noise tensor and the einsum.
    w_t = jnp.sqrt(t_f)[:, None, None] * jax.random.normal(kn, (b, c, h * w), jnp.float32)

    # Per-element model bias: conv_b + t * time_w  (tiny (B, 2C, 1) precompute).
    bias = params["conv_b"][None, :, :] + t_f[:, None, None] * params["time_w"][None, :, :]

    # Flatten (B, N, C, H, W) -> (B*N, C, HW) so the kernel's window DMA is a
    # single contiguous-row slice at offset b*N + (t - k).
    x_flat = x.reshape(b * n, c, h * w).astype(jnp.float32)

    err_sum, kl_sum = gbm_loss_pallas(
        t, x_flat, w_t, bias, params["conv_w"],
        k=k, channels=channels, n_total=n, batch=b, loss_type=loss_type)

    denom = jnp.float32(b * c * h * w)
    # .abs().mean() (or F.mse_loss) + kl_divergence(p, q).mean()
    return err_sum / denom + kl_sum / denom


if __name__ == "__main__":
    key = jax.random.PRNGKey(0)
    k_x, k_w, k_b, k_tw, k_fwd = jax.random.split(key, 5)

    B, C, H, W = 2, 4, 16, 16
    K = 3                    # subtimeseries_length
    TIMESTEPS = 20           # num_timesteps (small for the demo)
    N = TIMESTEPS            # frames available in the timeseries

    x = jax.random.normal(k_x, (B, N, C, H, W), dtype=jnp.float32)

    # Deterministic synthetic "model" parameters (1x1 conv C -> 2C + time embedding).
    params = {
        "conv_w": 0.1 * jax.random.normal(k_w, (2 * C, C), dtype=jnp.float32),
        "conv_b": 0.01 * jax.random.normal(k_b, (2 * C, 1), dtype=jnp.float32),
        "time_w": 0.001 * jax.random.normal(k_tw, (2 * C, 1), dtype=jnp.float32),
    }

    loss = gbm_forward(x, params, k_fwd,
                       image_size=H, channels=C, k=K, timesteps=TIMESTEPS)
    jax.block_until_ready(loss)
    print("KERNEL_OK")
</pallas_src>

<mosaic_0001>
module attributes {stable_mosaic.version = 11 : i64} {
  func.func @_gbm_loss_kernel(%arg0: i32, %arg1: memref<2xi32, #tpu.memory_space<smem>>, %arg2: memref<40x4x256xf32, #tpu.memory_space<any>>, %arg3: memref<2x4x256xf32, #tpu.memory_space<vmem>>, %arg4: memref<2x8x1xf32, #tpu.memory_space<vmem>>, %arg5: memref<8x4xf32, #tpu.memory_space<smem>>, %arg6: memref<1x8x128xf32, #tpu.memory_space<vmem>>, %arg7: memref<2x7x4x256xf32, #tpu.memory_space<vmem>>, %arg8: memref<2x!tpu.dma_semaphore, #tpu.memory_space<semaphore_mem>>) attributes {dimension_semantics = [#tpu.dimension_semantics<parallel>], iteration_bounds = array<i64: 1>, scalar_prefetch = 1 : i64, scratch_operands = 2 : i64, tpu.core_type = #tpu.core_type<tc>, window_params = [{}, {transform_indices = @transform_1, window_bounds = array<i64: 2, 4, 256>}, {transform_indices = @transform_2, window_bounds = array<i64: 2, 8, 1>}, {transform_indices = @transform_3, window_bounds = array<i64: 8, 4>}, {transform_indices = @transform_4, window_bounds = array<i64: 1, 8, 128>}]} {
    %c2_i32 = arith.constant 2 : i32
    %0 = arith.muli %arg0, %c2_i32 : i32
    %c0_i32 = arith.constant 0 : i32
    %1 = arith.addi %0, %c0_i32 : i32
    %c20_i32 = arith.constant 20 : i32
    %2 = arith.muli %1, %c20_i32 : i32
    %c0_i32_0 = arith.constant 0 : i32
    %3 = arith.addi %0, %c0_i32_0 : i32
    %4 = arith.index_cast %3 : i32 to index
    %5 = memref.load %arg1[%4] : memref<2xi32, #tpu.memory_space<smem>>
    %c3_i32 = arith.constant 3 : i32
    %6 = arith.subi %5, %c3_i32 : i32
    %7 = arith.addi %2, %6 : i32
    %c0_i32_1 = arith.constant 0 : i32
    %c0_i32_2 = arith.constant 0 : i32
    %c0_i32_3 = arith.constant 0 : i32
    %c0_i32_4 = arith.constant 0 : i32
    %8 = tpu.memref_slice %arg2[%7, %c0_i32_3, %c0_i32_4] : memref<40x4x256xf32, #tpu.memory_space<any>> -> memref<7x4x256xf32, #tpu.memory_space<any>>
    %c0_i32_5 = arith.constant 0 : i32
    %c0_i32_6 = arith.constant 0 : i32
    %c0_i32_7 = arith.constant 0 : i32
    %9 = tpu.memref_slice %arg7[%c0_i32_1, %c0_i32_5, %c0_i32_6, %c0_i32_7] : memref<2x7x4x256xf32, #tpu.memory_space<vmem>> -> memref<1x7x4x256xf32, #tpu.memory_space<vmem>>
    %10 = tpu.memref_squeeze %9 : memref<1x7x4x256xf32, #tpu.memory_space<vmem>> -> memref<7x4x256xf32, #tpu.memory_space<vmem>>
    %11 = tpu.memref_slice %arg8[%c0_i32_2] : memref<2x!tpu.dma_semaphore, #tpu.memory_space<semaphore_mem>> -> memref<1x!tpu.dma_semaphore, #tpu.memory_space<semaphore_mem>>
    %12 = tpu.memref_squeeze %11 : memref<1x!tpu.dma_semaphore, #tpu.memory_space<semaphore_mem>> -> memref<!tpu.dma_semaphore, #tpu.memory_space<semaphore_mem>>
    tpu.enqueue_dma source(%8 : memref<7x4x256xf32, #tpu.memory_space<any>>) target(%10 : memref<7x4x256xf32, #tpu.memory_space<vmem>>) target_semaphore(%12 : memref<!tpu.dma_semaphore, #tpu.memory_space<semaphore_mem>>)
    %c1_i32 = arith.constant 1 : i32
    %13 = arith.addi %0, %c1_i32 : i32
    %c20_i32_8 = arith.constant 20 : i32
    %14 = arith.muli %13, %c20_i32_8 : i32
    %c1_i32_9 = arith.constant 1 : i32
    %15 = arith.addi %0, %c1_i32_9 : i32
    %16 = arith.index_cast %15 : i32 to index
    %17 = memref.load %arg1[%16] : memref<2xi32, #tpu.memory_space<smem>>
    %c3_i32_10 = arith.constant 3 : i32
    %18 = arith.subi %17, %c3_i32_10 : i32
    %19 = arith.addi %14, %18 : i32
    %c1_i32_11 = arith.constant 1 : i32
    %c1_i32_12 = arith.constant 1 : i32
    %c0_i32_13 = arith.constant 0 : i32
    %c0_i32_14 = arith.constant 0 : i32
    %20 = tpu.memref_slice %arg2[%19, %c0_i32_13, %c0_i32_14] : memref<40x4x256xf32, #tpu.memory_space<any>> -> memref<7x4x256xf32, #tpu.memory_space<any>>
    %c0_i32_15 = arith.constant 0 : i32
    %c0_i32_16 = arith.constant 0 : i32
    %c0_i32_17 = arith.constant 0 : i32
    %21 = tpu.memref_slice %arg7[%c1_i32_11, %c0_i32_15, %c0_i32_16, %c0_i32_17] : memref<2x7x4x256xf32, #tpu.memory_space<vmem>> -> memref<1x7x4x256xf32, #tpu.memory_space<vmem>>
    %22 = tpu.memref_squeeze %21 : memref<1x7x4x256xf32, #tpu.memory_space<vmem>> -> memref<7x4x256xf32, #tpu.memory_space<vmem>>
    %23 = tpu.memref_slice %arg8[%c1_i32_12] : memref<2x!tpu.dma_semaphore, #tpu.memory_space<semaphore_mem>> -> memref<1x!tpu.dma_semaphore, #tpu.memory_space<semaphore_mem>>
    %24 = tpu.memref_squeeze %23 : memref<1x!tpu.dma_semaphore, #tpu.memory_space<semaphore_mem>> -> memref<!tpu.dma_semaphore, #tpu.memory_space<semaphore_mem>>
    tpu.enqueue_dma source(%20 : memref<7x4x256xf32, #tpu.memory_space<any>>) target(%22 : memref<7x4x256xf32, #tpu.memory_space<vmem>>) target_semaphore(%24 : memref<!tpu.dma_semaphore, #tpu.memory_space<semaphore_mem>>)
    %c0_i32_18 = arith.constant 0 : i32
    %c0_i32_19 = arith.constant 0 : i32
    %c0_i32_20 = arith.constant 0 : i32
    %c0_i32_21 = arith.constant 0 : i32
    %25 = tpu.memref_slice %arg2[%7, %c0_i32_20, %c0_i32_21] : memref<40x4x256xf32, #tpu.memory_space<any>> -> memref<7x4x256xf32, #tpu.memory_space<any>>
    %c0_i32_22 = arith.constant 0 : i32
    %c0_i32_23 = arith.constant 0 : i32
    %c0_i32_24 = arith.constant 0 : i32
    %26 = tpu.memref_slice %arg7[%c0_i32_18, %c0_i32_22, %c0_i32_23, %c0_i32_24] : memref<2x7x4x256xf32, #tpu.memory_space<vmem>> -> memref<1x7x4x256xf32, #tpu.memory_space<vmem>>
    %27 = tpu.memref_squeeze %26 : memref<1x7x4x256xf32, #tpu.memory_space<vmem>> -> memref<7x4x256xf32, #tpu.memory_space<vmem>>
    %28 = tpu.memref_slice %arg8[%c0_i32_19] : memref<2x!tpu.dma_semaphore, #tpu.memory_space<semaphore_mem>> -> memref<1x!tpu.dma_semaphore, #tpu.memory_space<semaphore_mem>>
    %29 = tpu.memref_squeeze %28 : memref<1x!tpu.dma_semaphore, #tpu.memory_space<semaphore_mem>> -> memref<!tpu.dma_semaphore, #tpu.memory_space<semaphore_mem>>
    tpu.wait_dma2 semaphore(%29 : memref<!tpu.dma_semaphore, #tpu.memory_space<semaphore_mem>>) src(%25 : memref<7x4x256xf32, #tpu.memory_space<any>>) dst(%27 : memref<7x4x256xf32, #tpu.memory_space<vmem>>)
    %c1_i32_25 = arith.constant 1 : i32
    %c1_i32_26 = arith.constant 1 : i32
    %c0_i32_27 = arith.constant 0 : i32
    %c0_i32_28 = arith.constant 0 : i32
    %30 = tpu.memref_slice %arg2[%19, %c0_i32_27, %c0_i32_28] : memref<40x4x256xf32, #tpu.memory_space<any>> -> memref<7x4x256xf32, #tpu.memory_space<any>>
    %c0_i32_29 = arith.constant 0 : i32
    %c0_i32_30 = arith.constant 0 : i32
    %c0_i32_31 = arith.constant 0 : i32
    %31 = tpu.memref_slice %arg7[%c1_i32_25, %c0_i32_29, %c0_i32_30, %c0_i32_31] : memref<2x7x4x256xf32, #tpu.memory_space<vmem>> -> memref<1x7x4x256xf32, #tpu.memory_space<vmem>>
    %32 = tpu.memref_squeeze %31 : memref<1x7x4x256xf32, #tpu.memory_space<vmem>> -> memref<7x4x256xf32, #tpu.memory_space<vmem>>
    %33 = tpu.memref_slice %arg8[%c1_i32_26] : memref<2x!tpu.dma_semaphore, #tpu.memory_space<semaphore_mem>> -> memref<1x!tpu.dma_semaphore, #tpu.memory_space<semaphore_mem>>
    %34 = tpu.memref_squeeze %33 : memref<1x!tpu.dma_semaphore, #tpu.memory_space<semaphore_mem>> -> memref<!tpu.dma_semaphore, #tpu.memory_space<semaphore_mem>>
    tpu.wait_dma2 semaphore(%34 : memref<!tpu.dma_semaphore, #tpu.memory_space<semaphore_mem>>) src(%30 : memref<7x4x256xf32, #tpu.memory_space<any>>) dst(%32 : memref<7x4x256xf32, #tpu.memory_space<vmem>>)
    %c0 = arith.constant 0 : index
    %c2 = arith.constant 2 : index
    %c0_32 = arith.constant 0 : index
    %c0_33 = arith.constant 0 : index
    %35 = vector.load %arg7[%c0, %c2, %c0_32, %c0_33] : memref<2x7x4x256xf32, #tpu.memory_space<vmem>>, vector<2x1x1x256xf32>
    %36 = vector.shape_cast %35 : vector<2x1x1x256xf32> to vector<2x256xf32>
    %c0_34 = arith.constant 0 : index
    %c2_35 = arith.constant 2 : index
    %c1 = arith.constant 1 : index
    %c0_36 = arith.constant 0 : index
    %37 = vector.load %arg7[%c0_34, %c2_35, %c1, %c0_36] : memref<2x7x4x256xf32, #tpu.memory_space<vmem>>, vector<2x1x1x256xf32>
    %38 = vector.shape_cast %37 : vector<2x1x1x256xf32> to vector<2x256xf32>
    %c0_37 = arith.constant 0 : index
    %c2_38 = arith.constant 2 : index
    %c2_39 = arith.constant 2 : index
    %c0_40 = arith.constant 0 : index
    %39 = vector.load %arg7[%c0_37, %c2_38, %c2_39, %c0_40] : memref<2x7x4x256xf32, #tpu.memory_space<vmem>>, vector<2x1x1x256xf32>
    %40 = vector.shape_cast %39 : vector<2x1x1x256xf32> to vector<2x256xf32>
    %c0_41 = arith.constant 0 : index
    %c2_42 = arith.constant 2 : index
    %c3 = arith.constant 3 : index
    %c0_43 = arith.constant 0 : index
    %41 = vector.load %arg7[%c0_41, %c2_42, %c3, %c0_43] : memref<2x7x4x256xf32, #tpu.memory_space<vmem>>, vector<2x1x1x256xf32>
    %42 = vector.shape_cast %41 : vector<2x1x1x256xf32> to vector<2x256xf32>
    %c0_44 = arith.constant 0 : index
    %c0_45 = arith.constant 0 : index
    %c0_46 = arith.constant 0 : index
    %c0_47 = arith.constant 0 : index
    %43 = vector.load %arg7[%c0_44, %c0_45, %c0_46, %c0_47] : memref<2x7x4x256xf32, #tpu.memory_space<vmem>>, vector<2x1x1x256xf32>
    %44 = vector.shape_cast %43 : vector<2x1x1x256xf32> to vector<2x256xf32>
    %c0_48 = arith.constant 0 : index
    %c1_49 = arith.constant 1 : index
    %c0_50 = arith.constant 0 : index
    %c0_51 = arith.constant 0 : index
    %45 = vector.load %arg7[%c0_48, %c1_49, %c0_50, %c0_51] : memref<2x7x4x256xf32, #tpu.memory_space<vmem>>, vector<2x1x1x256xf32>
    %46 = vector.shape_cast %45 : vector<2x1x1x256xf32> to vector<2x256xf32>
    %c0_52 = arith.constant 0 : index
    %c2_53 = arith.constant 2 : index
    %c0_54 = arith.constant 0 : index
    %c0_55 = arith.constant 0 : index
    %47 = vector.load %arg7[%c0_52, %c2_53, %c0_54, %c0_55] : memref<2x7x4x256xf32, #tpu.memory_space<vmem>>, vector<2x1x1x256xf32>
    %48 = vector.shape_cast %47 : vector<2x1x1x256xf32> to vector<2x256xf32>
    %c0_56 = arith.constant 0 : index
    %c3_57 = arith.constant 3 : index
    %c0_58 = arith.constant 0 : index
    %c0_59 = arith.constant 0 : index
    %49 = vector.load %arg7[%c0_56, %c3_57, %c0_58, %c0_59] : memref<2x7x4x256xf32, #tpu.memory_space<vmem>>, vector<2x1x1x256xf32>
    %50 = vector.shape_cast %49 : vector<2x1x1x256xf32> to vector<2x256xf32>
    %c0_60 = arith.constant 0 : index
    %c4 = arith.constant 4 : index
    %c0_61 = arith.constant 0 : index
    %c0_62 = arith.constant 0 : index
    %51 = vector.load %arg7[%c0_60, %c4, %c0_61, %c0_62] : memref<2x7x4x256xf32, #tpu.memory_space<vmem>>, vector<2x1x1x256xf32>
    %52 = vector.shape_cast %51 : vector<2x1x1x256xf32> to vector<2x256xf32>
    %c0_63 = arith.constant 0 : index
    %c5 = arith.constant 5 : index
    %c0_64 = arith.constant 0 : index
    %c0_65 = arith.constant 0 : index
    %53 = vector.load %arg7[%c0_63, %c5, %c0_64, %c0_65] : memref<2x7x4x256xf32, #tpu.memory_space<vmem>>, vector<2x1x1x256xf32>
    %54 = vector.shape_cast %53 : vector<2x1x1x256xf32> to vector<2x256xf32>
    %c0_66 = arith.constant 0 : index
    %c6 = arith.constant 6 : index
    %c0_67 = arith.constant 0 : index
    %c0_68 = arith.constant 0 : index
    %55 = vector.load %arg7[%c0_66, %c6, %c0_67, %c0_68] : memref<2x7x4x256xf32, #tpu.memory_space<vmem>>, vector<2x1x1x256xf32>
    %56 = vector.shape_cast %55 : vector<2x1x1x256xf32> to vector<2x256xf32>
    %57 = arith.addf %44, %46 : vector<2x256xf32>
    %58 = arith.addf %57, %48 : vector<2x256xf32>
    %59 = arith.addf %58, %50 : vector<2x256xf32>
    %60 = arith.addf %59, %52 : vector<2x256xf32>
    %61 = arith.addf %60, %54 : vector<2x256xf32>
    %62 = arith.addf %61, %56 : vector<2x256xf32>
    %cst = arith.constant 0.142857149 : f32
    %63 = vector.broadcast %cst : f32 to vector<2x256xf32>
    %64 = arith.mulf %62, %63 : vector<2x256xf32>
    %65 = arith.subf %44, %64 : vector<2x256xf32>
    %66 = arith.mulf %65, %65 : vector<2x256xf32>
    %67 = arith.subf %46, %64 : vector<2x256xf32>
    %68 = arith.mulf %67, %67 : vector<2x256xf32>
    %69 = arith.addf %66, %68 : vector<2x256xf32>
    %70 = arith.subf %48, %64 : vector<2x256xf32>
    %71 = arith.mulf %70, %70 : vector<2x256xf32>
    %72 = arith.addf %69, %71 : vector<2x256xf32>
    %73 = arith.subf %50, %64 : vector<2x256xf32>
    %74 = arith.mulf %73, %73 : vector<2x256xf32>
    %75 = arith.addf %72, %74 : vector<2x256xf32>
    %76 = arith.subf %52, %64 : vector<2x256xf32>
    %77 = arith.mulf %76, %76 : vector<2x256xf32>
    %78 = arith.addf %75, %77 : vector<2x256xf32>
    %79 = arith.subf %54, %64 : vector<2x256xf32>
    %80 = arith.mulf %79, %79 : vector<2x256xf32>
    %81 = arith.addf %78, %80 : vector<2x256xf32>
    %82 = arith.subf %56, %64 : vector<2x256xf32>
    %83 = arith.mulf %82, %82 : vector<2x256xf32>
    %84 = arith.addf %81, %83 : vector<2x256xf32>
    %cst_69 = arith.constant 0.166666672 : f32
    %85 = vector.broadcast %cst_69 : f32 to vector<2x256xf32>
    %86 = arith.mulf %84, %85 : vector<2x256xf32>
    %87 = math.sqrt %86 : vector<2x256xf32>
    %cst_70 = arith.constant 1.000000e-07 : f32
    %88 = vector.broadcast %cst_70 : f32 to vector<2x256xf32>
    %89 = arith.maximumf %87, %88 : vector<2x256xf32>
    %c0_71 = arith.constant 0 : index
    %c0_72 = arith.constant 0 : index
    %c0_73 = arith.constant 0 : index
    %90 = vector.load %arg4[%c0_71, %c0_72, %c0_73] : memref<2x8x1xf32, #tpu.memory_space<vmem>>, vector<2x1x1xf32>
    %91 = vector.shape_cast %90 : vector<2x1x1xf32> to vector<2x1xf32>
    %c0_74 = arith.constant 0 : index
    %c4_75 = arith.constant 4 : index
    %c0_76 = arith.constant 0 : index
    %92 = vector.load %arg4[%c0_74, %c4_75, %c0_76] : memref<2x8x1xf32, #tpu.memory_space<vmem>>, vector<2x1x1xf32>
    %93 = vector.shape_cast %92 : vector<2x1x1xf32> to vector<2x1xf32>
    %c0_77 = arith.constant 0 : index
    %c0_78 = arith.constant 0 : index
    %94 = memref.load %arg5[%c0_77, %c0_78] : memref<8x4xf32, #tpu.memory_space<smem>>
    %95 = vector.broadcast %94 : f32 to vector<2x256xf32>
    %96 = arith.mulf %95, %36 : vector<2x256xf32>
    %97 = vector.broadcast %91 : vector<2x1xf32> to vector<2x256xf32>
    %98 = arith.addf %97, %96 : vector<2x256xf32>
    %c4_79 = arith.constant 4 : index
    %c0_80 = arith.constant 0 : index
    %99 = memref.load %arg5[%c4_79, %c0_80] : memref<8x4xf32, #tpu.memory_space<smem>>
    %100 = vector.broadcast %99 : f32 to vector<2x256xf32>
    %101 = arith.mulf %100, %36 : vector<2x256xf32>
    %102 = vector.broadcast %93 : vector<2x1xf32> to vector<2x256xf32>
    %103 = arith.addf %102, %101 : vector<2x256xf32>
    %c0_81 = arith.constant 0 : index
    %c1_82 = arith.constant 1 : index
    %104 = memref.load %arg5[%c0_81, %c1_82] : memref<8x4xf32, #tpu.memory_space<smem>>
    %105 = vector.broadcast %104 : f32 to vector<2x256xf32>
    %106 = arith.mulf %105, %38 : vector<2x256xf32>
    %107 = arith.addf %98, %106 : vector<2x256xf32>
    %c4_83 = arith.constant 4 : index
    %c1_84 = arith.constant 1 : index
    %108 = memref.load %arg5[%c4_83, %c1_84] : memref<8x4xf32, #tpu.memory_space<smem>>
    %109 = vector.broadcast %108 : f32 to vector<2x256xf32>
    %110 = arith.mulf %109, %38 : vector<2x256xf32>
    %111 = arith.addf %103, %110 : vector<2x256xf32>
    %c0_85 = arith.constant 0 : index
    %c2_86 = arith.constant 2 : index
    %112 = memref.load %arg5[%c0_85, %c2_86] : memref<8x4xf32, #tpu.memory_space<smem>>
    %113 = vector.broadcast %112 : f32 to vector<2x256xf32>
    %114 = arith.mulf %113, %40 : vector<2x256xf32>
    %115 = arith.addf %107, %114 : vector<2x256xf32>
    %c4_87 = arith.constant 4 : index
    %c2_88 = arith.constant 2 : index
    %116 = memref.load %arg5[%c4_87, %c2_88] : memref<8x4xf32, #tpu.memory_space<smem>>
    %117 = vector.broadcast %116 : f32 to vector<2x256xf32>
    %118 = arith.mulf %117, %40 : vector<2x256xf32>
    %119 = arith.addf %111, %118 : vector<2x256xf32>
    %c0_89 = arith.constant 0 : index
    %c3_90 = arith.constant 3 : index
    %120 = memref.load %arg5[%c0_89, %c3_90] : memref<8x4xf32, #tpu.memory_space<smem>>
    %121 = vector.broadcast %120 : f32 to vector<2x256xf32>
    %122 = arith.mulf %121, %42 : vector<2x256xf32>
    %123 = arith.addf %115, %122 : vector<2x256xf32>
    %c4_91 = arith.constant 4 : index
    %c3_92 = arith.constant 3 : index
    %124 = memref.load %arg5[%c4_91, %c3_92] : memref<8x4xf32, #tpu.memory_space<smem>>
    %125 = vector.broadcast %124 : f32 to vector<2x256xf32>
    %126 = arith.mulf %125, %42 : vector<2x256xf32>
    %127 = arith.addf %119, %126 : vector<2x256xf32>
    %cst_93 = arith.constant 1.000000e-07 : f32
    %128 = vector.broadcast %cst_93 : f32 to vector<2x256xf32>
    %129 = arith.maximumf %127, %128 : vector<2x256xf32>
    %c0_94 = arith.constant 0 : index
    %c0_95 = arith.constant 0 : index
    %c0_96 = arith.constant 0 : index
    %130 = vector.load %arg3[%c0_94, %c0_95, %c0_96] : memref<2x4x256xf32, #tpu.memory_space<vmem>>, vector<2x1x256xf32>
    %131 = vector.shape_cast %130 : vector<2x1x256xf32> to vector<2x256xf32>
    %cst_97 = arith.constant 5.000000e-01 : f32
    %132 = vector.broadcast %cst_97 : f32 to vector<2x256xf32>
    %133 = arith.mulf %132, %129 : vector<2x256xf32>
    %134 = arith.mulf %133, %129 : vector<2x256xf32>
    %135 = arith.addf %123, %134 : vector<2x256xf32>
    %136 = arith.mulf %129, %131 : vector<2x256xf32>
    %137 = arith.addf %135, %136 : vector<2x256xf32>
    %138 = math.exp %137 : vector<2x256xf32>
    %139 = arith.mulf %36, %138 : vector<2x256xf32>
    %140 = arith.subf %139, %50 : vector<2x256xf32>
    %141 = math.absf %140 : vector<2x256xf32>
    %142 = vector.shape_cast %141 : vector<2x256xf32> to vector<1x2x256xf32>
    %cst_98 = arith.constant dense<0.000000e+00> : vector<1xf32>
    %143 = vector.multi_reduction <add>, %142, %cst_98 [1, 2] : vector<1x2x256xf32> to vector<1xf32>
    %144 = vector.shape_cast %143 : vector<1xf32> to vector<1x1x1xf32>
    %145 = vector.extract %144[0, 0, 0] : f32 from vector<1x1x1xf32>
    %cst_99 = arith.constant 0.000000e+00 : f32
    %146 = arith.addf %cst_99, %145 : f32
    %147 = tpu.reciprocal %89 {approx = true} : vector<2x256xf32> -> vector<2x256xf32>
    %148 = math.log %89 : vector<2x256xf32>
    %149 = math.log %129 : vector<2x256xf32>
    %150 = arith.subf %148, %149 : vector<2x256xf32>
    %151 = arith.mulf %129, %129 : vector<2x256xf32>
    %152 = arith.subf %123, %64 : vector<2x256xf32>
    %153 = arith.mulf %152, %152 : vector<2x256xf32>
    %154 = arith.addf %151, %153 : vector<2x256xf32>
    %cst_100 = arith.constant 5.000000e-01 : f32
    %155 = vector.broadcast %cst_100 : f32 to vector<2x256xf32>
    %156 = arith.mulf %155, %147 : vector<2x256xf32>
    %157 = arith.mulf %156, %147 : vector<2x256xf32>
    %158 = arith.mulf %154, %157 : vector<2x256xf32>
    %159 = arith.addf %150, %158 : vector<2x256xf32>
    %cst_101 = arith.constant 5.000000e-01 : f32
    %160 = vector.broadcast %cst_101 : f32 to vector<2x256xf32>
    %161 = arith.subf %159, %160 : vector<2x256xf32>
    %162 = vector.shape_cast %161 : vector<2x256xf32> to vector<1x2x256xf32>
    %cst_102 = arith.constant dense<0.000000e+00> : vector<1xf32>
    %163 = vector.multi_reduction <add>, %162, %cst_102 [1, 2] : vector<1x2x256xf32> to vector<1xf32>
    %164 = vector.shape_cast %163 : vector<1xf32> to vector<1x1x1xf32>
    %165 = vector.extract %164[0, 0, 0] : f32 from vector<1x1x1xf32>
    %cst_103 = arith.constant 0.000000e+00 : f32
    %166 = arith.addf %cst_103, %165 : f32
    %c0_104 = arith.constant 0 : index
    %c0_105 = arith.constant 0 : index
    %c1_106 = arith.constant 1 : index
    %c0_107 = arith.constant 0 : index
    %167 = vector.load %arg7[%c0_104, %c0_105, %c1_106, %c0_107] : memref<2x7x4x256xf32, #tpu.memory_space<vmem>>, vector<2x1x1x256xf32>
    %168 = vector.shape_cast %167 : vector<2x1x1x256xf32> to vector<2x256xf32>
    %c0_108 = arith.constant 0 : index
    %c1_109 = arith.constant 1 : index
    %c1_110 = arith.constant 1 : index
    %c0_111 = arith.constant 0 : index
    %169 = vector.load %arg7[%c0_108, %c1_109, %c1_110, %c0_111] : memref<2x7x4x256xf32, #tpu.memory_space<vmem>>, vector<2x1x1x256xf32>
    %170 = vector.shape_cast %169 : vector<2x1x1x256xf32> to vector<2x256xf32>
    %c0_112 = arith.constant 0 : index
    %c2_113 = arith.constant 2 : index
    %c1_114 = arith.constant 1 : index
    %c0_115 = arith.constant 0 : index
    %171 = vector.load %arg7[%c0_112, %c2_113, %c1_114, %c0_115] : memref<2x7x4x256xf32, #tpu.memory_space<vmem>>, vector<2x1x1x256xf32>
    %172 = vector.shape_cast %171 : vector<2x1x1x256xf32> to vector<2x256xf32>
    %c0_116 = arith.constant 0 : index
    %c3_117 = arith.constant 3 : index
    %c1_118 = arith.constant 1 : index
    %c0_119 = arith.constant 0 : index
    %173 = vector.load %arg7[%c0_116, %c3_117, %c1_118, %c0_119] : memref<2x7x4x256xf32, #tpu.memory_space<vmem>>, vector<2x1x1x256xf32>
    %174 = vector.shape_cast %173 : vector<2x1x1x256xf32> to vector<2x256xf32>
    %c0_120 = arith.constant 0 : index
    %c4_121 = arith.constant 4 : index
    %c1_122 = arith.constant 1 : index
    %c0_123 = arith.constant 0 : index
    %175 = vector.load %arg7[%c0_120, %c4_121, %c1_122, %c0_123] : memref<2x7x4x256xf32, #tpu.memory_space<vmem>>, vector<2x1x1x256xf32>
    %176 = vector.shape_cast %175 : vector<2x1x1x256xf32> to vector<2x256xf32>
    %c0_124 = arith.constant 0 : index
    %c5_125 = arith.constant 5 : index
    %c1_126 = arith.constant 1 : index
    %c0_127 = arith.constant 0 : index
    %177 = vector.load %arg7[%c0_124, %c5_125, %c1_126, %c0_127] : memref<2x7x4x256xf32, #tpu.memory_space<vmem>>, vector<2x1x1x256xf32>
    %178 = vector.shape_cast %177 : vector<2x1x1x256xf32> to vector<2x256xf32>
    %c0_128 = arith.constant 0 : index
    %c6_129 = arith.constant 6 : index
    %c1_130 = arith.constant 1 : index
    %c0_131 = arith.constant 0 : index
    %179 = vector.load %arg7[%c0_128, %c6_129, %c1_130, %c0_131] : memref<2x7x4x256xf32, #tpu.memory_space<vmem>>, vector<2x1x1x256xf32>
    %180 = vector.shape_cast %179 : vector<2x1x1x256xf32> to vector<2x256xf32>
    %181 = arith.addf %168, %170 : vector<2x256xf32>
    %182 = arith.addf %181, %172 : vector<2x256xf32>
    %183 = arith.addf %182, %174 : vector<2x256xf32>
    %184 = arith.addf %183, %176 : vector<2x256xf32>
    %185 = arith.addf %184, %178 : vector<2x256xf32>
    %186 = arith.addf %185, %180 : vector<2x256xf32>
    %cst_132 = arith.constant 0.142857149 : f32
    %187 = vector.broadcast %cst_132 : f32 to vector<2x256xf32>
    %188 = arith.mulf %186, %187 : vector<2x256xf32>
    %189 = arith.subf %168, %188 : vector<2x256xf32>
    %190 = arith.mulf %189, %189 : vector<2x256xf32>
    %191 = arith.subf %170, %188 : vector<2x256xf32>
    %192 = arith.mulf %191, %191 : vector<2x256xf32>
    %193 = arith.addf %190, %192 : vector<2x256xf32>
    %194 = arith.subf %172, %188 : vector<2x256xf32>
    %195 = arith.mulf %194, %194 : vector<2x256xf32>
    %196 = arith.addf %193, %195 : vector<2x256xf32>
    %197 = arith.subf %174, %188 : vector<2x256xf32>
    %198 = arith.mulf %197, %197 : vector<2x256xf32>
    %199 = arith.addf %196, %198 : vector<2x256xf32>
    %200 = arith.subf %176, %188 : vector<2x256xf32>
    %201 = arith.mulf %200, %200 : vector<2x256xf32>
    %202 = arith.addf %199, %201 : vector<2x256xf32>
    %203 = arith.subf %178, %188 : vector<2x256xf32>
    %204 = arith.mulf %203, %203 : vector<2x256xf32>
    %205 = arith.addf %202, %204 : vector<2x256xf32>
    %206 = arith.subf %180, %188 : vector<2x256xf32>
    %207 = arith.mulf %206, %206 : vector<2x256xf32>
    %208 = arith.addf %205, %207 : vector<2x256xf32>
    %cst_133 = arith.constant 0.166666672 : f32
    %209 = vector.broadcast %cst_133 : f32 to vector<2x256xf32>
    %210 = arith.mulf %208, %209 : vector<2x256xf32>
    %211 = math.sqrt %210 : vector<2x256xf32>
    %cst_134 = arith.constant 1.000000e-07 : f32
    %212 = vector.broadcast %cst_134 : f32 to vector<2x256xf32>
    %213 = arith.maximumf %211, %212 : vector<2x256xf32>
    %c0_135 = arith.constant 0 : index
    %c1_136 = arith.constant 1 : index
    %c0_137 = arith.constant 0 : index
    %214 = vector.load %arg4[%c0_135, %c1_136, %c0_137] : memref<2x8x1xf32, #tpu.memory_space<vmem>>, vector<2x1x1xf32>
    %215 = vector.shape_cast %214 : vector<2x1x1xf32> to vector<2x1xf32>
    %c0_138 = arith.constant 0 : index
    %c5_139 = arith.constant 5 : index
    %c0_140 = arith.constant 0 : index
    %216 = vector.load %arg4[%c0_138, %c5_139, %c0_140] : memref<2x8x1xf32, #tpu.memory_space<vmem>>, vector<2x1x1xf32>
    %217 = vector.shape_cast %216 : vector<2x1x1xf32> to vector<2x1xf32>
    %c1_141 = arith.constant 1 : index
    %c0_142 = arith.constant 0 : index
    %218 = memref.load %arg5[%c1_141, %c0_142] : memref<8x4xf32, #tpu.memory_space<smem>>
    %219 = vector.broadcast %218 : f32 to vector<2x256xf32>
    %220 = arith.mulf %219, %36 : vector<2x256xf32>
    %221 = vector.broadcast %215 : vector<2x1xf32> to vector<2x256xf32>
    %222 = arith.addf %221, %220 : vector<2x256xf32>
    %c5_143 = arith.constant 5 : index
    %c0_144 = arith.constant 0 : index
    %223 = memref.load %arg5[%c5_143, %c0_144] : memref<8x4xf32, #tpu.memory_space<smem>>
    %224 = vector.broadcast %223 : f32 to vector<2x256xf32>
    %225 = arith.mulf %224, %36 : vector<2x256xf32>
    %226 = vector.broadcast %217 : vector<2x1xf32> to vector<2x256xf32>
    %227 = arith.addf %226, %225 : vector<2x256xf32>
    %c1_145 = arith.constant 1 : index
    %c1_146 = arith.constant 1 : index
    %228 = memref.load %arg5[%c1_145, %c1_146] : memref<8x4xf32, #tpu.memory_space<smem>>
    %229 = vector.broadcast %228 : f32 to vector<2x256xf32>
    %230 = arith.mulf %229, %38 : vector<2x256xf32>
    %231 = arith.addf %222, %230 : vector<2x256xf32>
    %c5_147 = arith.constant 5 : index
    %c1_148 = arith.constant 1 : index
    %232 = memref.load %arg5[%c5_147, %c1_148] : memref<8x4xf32, #tpu.memory_space<smem>>
    %233 = vector.broadcast %232 : f32 to vector<2x256xf32>
    %234 = arith.mulf %233, %38 : vector<2x256xf32>
    %235 = arith.addf %227, %234 : vector<2x256xf32>
    %c1_149 = arith.constant 1 : index
    %c2_150 = arith.constant 2 : index
    %236 = memref.load %arg5[%c1_149, %c2_150] : memref<8x4xf32, #tpu.memory_space<smem>>
    %237 = vector.broadcast %236 : f32 to vector<2x256xf32>
    %238 = arith.mulf %237, %40 : vector<2x256xf32>
    %239 = arith.addf %231, %238 : vector<2x256xf32>
    %c5_151 = arith.constant 5 : index
    %c2_152 = arith.constant 2 : index
    %240 = memref.load %arg5[%c5_151, %c2_152] : memref<8x4xf32, #tpu.memory_space<smem>>
    %241 = vector.broadcast %240 : f32 to vector<2x256xf32>
    %242 = arith.mulf %241, %40 : vector<2x256xf32>
    %243 = arith.addf %235, %242 : vector<2x256xf32>
    %c1_153 = arith.constant 1 : index
    %c3_154 = arith.constant 3 : index
    %244 = memref.load %arg5[%c1_153, %c3_154] : memref<8x4xf32, #tpu.memory_space<smem>>
    %245 = vector.broadcast %244 : f32 to vector<2x256xf32>
    %246 = arith.mulf %245, %42 : vector<2x256xf32>
    %247 = arith.addf %239, %246 : vector<2x256xf32>
    %c5_155 = arith.constant 5 : index
    %c3_156 = arith.constant 3 : index
    %248 = memref.load %arg5[%c5_155, %c3_156] : memref<8x4xf32, #tpu.memory_space<smem>>
    %249 = vector.broadcast %248 : f32 to vector<2x256xf32>
    %250 = arith.mulf %249, %42 : vector<2x256xf32>
    %251 = arith.addf %243, %250 : vector<2x256xf32>
    %cst_157 = arith.constant 1.000000e-07 : f32
    %252 = vector.broadcast %cst_157 : f32 to vector<2x256xf32>
    %253 = arith.maximumf %251, %252 : vector<2x256xf32>
    %c0_158 = arith.constant 0 : index
    %c1_159 = arith.constant 1 : index
    %c0_160 = arith.constant 0 : index
    %254 = vector.load %arg3[%c0_158, %c1_159, %c0_160] : memref<2x4x256xf32, #tpu.memory_space<vmem>>, vector<2x1x256xf32>
    %255 = vector.shape_cast %254 : vector<2x1x256xf32> to vector<2x256xf32>
    %cst_161 = arith.constant 5.000000e-01 : f32
    %256 = vector.broadcast %cst_161 : f32 to vector<2x256xf32>
    %257 = arith.mulf %256, %253 : vector<2x256xf32>
    %258 = arith.mulf %257, %253 : vector<2x256xf32>
    %259 = arith.addf %247, %258 : vector<2x256xf32>
    %260 = arith.mulf %253, %255 : vector<2x256xf32>
    %261 = arith.addf %259, %260 : vector<2x256xf32>
    %262 = math.exp %261 : vector<2x256xf32>
    %263 = arith.mulf %38, %262 : vector<2x256xf32>
    %264 = arith.subf %263, %174 : vector<2x256xf32>
    %265 = math.absf %264 : vector<2x256xf32>
    %266 = vector.shape_cast %265 : vector<2x256xf32> to vector<1x2x256xf32>
    %cst_162 = arith.constant dense<0.000000e+00> : vector<1xf32>
    %267 = vector.multi_reduction <add>, %266, %cst_162 [1, 2] : vector<1x2x256xf32> to vector<1xf32>
    %268 = vector.shape_cast %267 : vector<1xf32> to vector<1x1x1xf32>
    %269 = vector.extract %268[0, 0, 0] : f32 from vector<1x1x1xf32>
    %270 = arith.addf %146, %269 : f32
    %271 = tpu.reciprocal %213 {approx = true} : vector<2x256xf32> -> vector<2x256xf32>
    %272 = math.log %213 : vector<2x256xf32>
    %273 = math.log %253 : vector<2x256xf32>
    %274 = arith.subf %272, %273 : vector<2x256xf32>
    %275 = arith.mulf %253, %253 : vector<2x256xf32>
    %276 = arith.subf %247, %188 : vector<2x256xf32>
    %277 = arith.mulf %276, %276 : vector<2x256xf32>
    %278 = arith.addf %275, %277 : vector<2x256xf32>
    %cst_163 = arith.constant 5.000000e-01 : f32
    %279 = vector.broadcast %cst_163 : f32 to vector<2x256xf32>
    %280 = arith.mulf %279, %271 : vector<2x256xf32>
    %281 = arith.mulf %280, %271 : vector<2x256xf32>
    %282 = arith.mulf %278, %281 : vector<2x256xf32>
    %283 = arith.addf %274, %282 : vector<2x256xf32>
    %cst_164 = arith.constant 5.000000e-01 : f32
    %284 = vector.broadcast %cst_164 : f32 to vector<2x256xf32>
    %285 = arith.subf %283, %284 : vector<2x256xf32>
    %286 = vector.shape_cast %285 : vector<2x256xf32> to vector<1x2x256xf32>
    %cst_165 = arith.constant dense<0.000000e+00> : vector<1xf32>
    %287 = vector.multi_reduction <add>, %286, %cst_165 [1, 2] : vector<1x2x256xf32> to vector<1xf32>
    %288 = vector.shape_cast %287 : vector<1xf32> to vector<1x1x1xf32>
    %289 = vector.extract %288[0, 0, 0] : f32 from vector<1x1x1xf32>
    %290 = arith.addf %166, %289 : f32
    %c0_166 = arith.constant 0 : index
    %c0_167 = arith.constant 0 : index
    %c2_168 = arith.constant 2 : index
    %c0_169 = arith.constant 0 : index
    %291 = vector.load %arg7[%c0_166, %c0_167, %c2_168, %c0_169] : memref<2x7x4x256xf32, #tpu.memory_space<vmem>>, vector<2x1x1x256xf32>
    %292 = vector.shape_cast %291 : vector<2x1x1x256xf32> to vector<2x256xf32>
    %c0_170 = arith.constant 0 : index
    %c1_171 = arith.constant 1 : index
    %c2_172 = arith.constant 2 : index
    %c0_173 = arith.constant 0 : index
    %293 = vector.load %arg7[%c0_170, %c1_171, %c2_172, %c0_173] : memref<2x7x4x256xf32, #tpu.memory_space<vmem>>, vector<2x1x1x256xf32>
    %294 = vector.shape_cast %293 : vector<2x1x1x256xf32> to vector<2x256xf32>
    %c0_174 = arith.constant 0 : index
    %c2_175 = arith.constant 2 : index
    %c2_176 = arith.constant 2 : index
    %c0_177 = arith.constant 0 : index
    %295 = vector.load %arg7[%c0_174, %c2_175, %c2_176, %c0_177] : memref<2x7x4x256xf32, #tpu.memory_space<vmem>>, vector<2x1x1x256xf32>
    %296 = vector.shape_cast %295 : vector<2x1x1x256xf32> to vector<2x256xf32>
    %c0_178 = arith.constant 0 : index
    %c3_179 = arith.constant 3 : index
    %c2_180 = arith.constant 2 : index
    %c0_181 = arith.constant 0 : index
    %297 = vector.load %arg7[%c0_178, %c3_179, %c2_180, %c0_181] : memref<2x7x4x256xf32, #tpu.memory_space<vmem>>, vector<2x1x1x256xf32>
    %298 = vector.shape_cast %297 : vector<2x1x1x256xf32> to vector<2x256xf32>
    %c0_182 = arith.constant 0 : index
    %c4_183 = arith.constant 4 : index
    %c2_184 = arith.constant 2 : index
    %c0_185 = arith.constant 0 : index
    %299 = vector.load %arg7[%c0_182, %c4_183, %c2_184, %c0_185] : memref<2x7x4x256xf32, #tpu.memory_space<vmem>>, vector<2x1x1x256xf32>
    %300 = vector.shape_cast %299 : vector<2x1x1x256xf32> to vector<2x256xf32>
    %c0_186 = arith.constant 0 : index
    %c5_187 = arith.constant 5 : index
    %c2_188 = arith.constant 2 : index
    %c0_189 = arith.constant 0 : index
    %301 = vector.load %arg7[%c0_186, %c5_187, %c2_188, %c0_189] : memref<2x7x4x256xf32, #tpu.memory_space<vmem>>, vector<2x1x1x256xf32>
    %302 = vector.shape_cast %301 : vector<2x1x1x256xf32> to vector<2x256xf32>
    %c0_190 = arith.constant 0 : index
    %c6_191 = arith.constant 6 : index
    %c2_192 = arith.constant 2 : index
    %c0_193 = arith.constant 0 : index
    %303 = vector.load %arg7[%c0_190, %c6_191, %c2_192, %c0_193] : memref<2x7x4x256xf32, #tpu.memory_space<vmem>>, vector<2x1x1x256xf32>
    %304 = vector.shape_cast %303 : vector<2x1x1x256xf32> to vector<2x256xf32>
    %305 = arith.addf %292, %294 : vector<2x256xf32>
    %306 = arith.addf %305, %296 : vector<2x256xf32>
    %307 = arith.addf %306, %298 : vector<2x256xf32>
    %308 = arith.addf %307, %300 : vector<2x256xf32>
    %309 = arith.addf %308, %302 : vector<2x256xf32>
    %310 = arith.addf %309, %304 : vector<2x256xf32>
    %cst_194 = arith.constant 0.142857149 : f32
    %311 = vector.broadcast %cst_194 : f32 to vector<2x256xf32>
    %312 = arith.mulf %310, %311 : vector<2x256xf32>
    %313 = arith.subf %292, %312 : vector<2x256xf32>
    %314 = arith.mulf %313, %313 : vector<2x256xf32>
    %315 = arith.subf %294, %312 : vector<2x256xf32>
    %316 = arith.mulf %315, %315 : vector<2x256xf32>
    %317 = arith.addf %314, %316 : vector<2x256xf32>
    %318 = arith.subf %296, %312 : vector<2x256xf32>
    %319 = arith.mulf %318, %318 : vector<2x256xf32>
    %320 = arith.addf %317, %319 : vector<2x256xf32>
    %321 = arith.subf %298, %312 : vector<2x256xf32>
    %322 = arith.mulf %321, %321 : vector<2x256xf32>
    %323 = arith.addf %320, %322 : vector<2x256xf32>
    %324 = arith.subf %300, %312 : vector<2x256xf32>
    %325 = arith.mulf %324, %324 : vector<2x256xf32>
    %326 = arith.addf %323, %325 : vector<2x256xf32>
    %327 = arith.subf %302, %312 : vector<2x256xf32>
    %328 = arith.mulf %327, %327 : vector<2x256xf32>
    %329 = arith.addf %326, %328 : vector<2x256xf32>
    %330 = arith.subf %304, %312 : vector<2x256xf32>
    %331 = arith.mulf %330, %330 : vector<2x256xf32>
    %332 = arith.addf %329, %331 : vector<2x256xf32>
    %cst_195 = arith.constant 0.166666672 : f32
    %333 = vector.broadcast %cst_195 : f32 to vector<2x256xf32>
    %334 = arith.mulf %332, %333 : vector<2x256xf32>
    %335 = math.sqrt %334 : vector<2x256xf32>
    %cst_196 = arith.constant 1.000000e-07 : f32
    %336 = vector.broadcast %cst_196 : f32 to vector<2x256xf32>
    %337 = arith.maximumf %335, %336 : vector<2x256xf32>
    %c0_197 = arith.constant 0 : index
    %c2_198 = arith.constant 2 : index
    %c0_199 = arith.constant 0 : index
    %338 = vector.load %arg4[%c0_197, %c2_198, %c0_199] : memref<2x8x1xf32, #tpu.memory_space<vmem>>, vector<2x1x1xf32>
    %339 = vector.shape_cast %338 : vector<2x1x1xf32> to vector<2x1xf32>
    %c0_200 = arith.constant 0 : index
    %c6_201 = arith.constant 6 : index
    %c0_202 = arith.constant 0 : index
    %340 = vector.load %arg4[%c0_200, %c6_201, %c0_202] : memref<2x8x1xf32, #tpu.memory_space<vmem>>, vector<2x1x1xf32>
    %341 = vector.shape_cast %340 : vector<2x1x1xf32> to vector<2x1xf32>
    %c2_203 = arith.constant 2 : index
    %c0_204 = arith.constant 0 : index
    %342 = memref.load %arg5[%c2_203, %c0_204] : memref<8x4xf32, #tpu.memory_space<smem>>
    %343 = vector.broadcast %342 : f32 to vector<2x256xf32>
    %344 = arith.mulf %343, %36 : vector<2x256xf32>
    %345 = vector.broadcast %339 : vector<2x1xf32> to vector<2x256xf32>
    %346 = arith.addf %345, %344 : vector<2x256xf32>
    %c6_205 = arith.constant 6 : index
    %c0_206 = arith.constant 0 : index
    %347 = memref.load %arg5[%c6_205, %c0_206] : memref<8x4xf32, #tpu.memory_space<smem>>
    %348 = vector.broadcast %347 : f32 to vector<2x256xf32>
    %349 = arith.mulf %348, %36 : vector<2x256xf32>
    %350 = vector.broadcast %341 : vector<2x1xf32> to vector<2x256xf32>
    %351 = arith.addf %350, %349 : vector<2x256xf32>
    %c2_207 = arith.constant 2 : index
    %c1_208 = arith.constant 1 : index
    %352 = memref.load %arg5[%c2_207, %c1_208] : memref<8x4xf32, #tpu.memory_space<smem>>
    %353 = vector.broadcast %352 : f32 to vector<2x256xf32>
    %354 = arith.mulf %353, %38 : vector<2x256xf32>
    %355 = arith.addf %346, %354 : vector<2x256xf32>
    %c6_209 = arith.constant 6 : index
    %c1_210 = arith.constant 1 : index
    %356 = memref.load %arg5[%c6_209, %c1_210] : memref<8x4xf32, #tpu.memory_space<smem>>
    %357 = vector.broadcast %356 : f32 to vector<2x256xf32>
    %358 = arith.mulf %357, %38 : vector<2x256xf32>
    %359 = arith.addf %351, %358 : vector<2x256xf32>
    %c2_211 = arith.constant 2 : index
    %c2_212 = arith.constant 2 : index
    %360 = memref.load %arg5[%c2_211, %c2_212] : memref<8x4xf32, #tpu.memory_space<smem>>
    %361 = vector.broadcast %360 : f32 to vector<2x256xf32>
    %362 = arith.mulf %361, %40 : vector<2x256xf32>
    %363 = arith.addf %355, %362 : vector<2x256xf32>
    %c6_213 = arith.constant 6 : index
    %c2_214 = arith.constant 2 : index
    %364 = memref.load %arg5[%c6_213, %c2_214] : memref<8x4xf32, #tpu.memory_space<smem>>
    %365 = vector.broadcast %364 : f32 to vector<2x256xf32>
    %366 = arith.mulf %365, %40 : vector<2x256xf32>
    %367 = arith.addf %359, %366 : vector<2x256xf32>
    %c2_215 = arith.constant 2 : index
    %c3_216 = arith.constant 3 : index
    %368 = memref.load %arg5[%c2_215, %c3_216] : memref<8x4xf32, #tpu.memory_space<smem>>
    %369 = vector.broadcast %368 : f32 to vector<2x256xf32>
    %370 = arith.mulf %369, %42 : vector<2x256xf32>
    %371 = arith.addf %363, %370 : vector<2x256xf32>
    %c6_217 = arith.constant 6 : index
    %c3_218 = arith.constant 3 : index
    %372 = memref.load %arg5[%c6_217, %c3_218] : memref<8x4xf32, #tpu.memory_space<smem>>
    %373 = vector.broadcast %372 : f32 to vector<2x256xf32>
    %374 = arith.mulf %373, %42 : vector<2x256xf32>
    %375 = arith.addf %367, %374 : vector<2x256xf32>
    %cst_219 = arith.constant 1.000000e-07 : f32
    %376 = vector.broadcast %cst_219 : f32 to vector<2x256xf32>
    %377 = arith.maximumf %375, %376 : vector<2x256xf32>
    %c0_220 = arith.constant 0 : index
    %c2_221 = arith.constant 2 : index
    %c0_222 = arith.constant 0 : index
    %378 = vector.load %arg3[%c0_220, %c2_221, %c0_222] : memref<2x4x256xf32, #tpu.memory_space<vmem>>, vector<2x1x256xf32>
    %379 = vector.shape_cast %378 : vector<2x1x256xf32> to vector<2x256xf32>
    %cst_223 = arith.constant 5.000000e-01 : f32
    %380 = vector.broadcast %cst_223 : f32 to vector<2x256xf32>
    %381 = arith.mulf %380, %377 : vector<2x256xf32>
    %382 = arith.mulf %381, %377 : vector<2x256xf32>
    %383 = arith.addf %371, %382 : vector<2x256xf32>
    %384 = arith.mulf %377, %379 : vector<2x256xf32>
    %385 = arith.addf %383, %384 : vector<2x256xf32>
    %386 = math.exp %385 : vector<2x256xf32>
    %387 = arith.mulf %40, %386 : vector<2x256xf32>
    %388 = arith.subf %387, %298 : vector<2x256xf32>
    %389 = math.absf %388 : vector<2x256xf32>
    %390 = vector.shape_cast %389 : vector<2x256xf32> to vector<1x2x256xf32>
    %cst_224 = arith.constant dense<0.000000e+00> : vector<1xf32>
    %391 = vector.multi_reduction <add>, %390, %cst_224 [1, 2] : vector<1x2x256xf32> to vector<1xf32>
    %392 = vector.shape_cast %391 : vector<1xf32> to vector<1x1x1xf32>
    %393 = vector.extract %392[0, 0, 0] : f32 from vector<1x1x1xf32>
    %394 = arith.addf %270, %393 : f32
    %395 = tpu.reciprocal %337 {approx = true} : vector<2x256xf32> -> vector<2x256xf32>
    %396 = math.log %337 : vector<2x256xf32>
    %397 = math.log %377 : vector<2x256xf32>
    %398 = arith.subf %396, %397 : vector<2x256xf32>
    %399 = arith.mulf %377, %377 : vector<2x256xf32>
    %400 = arith.subf %371, %312 : vector<2x256xf32>
    %401 = arith.mulf %400, %400 : vector<2x256xf32>
    %402 = arith.addf %399, %401 : vector<2x256xf32>
    %cst_225 = arith.constant 5.000000e-01 : f32
    %403 = vector.broadcast %cst_225 : f32 to vector<2x256xf32>
    %404 = arith.mulf %403, %395 : vector<2x256xf32>
    %405 = arith.mulf %404, %395 : vector<2x256xf32>
    %406 = arith.mulf %402, %405 : vector<2x256xf32>
    %407 = arith.addf %398, %406 : vector<2x256xf32>
    %cst_226 = arith.constant 5.000000e-01 : f32
    %408 = vector.broadcast %cst_226 : f32 to vector<2x256xf32>
    %409 = arith.subf %407, %408 : vector<2x256xf32>
    %410 = vector.shape_cast %409 : vector<2x256xf32> to vector<1x2x256xf32>
    %cst_227 = arith.constant dense<0.000000e+00> : vector<1xf32>
    %411 = vector.multi_reduction <add>, %410, %cst_227 [1, 2] : vector<1x2x256xf32> to vector<1xf32>
    %412 = vector.shape_cast %411 : vector<1xf32> to vector<1x1x1xf32>
    %413 = vector.extract %412[0, 0, 0] : f32 from vector<1x1x1xf32>
    %414 = arith.addf %290, %413 : f32
    %c0_228 = arith.constant 0 : index
    %c0_229 = arith.constant 0 : index
    %c3_230 = arith.constant 3 : index
    %c0_231 = arith.constant 0 : index
    %415 = vector.load %arg7[%c0_228, %c0_229, %c3_230, %c0_231] : memref<2x7x4x256xf32, #tpu.memory_space<vmem>>, vector<2x1x1x256xf32>
    %416 = vector.shape_cast %415 : vector<2x1x1x256xf32> to vector<2x256xf32>
    %c0_232 = arith.constant 0 : index
    %c1_233 = arith.constant 1 : index
    %c3_234 = arith.constant 3 : index
    %c0_235 = arith.constant 0 : index
    %417 = vector.load %arg7[%c0_232, %c1_233, %c3_234, %c0_235] : memref<2x7x4x256xf32, #tpu.memory_space<vmem>>, vector<2x1x1x256xf32>
    %418 = vector.shape_cast %417 : vector<2x1x1x256xf32> to vector<2x256xf32>
    %c0_236 = arith.constant 0 : index
    %c2_237 = arith.constant 2 : index
    %c3_238 = arith.constant 3 : index
    %c0_239 = arith.constant 0 : index
    %419 = vector.load %arg7[%c0_236, %c2_237, %c3_238, %c0_239] : memref<2x7x4x256xf32, #tpu.memory_space<vmem>>, vector<2x1x1x256xf32>
    %420 = vector.shape_cast %419 : vector<2x1x1x256xf32> to vector<2x256xf32>
    %c0_240 = arith.constant 0 : index
    %c3_241 = arith.constant 3 : index
    %c3_242 = arith.constant 3 : index
    %c0_243 = arith.constant 0 : index
    %421 = vector.load %arg7[%c0_240, %c3_241, %c3_242, %c0_243] : memref<2x7x4x256xf32, #tpu.memory_space<vmem>>, vector<2x1x1x256xf32>
    %422 = vector.shape_cast %421 : vector<2x1x1x256xf32> to vector<2x256xf32>
    %c0_244 = arith.constant 0 : index
    %c4_245 = arith.constant 4 : index
    %c3_246 = arith.constant 3 : index
    %c0_247 = arith.constant 0 : index
    %423 = vector.load %arg7[%c0_244, %c4_245, %c3_246, %c0_247] : memref<2x7x4x256xf32, #tpu.memory_space<vmem>>, vector<2x1x1x256xf32>
    %424 = vector.shape_cast %423 : vector<2x1x1x256xf32> to vector<2x256xf32>
    %c0_248 = arith.constant 0 : index
    %c5_249 = arith.constant 5 : index
    %c3_250 = arith.constant 3 : index
    %c0_251 = arith.constant 0 : index
    %425 = vector.load %arg7[%c0_248, %c5_249, %c3_250, %c0_251] : memref<2x7x4x256xf32, #tpu.memory_space<vmem>>, vector<2x1x1x256xf32>
    %426 = vector.shape_cast %425 : vector<2x1x1x256xf32> to vector<2x256xf32>
    %c0_252 = arith.constant 0 : index
    %c6_253 = arith.constant 6 : index
    %c3_254 = arith.constant 3 : index
    %c0_255 = arith.constant 0 : index
    %427 = vector.load %arg7[%c0_252, %c6_253, %c3_254, %c0_255] : memref<2x7x4x256xf32, #tpu.memory_space<vmem>>, vector<2x1x1x256xf32>
    %428 = vector.shape_cast %427 : vector<2x1x1x256xf32> to vector<2x256xf32>
    %429 = arith.addf %416, %418 : vector<2x256xf32>
    %430 = arith.addf %429, %420 : vector<2x256xf32>
    %431 = arith.addf %430, %422 : vector<2x256xf32>
    %432 = arith.addf %431, %424 : vector<2x256xf32>
    %433 = arith.addf %432, %426 : vector<2x256xf32>
    %434 = arith.addf %433, %428 : vector<2x256xf32>
    %cst_256 = arith.constant 0.142857149 : f32
    %435 = vector.broadcast %cst_256 : f32 to vector<2x256xf32>
    %436 = arith.mulf %434, %435 : vector<2x256xf32>
    %437 = arith.subf %416, %436 : vector<2x256xf32>
    %438 = arith.mulf %437, %437 : vector<2x256xf32>
    %439 = arith.subf %418, %436 : vector<2x256xf32>
    %440 = arith.mulf %439, %439 : vector<2x256xf32>
    %441 = arith.addf %438, %440 : vector<2x256xf32>
    %442 = arith.subf %420, %436 : vector<2x256xf32>
    %443 = arith.mulf %442, %442 : vector<2x256xf32>
    %444 = arith.addf %441, %443 : vector<2x256xf32>
    %445 = arith.subf %422, %436 : vector<2x256xf32>
    %446 = arith.mulf %445, %445 : vector<2x256xf32>
    %447 = arith.addf %444, %446 : vector<2x256xf32>
    %448 = arith.subf %424, %436 : vector<2x256xf32>
    %449 = arith.mulf %448, %448 : vector<2x256xf32>
    %450 = arith.addf %447, %449 : vector<2x256xf32>
    %451 = arith.subf %426, %436 : vector<2x256xf32>
    %452 = arith.mulf %451, %451 : vector<2x256xf32>
    %453 = arith.addf %450, %452 : vector<2x256xf32>
    %454 = arith.subf %428, %436 : vector<2x256xf32>
    %455 = arith.mulf %454, %454 : vector<2x256xf32>
    %456 = arith.addf %453, %455 : vector<2x256xf32>
    %cst_257 = arith.constant 0.166666672 : f32
    %457 = vector.broadcast %cst_257 : f32 to vector<2x256xf32>
    %458 = arith.mulf %456, %457 : vector<2x256xf32>
    %459 = math.sqrt %458 : vector<2x256xf32>
    %cst_258 = arith.constant 1.000000e-07 : f32
    %460 = vector.broadcast %cst_258 : f32 to vector<2x256xf32>
    %461 = arith.maximumf %459, %460 : vector<2x256xf32>
    %c0_259 = arith.constant 0 : index
    %c3_260 = arith.constant 3 : index
    %c0_261 = arith.constant 0 : index
    %462 = vector.load %arg4[%c0_259, %c3_260, %c0_261] : memref<2x8x1xf32, #tpu.memory_space<vmem>>, vector<2x1x1xf32>
    %463 = vector.shape_cast %462 : vector<2x1x1xf32> to vector<2x1xf32>
    %c0_262 = arith.constant 0 : index
    %c7 = arith.constant 7 : index
    %c0_263 = arith.constant 0 : index
    %464 = vector.load %arg4[%c0_262, %c7, %c0_263] : memref<2x8x1xf32, #tpu.memory_space<vmem>>, vector<2x1x1xf32>
    %465 = vector.shape_cast %464 : vector<2x1x1xf32> to vector<2x1xf32>
    %c3_264 = arith.constant 3 : index
    %c0_265 = arith.constant 0 : index
    %466 = memref.load %arg5[%c3_264, %c0_265] : memref<8x4xf32, #tpu.memory_space<smem>>
    %467 = vector.broadcast %466 : f32 to vector<2x256xf32>
    %468 = arith.mulf %467, %36 : vector<2x256xf32>
    %469 = vector.broadcast %463 : vector<2x1xf32> to vector<2x256xf32>
    %470 = arith.addf %469, %468 : vector<2x256xf32>
    %c7_266 = arith.constant 7 : index
    %c0_267 = arith.constant 0 : index
    %471 = memref.load %arg5[%c7_266, %c0_267] : memref<8x4xf32, #tpu.memory_space<smem>>
    %472 = vector.broadcast %471 : f32 to vector<2x256xf32>
    %473 = arith.mulf %472, %36 : vector<2x256xf32>
    %474 = vector.broadcast %465 : vector<2x1xf32> to vector<2x256xf32>
    %475 = arith.addf %474, %473 : vector<2x256xf32>
    %c3_268 = arith.constant 3 : index
    %c1_269 = arith.constant 1 : index
    %476 = memref.load %arg5[%c3_268, %c1_269] : memref<8x4xf32, #tpu.memory_space<smem>>
    %477 = vector.broadcast %476 : f32 to vector<2x256xf32>
    %478 = arith.mulf %477, %38 : vector<2x256xf32>
    %479 = arith.addf %470, %478 : vector<2x256xf32>
    %c7_270 = arith.constant 7 : index
    %c1_271 = arith.constant 1 : index
    %480 = memref.load %arg5[%c7_270, %c1_271] : memref<8x4xf32, #tpu.memory_space<smem>>
    %481 = vector.broadcast %480 : f32 to vector<2x256xf32>
    %482 = arith.mulf %481, %38 : vector<2x256xf32>
    %483 = arith.addf %475, %482 : vector<2x256xf32>
    %c3_272 = arith.constant 3 : index
    %c2_273 = arith.constant 2 : index
    %484 = memref.load %arg5[%c3_272, %c2_273] : memref<8x4xf32, #tpu.memory_space<smem>>
    %485 = vector.broadcast %484 : f32 to vector<2x256xf32>
    %486 = arith.mulf %485, %40 : vector<2x256xf32>
    %487 = arith.addf %479, %486 : vector<2x256xf32>
    %c7_274 = arith.constant 7 : index
    %c2_275 = arith.constant 2 : index
    %488 = memref.load %arg5[%c7_274, %c2_275] : memref<8x4xf32, #tpu.memory_space<smem>>
    %489 = vector.broadcast %488 : f32 to vector<2x256xf32>
    %490 = arith.mulf %489, %40 : vector<2x256xf32>
    %491 = arith.addf %483, %490 : vector<2x256xf32>
    %c3_276 = arith.constant 3 : index
    %c3_277 = arith.constant 3 : index
    %492 = memref.load %arg5[%c3_276, %c3_277] : memref<8x4xf32, #tpu.memory_space<smem>>
    %493 = vector.broadcast %492 : f32 to vector<2x256xf32>
    %494 = arith.mulf %493, %42 : vector<2x256xf32>
    %495 = arith.addf %487, %494 : vector<2x256xf32>
    %c7_278 = arith.constant 7 : index
    %c3_279 = arith.constant 3 : index
    %496 = memref.load %arg5[%c7_278, %c3_279] : memref<8x4xf32, #tpu.memory_space<smem>>
    %497 = vector.broadcast %496 : f32 to vector<2x256xf32>
    %498 = arith.mulf %497, %42 : vector<2x256xf32>
    %499 = arith.addf %491, %498 : vector<2x256xf32>
    %cst_280 = arith.constant 1.000000e-07 : f32
    %500 = vector.broadcast %cst_280 : f32 to vector<2x256xf32>
    %501 = arith.maximumf %499, %500 : vector<2x256xf32>
    %c0_281 = arith.constant 0 : index
    %c3_282 = arith.constant 3 : index
    %c0_283 = arith.constant 0 : index
    %502 = vector.load %arg3[%c0_281, %c3_282, %c0_283] : memref<2x4x256xf32, #tpu.memory_space<vmem>>, vector<2x1x256xf32>
    %503 = vector.shape_cast %502 : vector<2x1x256xf32> to vector<2x256xf32>
    %cst_284 = arith.constant 5.000000e-01 : f32
    %504 = vector.broadcast %cst_284 : f32 to vector<2x256xf32>
    %505 = arith.mulf %504, %501 : vector<2x256xf32>
    %506 = arith.mulf %505, %501 : vector<2x256xf32>
    %507 = arith.addf %495, %506 : vector<2x256xf32>
    %508 = arith.mulf %501, %503 : vector<2x256xf32>
    %509 = arith.addf %507, %508 : vector<2x256xf32>
    %510 = math.exp %509 : vector<2x256xf32>
    %511 = arith.mulf %42, %510 : vector<2x256xf32>
    %512 = arith.subf %511, %422 : vector<2x256xf32>
    %513 = math.absf %512 : vector<2x256xf32>
    %514 = vector.shape_cast %513 : vector<2x256xf32> to vector<1x2x256xf32>
    %cst_285 = arith.constant dense<0.000000e+00> : vector<1xf32>
    %515 = vector.multi_reduction <add>, %514, %cst_285 [1, 2] : vector<1x2x256xf32> to vector<1xf32>
    %516 = vector.shape_cast %515 : vector<1xf32> to vector<1x1x1xf32>
    %517 = vector.extract %516[0, 0, 0] : f32 from vector<1x1x1xf32>
    %518 = arith.addf %394, %517 : f32
    %519 = tpu.reciprocal %461 {approx = true} : vector<2x256xf32> -> vector<2x256xf32>
    %520 = math.log %461 : vector<2x256xf32>
    %521 = math.log %501 : vector<2x256xf32>
    %522 = arith.subf %520, %521 : vector<2x256xf32>
    %523 = arith.mulf %501, %501 : vector<2x256xf32>
    %524 = arith.subf %495, %436 : vector<2x256xf32>
    %525 = arith.mulf %524, %524 : vector<2x256xf32>
    %526 = arith.addf %523, %525 : vector<2x256xf32>
    %cst_286 = arith.constant 5.000000e-01 : f32
    %527 = vector.broadcast %cst_286 : f32 to vector<2x256xf32>
    %528 = arith.mulf %527, %519 : vector<2x256xf32>
    %529 = arith.mulf %528, %519 : vector<2x256xf32>
    %530 = arith.mulf %526, %529 : vector<2x256xf32>
    %531 = arith.addf %522, %530 : vector<2x256xf32>
    %cst_287 = arith.constant 5.000000e-01 : f32
    %532 = vector.broadcast %cst_287 : f32 to vector<2x256xf32>
    %533 = arith.subf %531, %532 : vector<2x256xf32>
    %534 = vector.shape_cast %533 : vector<2x256xf32> to vector<1x2x256xf32>
    %cst_288 = arith.constant dense<0.000000e+00> : vector<1xf32>
    %535 = vector.multi_reduction <add>, %534, %cst_288 [1, 2] : vector<1x2x256xf32> to vector<1xf32>
    %536 = vector.shape_cast %535 : vector<1xf32> to vector<1x1x1xf32>
    %537 = vector.extract %536[0, 0, 0] : f32 from vector<1x1x1xf32>
    %538 = arith.addf %414, %537 : f32
    %539 = tpu.iota {dimensions = array<i32: 1>} : vector<1x8x128xi32>
    %c0_i32_289 = arith.constant 0 : i32
    %540 = vector.broadcast %c0_i32_289 : i32 to vector<1x8x128xi32>
    %541 = arith.cmpi eq, %539, %540 : vector<1x8x128xi32>
    %c1_i32_290 = arith.constant 1 : i32
    %542 = vector.broadcast %c1_i32_290 : i32 to vector<1x8x128xi32>
    %543 = arith.cmpi eq, %539, %542 : vector<1x8x128xi32>
    %cst_291 = arith.constant 0.000000e+00 : f32
    %544 = vector.broadcast %538 : f32 to vector<1x8x128xf32>
    %545 = vector.broadcast %cst_291 : f32 to vector<1x8x128xf32>
    %546 = arith.select %543, %544, %545 : vector<1x8x128xi1>, vector<1x8x128xf32>
    %547 = vector.broadcast %518 : f32 to vector<1x8x128xf32>
    %548 = arith.select %541, %547, %546 : vector<1x8x128xi1>, vector<1x8x128xf32>
    %c0_292 = arith.constant 0 : index
    %c0_293 = arith.constant 0 : index
    %c0_294 = arith.constant 0 : index
    %549 = vector.load %arg6[%c0_292, %c0_293, %c0_294] : memref<1x8x128xf32, #tpu.memory_space<vmem>>, vector<1x8x128xf32>
    tpu.vector_store %arg6[%c0_292, %c0_293, %c0_294], %548 {strides = array<i32>} : memref<1x8x128xf32, #tpu.memory_space<vmem>>, vector<1x8x128xf32>,
    return
  }
  func.func @transform_1(%arg0: i32, %arg1: memref<2xi32, #tpu.memory_space<smem>>) -> (i32, i32, i32) {
    %c0_i32 = arith.constant 0 : i32
    %c0_i32_0 = arith.constant 0 : i32
    %c0_i32_1 = arith.constant 0 : i32
    return %arg0, %c0_i32, %c0_i32_0 : i32, i32, i32
  }
  func.func @transform_2(%arg0: i32, %arg1: memref<2xi32, #tpu.memory_space<smem>>) -> (i32, i32, i32) {
    %c0_i32 = arith.constant 0 : i32
    %c0_i32_0 = arith.constant 0 : i32
    %c0_i32_1 = arith.constant 0 : i32
    return %arg0, %c0_i32, %c0_i32_0 : i32, i32, i32
  }
  func.func @transform_3(%arg0: i32, %arg1: memref<2xi32, #tpu.memory_space<smem>>) -> (i32, i32) {
    %c0_i32 = arith.constant 0 : i32
    %c0_i32_0 = arith.constant 0 : i32
    %c0_i32_1 = arith.constant 0 : i32
    return %c0_i32, %c0_i32_0 : i32, i32
  }
  func.func @transform_4(%arg0: i32, %arg1: memref<2xi32, #tpu.memory_space<smem>>) -> (i32, i32, i32) {
    %c0_i32 = arith.constant 0 : i32
    %c0_i32_0 = arith.constant 0 : i32
    %c0_i32_1 = arith.constant 0 : i32
    return %arg0, %c0_i32, %c0_i32_0 : i32, i32, i32
  }
}

</mosaic_0001>

<llo_original>
// kernel: tpu_custom_call.1
$region0: #{tpu_custom_call.1}
  #allocation0 [shape = 'u32[]', space=smem, size = 0x4, offset = 0x4, fixed_abs, tag = 'smem constant byte address 0x4 - core index']
  #allocation1 [shape = 'u32[144,128]{1,0:T(1,128)}', space=vmem, size = 0x12000, scoped, tag = 'internal scratch']
  #allocation2 [shape = 'f32[2,7,4,256]{3,2,1,0:T(4,128)}', space=vmem, size = 0xe000, scoped, tag = 'scratch operand']
  #allocation3 [shape = 's32[2]{0}', space=sflag, size = 0x8, scoped, tag = 'scratch operand']
  #allocation4 [shape = 's32[1]{0}', space=sflag, size = 0x4, scoped, tag = 'scoped memory for tpu_custom_call.1']
  #allocation5 [shape = 'u8[512]{0}', space=smem, size = 0x200, scoped, tag = 'prefetched SMEM operand 0']
  #allocation10 [shape = 's32[]', space=sflag, size = 0x4, offset = 0, fixed_abs, tag = 'sflag constant byte address 0x0 - dummy sync flag']
  #allocation11 [shape = 's32[]', space=sflag, size = 0x4, offset = 0, fixed_abs, tag = 'sflag constant byte address 0x0 - dummy sync flag']
  #allocation12 [shape = 'u32[]', space=smem, size = 0x4, offset = 0x44, fixed_abs, tag = 'smem constant byte address 0x44 - assertion arg 0']
  #allocation13 [shape = 'u32[]', space=smem, size = 0x4, offset = 0x48, fixed_abs, tag = 'smem constant byte address 0x48 - assertion arg 1']
  #allocation14 [shape = 's32[]', space=sflag, size = 0x4, offset = 0, fixed_abs, tag = 'sflag constant byte address 0x0 - dummy sync flag']
  #allocation15 [shape = 's32[]', space=sflag, size = 0x4, offset = 0, fixed_abs, tag = 'sflag constant byte address 0x0 - dummy sync flag']
  %s0 = inlined_call_operand.vmem [shape: s32[2], index: 0, kind: input, shape index: {}]
  %s1 = inlined_call_operand.hbm [shape: f32[40,4,256], index: 1, kind: input, shape index: {}]
  %s2 = inlined_call_operand.vmem [shape: f32[2,4,256], index: 2, kind: input, shape index: {}]
  %s3 = inlined_call_operand.vmem [shape: f32[2,8,1], index: 3, kind: input, shape index: {}]
  %s4 = inlined_call_operand.vmem [shape: f32[8,4], index: 4, kind: input, shape index: {}]
  %s5 = inlined_call_operand.hbm [shape: f32[1,8,128], index: 5, kind: output, shape index: {}]
  %s6 = sld [smem:[#allocation0]]
  $region34: #{tpu_custom_call.1} parent=0
    _
  %s8 = ssub.s32 1, %s6
  %s9 = scalar_select 0, %s8, %s6
  %s10 = sshll.u32 %s0, 4
  %s11 = int_to_ptr.vmem [resolvable:$true] %s10
  %13 = dma.vmem_to_smem %s11, 16, [#allocation5], [#allocation4]
  %14 = dma.done [#allocation4], 16
  %15 = sfence
  $region1: #{tpu_custom_call.1} parent=0
    #allocation6 [shape = 'u8[4096]{0}', space=smem, size = 0x1000, scoped, tag = 'input window, operand 4, single buffered']
    #allocation7 [shape = 's32[1]{0}', space=sflag, size = 0x4, scoped, tag = 'scoped memory for tpu_custom_call.1']
    #allocation8 [shape = 's32[1]{0}', space=sflag, size = 0x4, scoped, tag = 'scoped memory for tpu_custom_call.1']
    #allocation9 [shape = 'u8[4096]{0}', space=vmem, size = 0x1000, scoped, tag = 'output window, operand 0, single buffered']
    %16 = vsyncpa [#allocation8], 0
    %17 = vsyncpa [#allocation7], 0
    // Predicated region
    $region2: #{tpu_custom_call.1} parent=1 // pred_check
      _
    $region3: #{tpu_custom_call.1} parent=1 // pred_check_branch
      %19 = sbr.rel (0) target = $region5
    $region4: #{tpu_custom_call.1} parent=1 // pred_region
      _
    $region5: #{tpu_custom_call.1} parent=1 // pred_fallthru
      _
    // Predicated region
    $region6: #{tpu_custom_call.1} parent=1 // pred_check
      _
    $region7: #{tpu_custom_call.1} parent=1 // pred_check_branch
      %21 = sbr.rel (0) target = $region9
    $region8: #{tpu_custom_call.1} parent=1 // pred_region
      _
    $region9: #{tpu_custom_call.1} parent=1 // pred_fallthru
      _
    // Predicated region
    $region10: #{tpu_custom_call.1} parent=1 // pred_check
      _
    $region11: #{tpu_custom_call.1} parent=1 // pred_check_branch
      %23 = sbr.rel (0) target = $region13
    $region12: #{tpu_custom_call.1} parent=1 // pred_region
      %s25 = ssub.s32 128, 128
      %26 = vsyncadd [#allocation8], %s25
      %s28 = sshll.u32 %s4, 4
      %s29 = int_to_ptr.vmem [resolvable:$true] %s28
      %31 = dma.vmem_to_smem %s29, 128, [#allocation6], [#allocation8]
    $region13: #{tpu_custom_call.1} parent=1 // pred_fallthru
      _
    // Predicated region
    $region14: #{tpu_custom_call.1} parent=1 // pred_check
      _
    $region15: #{tpu_custom_call.1} parent=1 // pred_check_branch
      %33 = sbr.rel (0) target = $region17
    $region16: #{tpu_custom_call.1} parent=1 // pred_region
      %34 = dma.done [#allocation8], 128
    $region17: #{tpu_custom_call.1} parent=1 // pred_fallthru
      _
    %35 = sfence
    %s36 = smul.u32 0, 2
    %s37 = smul.u32 0, 40
    %s38 = sld [smem:[#allocation5 + %s36]]
    %s39 = ssub.s32 %s38, 3
    %s40 = sadd.s32 %s37, %s39
    %s41 = smul.u32 %s40, 2
    %s42 = smul.addr %s41, 64
    %s43 = scalar_lea.hbm %s1, %s42
    // Predicated region
    $region18: #{tpu_custom_call.1} parent=1 // pred_check
      _
    $region19: #{tpu_custom_call.1} parent=1 // pred_check_branch
      %45 = sbr.rel target = $region21
    $region20: #{tpu_custom_call.1} parent=1 // pred_region
      %46 = sst [smem:[#allocation12]] [#allocation11]
      %47 = sst [smem:[#allocation13]] [#allocation10]
    $region21: #{tpu_custom_call.1} parent=1 // pred_fallthru
      _
    %49 = shalt.err (0)
    %s51 = sshll.u32 [#allocation2], 4
    %s52 = int_to_ptr.vmem [resolvable:$true] %s51
    %54 = dma.hbm_to_vmem [thread:$0]  %s43, 896, %s52, [#allocation3]
    %s55 = sadd.s32 %s36, 1
    %s56 = smul.u32 %s55, 20
    %s57 = sld [smem:[#allocation5 + %s55]]
    %s58 = ssub.s32 %s57, 3
    %s59 = sadd.s32 %s56, %s58
    %s60 = smul.u32 %s59, 2
    %s61 = smul.addr %s60, 64
    %s62 = scalar_lea.hbm %s1, %s61
    %s63 = scalar_lea.vmem [#allocation2], 56
    %s64 = scalar_lea.sflag [#allocation3], 1
    // Predicated region
    $region22: #{tpu_custom_call.1} parent=1 // pred_check
      _
    $region23: #{tpu_custom_call.1} parent=1 // pred_check_branch
      %66 = sbr.rel target = $region25
    $region24: #{tpu_custom_call.1} parent=1 // pred_region
      %67 = sst [smem:[#allocation12]] [#allocation15]
      %68 = sst [smem:[#allocation13]] [#allocation14]
    $region25: #{tpu_custom_call.1} parent=1 // pred_fallthru
      _
    %70 = shalt.err (0)
    %s72 = sshll.u32 %s63, 4
    %s73 = int_to_ptr.vmem [resolvable:$true] %s72
    %75 = dma.hbm_to_vmem [thread:$0]  %s62, 896, %s73, %s64
    %s76 = smul.u32 4, 7
    %s77 = smul.u32 %s76, 1
    %s78 = smul.u32 %s77, 2
    %s79 = sshll.u32 %s78, 4
    %80 = dma.done [#allocation3], %s79
    %s81 = sshll.u32 %s78, 4
    %82 = dma.done %s64, %s81
    %s83 = scalar_lea.vmem [#allocation2], 16
    %v84 = vld [vmem:[%s83] ss:$4 sm:$0x3]
    %s85 = scalar_lea.vmem %s83, 56 [#allocation2]
    %v86 = vld [vmem:[%s85] ss:$4 sm:$0x3]
    %s87 = scalar_lea.vmem %s83, 1 [#allocation2]
    %v88 = vld [vmem:[%s87] ss:$4 sm:$0x3]
    %s89 = scalar_lea.vmem %s83, 57 [#allocation2]
    %v90 = vld [vmem:[%s89] ss:$4 sm:$0x3]
    %s91 = scalar_lea.vmem %s83, 2 [#allocation2]
    %v92 = vld [vmem:[%s91] ss:$4 sm:$0x3]
    %s93 = scalar_lea.vmem %s83, 58 [#allocation2]
    %v94 = vld [vmem:[%s93] ss:$4 sm:$0x3]
    %s95 = scalar_lea.vmem %s83, 3 [#allocation2]
    %v96 = vld [vmem:[%s95] ss:$4 sm:$0x3]
    %s97 = scalar_lea.vmem %s83, 59 [#allocation2]
    %v98 = vld [vmem:[%s97] ss:$4 sm:$0x3]
    %v99 = vld [vmem:[#allocation2] ss:$4 sm:$0x3]
    %s100 = scalar_lea.vmem [#allocation2], 56
    %v101 = vld [vmem:[%s100] ss:$4 sm:$0x3]
    %s102 = scalar_lea.vmem [#allocation2], 8
    %v103 = vld [vmem:[%s102] ss:$4 sm:$0x3]
    %s104 = scalar_lea.vmem %s102, 56 [#allocation2]
    %v105 = vld [vmem:[%s104] ss:$4 sm:$0x3]
    %s106 = scalar_lea.vmem [#allocation2], 24
    %v107 = vld [vmem:[%s106] ss:$4 sm:$0x3]
    %s108 = scalar_lea.vmem %s106, 56 [#allocation2]
    %v109 = vld [vmem:[%s108] ss:$4 sm:$0x3]
    %s110 = scalar_lea.vmem [#allocation2], 32
    %v111 = vld [vmem:[%s110] ss:$4 sm:$0x3]
    %s112 = scalar_lea.vmem %s110, 56 [#allocation2]
    %v113 = vld [vmem:[%s112] ss:$4 sm:$0x3]
    %s114 = scalar_lea.vmem [#allocation2], 40
    %v115 = vld [vmem:[%s114] ss:$4 sm:$0x3]
    %s116 = scalar_lea.vmem %s114, 56 [#allocation2]
    %v117 = vld [vmem:[%s116] ss:$4 sm:$0x3]
    %s118 = scalar_lea.vmem [#allocation2], 48
    %v119 = vld [vmem:[%s118] ss:$4 sm:$0x3]
    %s120 = scalar_lea.vmem %s118, 56 [#allocation2]
    %v121 = vld [vmem:[%s120] ss:$4 sm:$0x3]
    %v122 = vadd.f32 %v99, %v103
    %v123 = vadd.f32 %v101, %v105
    %v124 = vadd.f32 %v122, %v84
    %v125 = vadd.f32 %v123, %v86
    %v126 = vadd.f32 %v124, %v107
    %v127 = vadd.f32 %v125, %v109
    %v128 = vadd.f32 %v126, %v111
    %v129 = vadd.f32 %v127, %v113
    %v130 = vadd.f32 %v128, %v115
    %v131 = vadd.f32 %v129, %v117
    %v132 = vadd.f32 %v130, %v119
    %v133 = vadd.f32 %v131, %v121
    %v134 = vmul.f32 %v132, 0.14285715
    %v135 = vmul.f32 %v133, 0.14285715
    %v136 = vsub.f32 %v99, %v134
    %v137 = vsub.f32 %v101, %v135
    %v138 = vmul.f32 %v136, %v136
    %v139 = vmul.f32 %v137, %v137
    %v140 = vsub.f32 %v103, %v134
    %v141 = vsub.f32 %v105, %v135
    %v142 = vmul.f32 %v140, %v140
    %v143 = vmul.f32 %v141, %v141
    %v144 = vadd.f32 %v138, %v142
    %v145 = vadd.f32 %v139, %v143
    %v146 = vsub.f32 %v84, %v134
    %v147 = vsub.f32 %v86, %v135
    %v148 = vmul.f32 %v146, %v146
    %v149 = vmul.f32 %v147, %v147
    %v150 = vadd.f32 %v144, %v148
    %v151 = vadd.f32 %v145, %v149
    %v152 = vsub.f32 %v107, %v134
    %v153 = vsub.f32 %v109, %v135
    %v154 = vmul.f32 %v152, %v152
    %v155 = vmul.f32 %v153, %v153
    %v156 = vadd.f32 %v150, %v154
    %v157 = vadd.f32 %v151, %v155
    %v158 = vsub.f32 %v111, %v134
    %v159 = vsub.f32 %v113, %v135
    %v160 = vmul.f32 %v158, %v158
    %v161 = vmul.f32 %v159, %v159
    %v162 = vadd.f32 %v156, %v160
    %v163 = vadd.f32 %v157, %v161
    %v164 = vsub.f32 %v115, %v134
    %v165 = vsub.f32 %v117, %v135
    %v166 = vmul.f32 %v164, %v164
    %v167 = vmul.f32 %v165, %v165
    %v168 = vadd.f32 %v162, %v166
    %v169 = vadd.f32 %v163, %v167
    %v170 = vsub.f32 %v119, %v134
    %v171 = vsub.f32 %v121, %v135
    %v172 = vmul.f32 %v170, %v170
    %v173 = vmul.f32 %v171, %v171
    %v174 = vadd.f32 %v168, %v172
    %v175 = vadd.f32 %v169, %v173
    %v176 = vmul.f32 %v174, 0.16666667
    %v177 = vmul.f32 %v175, 0.16666667
    %v178 = vrsqrt.pop %v176
    %v179 = vmul.f32 %v176, %v178
    %vm180 = vcmp.eq.f32.partialorder %v176, inf
    %v181 = vsel %vm180, %v176, %v179
    %vm182 = vcmp.eq.f32.partialorder %v176, 0.0
    %v183 = vand.u32 %v176, 2147483648
    %v184 = vsel %vm182, %v183, %v181
    %v185 = vrsqrt.pop %v177
    %v186 = vmul.f32 %v177, %v185
    %vm187 = vcmp.eq.f32.partialorder %v177, inf
    %v188 = vsel %vm187, %v177, %v186
    %vm189 = vcmp.eq.f32.partialorder %v177, 0.0
    %v190 = vand.u32 %v177, 2147483648
    %v191 = vsel %vm189, %v190, %v188
    %v192 = vmax.f32 %v184, 1e-07
    %v193 = vmax.f32 %v191, 1e-07
    %v194 = vld [vmem:[%s3] sm:$0x1]
    %v195 = vld [vmem:[%s3 + $0x8] sm:$0x1]
    %v196 = vld [vmem:[%s3 + $0x4] sm:$0x1]
    %v197 = vld [vmem:[%s3 + $0xc] sm:$0x1]
    %s198 = sld [smem:[#allocation6]]
    %v199 = vstv %s198
    %v200 = vmul.f32 %v199, %v84
    %v201 = vmul.f32 %v199, %v86
    %203 = vset.pattern.permute.xlu0 0
    %204 = vperm.xlu0 %203, %v194
    %v205 = vpop.permute.xlu0 %204
    %208 = vset.pattern.permute.xlu0 0
    %209 = vperm.xlu0 %208, %v195
    %v210 = vpop.permute.xlu0 %209
    %v214 = vlaneseq
    %v215 = vshrl.u32 %v214, 7
    %v216 = vsub.s32 0, %v215
    %v217 = vrot.slane %v200, %v216
    %v218 = vlaneseq
    %v219 = vshrl.u32 %v218, 7
    %v220 = vsub.s32 1, %v219
    %v221 = vrot.slane %v200, %v220
    %v222 = vlaneseq
    %v223 = vshrl.u32 %v222, 7
    %v224 = vsub.s32 0, %v223
    %v225 = vrot.slane %v201, %v224
    %v226 = vlaneseq
    %v227 = vshrl.u32 %v226, 7
    %v228 = vsub.s32 1, %v227
    %v229 = vrot.slane %v201, %v228
    %v234 = vadd.f32 %v205, %v217
    %v235 = vadd.f32 %v205, %v221
    %v236 = vadd.f32 %v210, %v225
    %v237 = vadd.f32 %v210, %v229
    %s238 = sld [smem:[#allocation6 + $0x200]]
    %v239 = vstv %s238
    %v240 = vmul.f32 %v239, %v84
    %v241 = vmul.f32 %v239, %v86
    %243 = vset.pattern.permute.xlu0 0
    %244 = vperm.xlu0 %243, %v196
    %v245 = vpop.permute.xlu0 %244
    %248 = vset.pattern.permute.xlu0 0
    %249 = vperm.xlu0 %248, %v197
    %v250 = vpop.permute.xlu0 %249
    %v254 = vlaneseq
    %v255 = vshrl.u32 %v254, 7
    %v256 = vsub.s32 0, %v255
    %v257 = vrot.slane %v240, %v256
    %v258 = vlaneseq
    %v259 = vshrl.u32 %v258, 7
    %v260 = vsub.s32 1, %v259
    %v261 = vrot.slane %v240, %v260
    %v262 = vlaneseq
    %v263 = vshrl.u32 %v262, 7
    %v264 = vsub.s32 0, %v263
    %v265 = vrot.slane %v241, %v264
    %v266 = vlaneseq
    %v267 = vshrl.u32 %v266, 7
    %v268 = vsub.s32 1, %v267
    %v269 = vrot.slane %v241, %v268
    %v274 = vadd.f32 %v245, %v257
    %v275 = vadd.f32 %v245, %v261
    %v276 = vadd.f32 %v250, %v265
    %v277 = vadd.f32 %v250, %v269
    %s278 = sld [smem:[#allocation6 + $0x1]]
    %v279 = vstv %s278
    %v280 = vmul.f32 %v279, %v88
    %v281 = vmul.f32 %v279, %v90
    %v284 = vlaneseq
    %v285 = vshrl.u32 %v284, 7
    %v286 = vsub.s32 0, %v285
    %v287 = vrot.slane %v280, %v286
    %v288 = vlaneseq
    %v289 = vshrl.u32 %v288, 7
    %v290 = vsub.s32 1, %v289
    %v291 = vrot.slane %v280, %v290
    %v292 = vlaneseq
    %v293 = vshrl.u32 %v292, 7
    %v294 = vsub.s32 0, %v293
    %v295 = vrot.slane %v281, %v294
    %v296 = vlaneseq
    %v297 = vshrl.u32 %v296, 7
    %v298 = vsub.s32 1, %v297
    %v299 = vrot.slane %v281, %v298
    %v304 = vadd.f32 %v234, %v287
    %v305 = vadd.f32 %v235, %v291
    %v306 = vadd.f32 %v236, %v295
    %v307 = vadd.f32 %v237, %v299
    %s308 = sld [smem:[#allocation6 + $0x201]]
    %v309 = vstv %s308
    %v310 = vmul.f32 %v309, %v88
    %v311 = vmul.f32 %v309, %v90
    %v314 = vlaneseq
    %v315 = vshrl.u32 %v314, 7
    %v316 = vsub.s32 0, %v315
    %v317 = vrot.slane %v310, %v316
    %v318 = vlaneseq
    %v319 = vshrl.u32 %v318, 7
    %v320 = vsub.s32 1, %v319
    %v321 = vrot.slane %v310, %v320
    %v322 = vlaneseq
    %v323 = vshrl.u32 %v322, 7
    %v324 = vsub.s32 0, %v323
    %v325 = vrot.slane %v311, %v324
    %v326 = vlaneseq
    %v327 = vshrl.u32 %v326, 7
    %v328 = vsub.s32 1, %v327
    %v329 = vrot.slane %v311, %v328
    %v334 = vadd.f32 %v274, %v317
    %v335 = vadd.f32 %v275, %v321
    %v336 = vadd.f32 %v276, %v325
    %v337 = vadd.f32 %v277, %v329
    %s338 = sld [smem:[#allocation6 + $0x2]]
    %v339 = vstv %s338
    %v340 = vmul.f32 %v339, %v92
    %v341 = vmul.f32 %v339, %v94
    %v344 = vlaneseq
    %v345 = vshrl.u32 %v344, 7
    %v346 = vsub.s32 0, %v345
    %v347 = vrot.slane %v340, %v346
    %v348 = vlaneseq
    %v349 = vshrl.u32 %v348, 7
    %v350 = vsub.s32 1, %v349
    %v351 = vrot.slane %v340, %v350
    %v352 = vlaneseq
    %v353 = vshrl.u32 %v352, 7
    %v354 = vsub.s32 0, %v353
    %v355 = vrot.slane %v341, %v354
    %v356 = vlaneseq
    %v357 = vshrl.u32 %v356, 7
    %v358 = vsub.s32 1, %v357
    %v359 = vrot.slane %v341, %v358
    %v364 = vadd.f32 %v304, %v347
    %v365 = vadd.f32 %v305, %v351
    %v366 = vadd.f32 %v306, %v355
    %v367 = vadd.f32 %v307, %v359
    %s368 = sld [smem:[#allocation6 + $0x202]]
    %v369 = vstv %s368
    %v370 = vmul.f32 %v369, %v92
    %v371 = vmul.f32 %v369, %v94
    %v374 = vlaneseq
    %v375 = vshrl.u32 %v374, 7
    %v376 = vsub.s32 0, %v375
    %v377 = vrot.slane %v370, %v376
    %v378 = vlaneseq
    %v379 = vshrl.u32 %v378, 7
    %v380 = vsub.s32 1, %v379
    %v381 = vrot.slane %v370, %v380
    %v382 = vlaneseq
    %v383 = vshrl.u32 %v382, 7
    %v384 = vsub.s32 0, %v383
    %v385 = vrot.slane %v371, %v384
    %v386 = vlaneseq
    %v387 = vshrl.u32 %v386, 7
    %v388 = vsub.s32 1, %v387
    %v389 = vrot.slane %v371, %v388
    %v394 = vadd.f32 %v334, %v377
    %v395 = vadd.f32 %v335, %v381
    %v396 = vadd.f32 %v336, %v385
    %v397 = vadd.f32 %v337, %v389
    %s398 = sld [smem:[#allocation6 + $0x3]]
    %v399 = vstv %s398
    %v400 = vmul.f32 %v399, %v96
    %v401 = vmul.f32 %v399, %v98
    %v404 = vlaneseq
    %v405 = vshrl.u32 %v404, 7
    %v406 = vsub.s32 0, %v405
    %v407 = vrot.slane %v400, %v406
    %v408 = vlaneseq
    %v409 = vshrl.u32 %v408, 7
    %v410 = vsub.s32 1, %v409
    %v411 = vrot.slane %v400, %v410
    %v412 = vlaneseq
    %v413 = vshrl.u32 %v412, 7
    %v414 = vsub.s32 0, %v413
    %v415 = vrot.slane %v401, %v414
    %v416 = vlaneseq
    %v417 = vshrl.u32 %v416, 7
    %v418 = vsub.s32 1, %v417
    %v419 = vrot.slane %v401, %v418
    %v424 = vadd.f32 %v364, %v407
    %v425 = vadd.f32 %v365, %v411
    %v426 = vadd.f32 %v366, %v415
    %v427 = vadd.f32 %v367, %v419
    %s428 = sld [smem:[#allocation6 + $0x203]]
    %v429 = vstv %s428
    %v430 = vmul.f32 %v429, %v96
    %v431 = vmul.f32 %v429, %v98
    %v434 = vlaneseq
    %v435 = vshrl.u32 %v434, 7
    %v436 = vsub.s32 0, %v435
    %v437 = vrot.slane %v430, %v436
    %v438 = vlaneseq
    %v439 = vshrl.u32 %v438, 7
    %v440 = vsub.s32 1, %v439
    %v441 = vrot.slane %v430, %v440
    %v442 = vlaneseq
    %v443 = vshrl.u32 %v442, 7
    %v444 = vsub.s32 0, %v443
    %v445 = vrot.slane %v431, %v444
    %v446 = vlaneseq
    %v447 = vshrl.u32 %v446, 7
    %v448 = vsub.s32 1, %v447
    %v449 = vrot.slane %v431, %v448
    %v454 = vadd.f32 %v394, %v437
    %v455 = vadd.f32 %v395, %v441
    %v456 = vadd.f32 %v396, %v445
    %v457 = vadd.f32 %v397, %v449
    %v458 = vmax.f32 %v454, 1e-07
    %v459 = vmax.f32 %v455, 1e-07
    %v460 = vmax.f32 %v456, 1e-07
    %v461 = vmax.f32 %v457, 1e-07
    %v462 = vld [vmem:[%s2] ss:$4 sm:$0x3]
    %s463 = scalar_lea.vmem %s2, 8
    %v464 = vld [vmem:[%s463] ss:$4 sm:$0x3]
    %v465 = vmul.f32 %v458, 0.5
    %v466 = vmul.f32 %v459, 0.5
    %v467 = vmul.f32 %v460, 0.5
    %v468 = vmul.f32 %v461, 0.5
    %v469 = vmul.f32 %v465, %v458
    %v470 = vmul.f32 %v466, %v459
    %v471 = vmul.f32 %v467, %v460
    %v472 = vmul.f32 %v468, %v461
    %v473 = vadd.f32 %v424, %v469
    %v474 = vadd.f32 %v425, %v470
    %v475 = vadd.f32 %v426, %v471
    %v476 = vadd.f32 %v427, %v472
    %v479 = vlaneseq
    %v480 = vshrl.u32 %v479, 7
    %v481 = vsub.s32 0, %v480
    %v482 = vrot.slane %v462, %v481
    %v483 = vlaneseq
    %v484 = vshrl.u32 %v483, 7
    %v485 = vsub.s32 1, %v484
    %v486 = vrot.slane %v462, %v485
    %v487 = vlaneseq
    %v488 = vshrl.u32 %v487, 7
    %v489 = vsub.s32 0, %v488
    %v490 = vrot.slane %v464, %v489
    %v491 = vlaneseq
    %v492 = vshrl.u32 %v491, 7
    %v493 = vsub.s32 1, %v492
    %v494 = vrot.slane %v464, %v493
    %v499 = vmul.f32 %v458, %v482
    %v500 = vmul.f32 %v459, %v486
    %v501 = vmul.f32 %v460, %v490
    %v502 = vmul.f32 %v461, %v494
    %v503 = vadd.f32 %v473, %v499
    %v504 = vadd.f32 %v474, %v500
    %v505 = vadd.f32 %v475, %v501
    %v506 = vadd.f32 %v476, %v502
    %v507 = vmul.f32 %v503, 1.442695
    %v508 = vpow.pop %v507
    %v509 = vmul.f32 %v504, 1.442695
    %v510 = vpow.pop %v509
    %v511 = vmul.f32 %v505, 1.442695
    %v512 = vpow.pop %v511
    %v513 = vmul.f32 %v506, 1.442695
    %v514 = vpow.pop %v513
    %v519 = vcombine.low %v508, %v510
    %v521 = vunpack.c.l.s4 1966171168
    %v522 = vunpack.c.0.s8 %v521
    %v523 = vlaneseq
    %v524 = vshrl.u32 %v523, 7
    %v525 = vsub.s32 %v522, %v524
    %v526 = vrot.slane %v519, %v525
    %v528 = vunpack.c.l.s4 1966171168
    %v529 = vunpack.c.0.s8 %v528
    %v530 = vlaneseq
    %v531 = vshrl.u32 %v530, 7
    %v532 = vsub.s32 %v529, %v531
    %v533 = vrot.slane %v526, %v532
    %v534 = vcombine.low %v512, %v514
    %v536 = vunpack.c.l.s4 1966171168
    %v537 = vunpack.c.0.s8 %v536
    %v538 = vlaneseq
    %v539 = vshrl.u32 %v538, 7
    %v540 = vsub.s32 %v537, %v539
    %v541 = vrot.slane %v534, %v540
    %v543 = vunpack.c.l.s4 1966171168
    %v544 = vunpack.c.0.s8 %v543
    %v545 = vlaneseq
    %v546 = vshrl.u32 %v545, 7
    %v547 = vsub.s32 %v544, %v546
    %v548 = vrot.slane %v541, %v547
    %v551 = vmul.f32 %v84, %v533
    %v552 = vmul.f32 %v86, %v548
    %v553 = vsub.f32 %v551, %v107
    %v554 = vsub.f32 %v552, %v109
    %v555 = vand.u32 2147483647, %v553
    %v556 = vand.u32 2147483647, %v554
    %v559 = vcombine.low %v555, %v556
    %v561 = vunpack.c.l.s4 1966171168
    %v562 = vunpack.c.0.s8 %v561
    %v563 = vlaneseq
    %v564 = vshrl.u32 %v563, 7
    %v565 = vsub.s32 %v562, %v564
    %v566 = vrot.slane %v559, %v565
    %v567 = vcombine.high %v566, %v566
    %v569 = vunpack.c.l.s4 1966171168
    %v570 = vunpack.c.0.s8 %v569
    %v571 = vlaneseq
    %v572 = vshrl.u32 %v571, 7
    %v573 = vsub.s32 %v570, %v572
    %v574 = vrot.slane %v566, %v573
    %v576 = vunpack.c.l.s4 1966171168
    %v577 = vunpack.c.0.s8 %v576
    %v578 = vlaneseq
    %v579 = vshrl.u32 %v578, 7
    %v580 = vsub.s32 %v577, %v579
    %v581 = vrot.slane %v567, %v580
    %vm584 = vcmask 1041408
    %v585 = vsel %vm584, %v574, 0.0
    %v586 = vsel %vm584, %v581, 0.0
    %v587 = vadd.f32 %v585, %v586
    %588 = vadd.xlane.f32.xlu0 %v587
    %v589 = vpop.xlane.xlu0 %588
    %v590 = vrot.slane %v589, 4
    %v591 = vadd.f32 %v589, %v590
    %v592 = vrot.slane %v591, 2
    %v593 = vadd.f32 %v591, %v592
    %v594 = vrot.slane %v593, 1
    %v595 = vadd.f32 %v593, %v594
    %s596 = vtos %v595
    %s597 = sadd.f32 %s596, 0.0
    %v598 = vrcp.pop %v192
    %v599 = vrcp.pop %v193
    %v600 = vlog2.pop %v192
    %v601 = vmul.f32 %v600, 0.6931472
    %v602 = vlog2.pop %v193
    %v603 = vmul.f32 %v602, 0.6931472
    %v604 = vlog2.pop %v458
    %v605 = vmul.f32 %v604, 0.6931472
    %v606 = vlog2.pop %v459
    %v607 = vmul.f32 %v606, 0.6931472
    %v608 = vlog2.pop %v460
    %v609 = vmul.f32 %v608, 0.6931472
    %v610 = vlog2.pop %v461
    %v611 = vmul.f32 %v610, 0.6931472
    %v616 = vcombine.low %v605, %v607
    %v618 = vunpack.c.l.s4 1966171168
    %v619 = vunpack.c.0.s8 %v618
    %v620 = vlaneseq
    %v621 = vshrl.u32 %v620, 7
    %v622 = vsub.s32 %v619, %v621
    %v623 = vrot.slane %v616, %v622
    %v625 = vunpack.c.l.s4 1966171168
    %v626 = vunpack.c.0.s8 %v625
    %v627 = vlaneseq
    %v628 = vshrl.u32 %v627, 7
    %v629 = vsub.s32 %v626, %v628
    %v630 = vrot.slane %v623, %v629
    %v631 = vcombine.low %v609, %v611
    %v633 = vunpack.c.l.s4 1966171168
    %v634 = vunpack.c.0.s8 %v633
    %v635 = vlaneseq
    %v636 = vshrl.u32 %v635, 7
    %v637 = vsub.s32 %v634, %v636
    %v638 = vrot.slane %v631, %v637
    %v640 = vunpack.c.l.s4 1966171168
    %v641 = vunpack.c.0.s8 %v640
    %v642 = vlaneseq
    %v643 = vshrl.u32 %v642, 7
    %v644 = vsub.s32 %v641, %v643
    %v645 = vrot.slane %v638, %v644
    %v648 = vsub.f32 %v601, %v630
    %v649 = vsub.f32 %v603, %v645
    %v650 = vmul.f32 %v458, %v458
    %v651 = vmul.f32 %v459, %v459
    %v652 = vmul.f32 %v460, %v460
    %v653 = vmul.f32 %v461, %v461
    %v656 = vlaneseq
    %v657 = vshrl.u32 %v656, 7
    %v658 = vsub.s32 0, %v657
    %v659 = vrot.slane %v134, %v658
    %v660 = vlaneseq
    %v661 = vshrl.u32 %v660, 7
    %v662 = vsub.s32 1, %v661
    %v663 = vrot.slane %v134, %v662
    %v664 = vlaneseq
    %v665 = vshrl.u32 %v664, 7
    %v666 = vsub.s32 0, %v665
    %v667 = vrot.slane %v135, %v666
    %v668 = vlaneseq
    %v669 = vshrl.u32 %v668, 7
    %v670 = vsub.s32 1, %v669
    %v671 = vrot.slane %v135, %v670
    %v676 = vsub.f32 %v424, %v659
    %v677 = vsub.f32 %v425, %v663
    %v678 = vsub.f32 %v426, %v667
    %v679 = vsub.f32 %v427, %v671
    %v680 = vmul.f32 %v676, %v676
    %v681 = vmul.f32 %v677, %v677
    %v682 = vmul.f32 %v678, %v678
    %v683 = vmul.f32 %v679, %v679
    %v684 = vadd.f32 %v650, %v680
    %v685 = vadd.f32 %v651, %v681
    %v686 = vadd.f32 %v652, %v682
    %v687 = vadd.f32 %v653, %v683
    %v688 = vmul.f32 %v598, 0.5
    %v689 = vmul.f32 %v599, 0.5
    %v690 = vmul.f32 %v688, %v598
    %v691 = vmul.f32 %v689, %v599
    %v694 = vlaneseq
    %v695 = vshrl.u32 %v694, 7
    %v696 = vsub.s32 0, %v695
    %v697 = vrot.slane %v690, %v696
    %v698 = vlaneseq
    %v699 = vshrl.u32 %v698, 7
    %v700 = vsub.s32 1, %v699
    %v701 = vrot.slane %v690, %v700
    %v702 = vlaneseq
    %v703 = vshrl.u32 %v702, 7
    %v704 = vsub.s32 0, %v703
    %v705 = vrot.slane %v691, %v704
    %v706 = vlaneseq
    %v707 = vshrl.u32 %v706, 7
    %v708 = vsub.s32 1, %v707
    %v709 = vrot.slane %v691, %v708
    %v714 = vmul.f32 %v684, %v697
    %v715 = vmul.f32 %v685, %v701
    %v716 = vmul.f32 %v686, %v705
    %v717 = vmul.f32 %v687, %v709
    %v722 = vcombine.low %v714, %v715
    %v724 = vunpack.c.l.s4 1966171168
    %v725 = vunpack.c.0.s8 %v724
    %v726 = vlaneseq
    %v727 = vshrl.u32 %v726, 7
    %v728 = vsub.s32 %v725, %v727
    %v729 = vrot.slane %v722, %v728
    %v731 = vunpack.c.l.s4 1966171168
    %v732 = vunpack.c.0.s8 %v731
    %v733 = vlaneseq
    %v734 = vshrl.u32 %v733, 7
    %v735 = vsub.s32 %v732, %v734
    %v736 = vrot.slane %v729, %v735
    %v737 = vcombine.low %v716, %v717
    %v739 = vunpack.c.l.s4 1966171168
    %v740 = vunpack.c.0.s8 %v739
    %v741 = vlaneseq
    %v742 = vshrl.u32 %v741, 7
    %v743 = vsub.s32 %v740, %v742
    %v744 = vrot.slane %v737, %v743
    %v746 = vunpack.c.l.s4 1966171168
    %v747 = vunpack.c.0.s8 %v746
    %v748 = vlaneseq
    %v749 = vshrl.u32 %v748, 7
    %v750 = vsub.s32 %v747, %v749
    %v751 = vrot.slane %v744, %v750
    %v754 = vadd.f32 %v648, %v736
    %v755 = vadd.f32 %v649, %v751
    %v756 = vsub.f32 %v754, 0.5
    %v757 = vsub.f32 %v755, 0.5
    %v760 = vcombine.low %v756, %v757
    %v762 = vunpack.c.l.s4 1966171168
    %v763 = vunpack.c.0.s8 %v762
    %v764 = vlaneseq
    %v765 = vshrl.u32 %v764, 7
    %v766 = vsub.s32 %v763, %v765
    %v767 = vrot.slane %v760, %v766
    %v768 = vcombine.high %v767, %v767
    %v770 = vunpack.c.l.s4 1966171168
    %v771 = vunpack.c.0.s8 %v770
    %v772 = vlaneseq
    %v773 = vshrl.u32 %v772, 7
    %v774 = vsub.s32 %v771, %v773
    %v775 = vrot.slane %v767, %v774
    %v777 = vunpack.c.l.s4 1966171168
    %v778 = vunpack.c.0.s8 %v777
    %v779 = vlaneseq
    %v780 = vshrl.u32 %v779, 7
    %v781 = vsub.s32 %v778, %v780
    %v782 = vrot.slane %v768, %v781
    %v785 = vsel %vm584, %v775, 0.0
    %v786 = vsel %vm584, %v782, 0.0
    %v787 = vadd.f32 %v785, %v786
    %788 = vadd.xlane.f32.xlu0 %v787
    %v789 = vpop.xlane.xlu0 %788
    %v790 = vrot.slane %v789, 4
    %v791 = vadd.f32 %v789, %v790
    %v792 = vrot.slane %v791, 2
    %v793 = vadd.f32 %v791, %v792
    %v794 = vrot.slane %v793, 1
    %v795 = vadd.f32 %v793, %v794
    %s796 = vtos %v795
    %s797 = sadd.f32 %s796, 0.0
    %s798 = scalar_lea.vmem [#allocation2], 1
    %v799 = vld [vmem:[%s798] ss:$4 sm:$0x3]
    %s800 = scalar_lea.vmem [#allocation2], 57
    %v801 = vld [vmem:[%s800] ss:$4 sm:$0x3]
    %s802 = scalar_lea.vmem %s102, 1 [#allocation2]
    %v803 = vld [vmem:[%s802] ss:$4 sm:$0x3]
    %s804 = scalar_lea.vmem %s102, 57 [#allocation2]
    %v805 = vld [vmem:[%s804] ss:$4 sm:$0x3]
    %s806 = scalar_lea.vmem %s106, 1 [#allocation2]
    %v807 = vld [vmem:[%s806] ss:$4 sm:$0x3]
    %s808 = scalar_lea.vmem %s106, 57 [#allocation2]
    %v809 = vld [vmem:[%s808] ss:$4 sm:$0x3]
    %s810 = scalar_lea.vmem %s110, 1 [#allocation2]
    %v811 = vld [vmem:[%s810] ss:$4 sm:$0x3]
    %s812 = scalar_lea.vmem %s110, 57 [#allocation2]
    %v813 = vld [vmem:[%s812] ss:$4 sm:$0x3]
    %s814 = scalar_lea.vmem %s114, 1 [#allocation2]
    %v815 = vld [vmem:[%s814] ss:$4 sm:$0x3]
    %s816 = scalar_lea.vmem %s114, 57 [#allocation2]
    %v817 = vld [vmem:[%s816] ss:$4 sm:$0x3]
    %s818 = scalar_lea.vmem %s118, 1 [#allocation2]
    %v819 = vld [vmem:[%s818] ss:$4 sm:$0x3]
    %s820 = scalar_lea.vmem %s118, 57 [#allocation2]
    %v821 = vld [vmem:[%s820] ss:$4 sm:$0x3]
    %v822 = vadd.f32 %v799, %v803
    %v823 = vadd.f32 %v801, %v805
    %v824 = vadd.f32 %v822, %v88
    %v825 = vadd.f32 %v823, %v90
    %v826 = vadd.f32 %v824, %v807
    %v827 = vadd.f32 %v825, %v809
    %v828 = vadd.f32 %v826, %v811
    %v829 = vadd.f32 %v827, %v813
    %v830 = vadd.f32 %v828, %v815
    %v831 = vadd.f32 %v829, %v817
    %v832 = vadd.f32 %v830, %v819
    %v833 = vadd.f32 %v831, %v821
    %v834 = vmul.f32 %v832, 0.14285715
    %v835 = vmul.f32 %v833, 0.14285715
    %v836 = vsub.f32 %v799, %v834
    %v837 = vsub.f32 %v801, %v835
    %v838 = vmul.f32 %v836, %v836
    %v839 = vmul.f32 %v837, %v837
    %v840 = vsub.f32 %v803, %v834
    %v841 = vsub.f32 %v805, %v835
    %v842 = vmul.f32 %v840, %v840
    %v843 = vmul.f32 %v841, %v841
    %v844 = vadd.f32 %v838, %v842
    %v845 = vadd.f32 %v839, %v843
    %v846 = vsub.f32 %v88, %v834
    %v847 = vsub.f32 %v90, %v835
    %v848 = vmul.f32 %v846, %v846
    %v849 = vmul.f32 %v847, %v847
    %v850 = vadd.f32 %v844, %v848
    %v851 = vadd.f32 %v845, %v849
    %v852 = vsub.f32 %v807, %v834
    %v853 = vsub.f32 %v809, %v835
    %v854 = vmul.f32 %v852, %v852
    %v855 = vmul.f32 %v853, %v853
    %v856 = vadd.f32 %v850, %v854
    %v857 = vadd.f32 %v851, %v855
    %v858 = vsub.f32 %v811, %v834
    %v859 = vsub.f32 %v813, %v835
    %v860 = vmul.f32 %v858, %v858
    %v861 = vmul.f32 %v859, %v859
    %v862 = vadd.f32 %v856, %v860
    %v863 = vadd.f32 %v857, %v861
    %v864 = vsub.f32 %v815, %v834
    %v865 = vsub.f32 %v817, %v835
    %v866 = vmul.f32 %v864, %v864
    %v867 = vmul.f32 %v865, %v865
    %v868 = vadd.f32 %v862, %v866
    %v869 = vadd.f32 %v863, %v867
    %v870 = vsub.f32 %v819, %v834
    %v871 = vsub.f32 %v821, %v835
    %v872 = vmul.f32 %v870, %v870
    %v873 = vmul.f32 %v871, %v871
    %v874 = vadd.f32 %v868, %v872
    %v875 = vadd.f32 %v869, %v873
    %v876 = vmul.f32 %v874, 0.16666667
    %v877 = vmul.f32 %v875, 0.16666667
    %v878 = vrsqrt.pop %v876
    %v879 = vmul.f32 %v876, %v878
    %vm880 = vcmp.eq.f32.partialorder %v876, inf
    %v881 = vsel %vm880, %v876, %v879
    %vm882 = vcmp.eq.f32.partialorder %v876, 0.0
    %v883 = vand.u32 %v876, 2147483648
    %v884 = vsel %vm882, %v883, %v881
    %v885 = vrsqrt.pop %v877
    %v886 = vmul.f32 %v877, %v885
    %vm887 = vcmp.eq.f32.partialorder %v877, inf
    %v888 = vsel %vm887, %v877, %v886
    %vm889 = vcmp.eq.f32.partialorder %v877, 0.0
    %v890 = vand.u32 %v877, 2147483648
    %v891 = vsel %vm889, %v890, %v888
    %v892 = vmax.f32 %v884, 1e-07
    %v893 = vmax.f32 %v891, 1e-07
    %v894 = vld [vmem:[%s3 + $0x1] sm:$0x1]
    %v895 = vld [vmem:[%s3 + $0x9] sm:$0x1]
    %v896 = vld [vmem:[%s3 + $0x5] sm:$0x1]
    %v897 = vld [vmem:[%s3 + $0xd] sm:$0x1]
    %s898 = sld [smem:[#allocation6 + $0x80]]
    %v899 = vstv %s898
    %v900 = vmul.f32 %v899, %v84
    %v901 = vmul.f32 %v899, %v86
    %903 = vset.pattern.permute.xlu0 0
    %904 = vperm.xlu0 %903, %v894
    %v905 = vpop.permute.xlu0 %904
    %908 = vset.pattern.permute.xlu0 0
    %909 = vperm.xlu0 %908, %v895
    %v910 = vpop.permute.xlu0 %909
    %v914 = vlaneseq
    %v915 = vshrl.u32 %v914, 7
    %v916 = vsub.s32 0, %v915
    %v917 = vrot.slane %v900, %v916
    %v918 = vlaneseq
    %v919 = vshrl.u32 %v918, 7
    %v920 = vsub.s32 1, %v919
    %v921 = vrot.slane %v900, %v920
    %v922 = vlaneseq
    %v923 = vshrl.u32 %v922, 7
    %v924 = vsub.s32 0, %v923
    %v925 = vrot.slane %v901, %v924
    %v926 = vlaneseq
    %v927 = vshrl.u32 %v926, 7
    %v928 = vsub.s32 1, %v927
    %v929 = vrot.slane %v901, %v928
    %v934 = vadd.f32 %v905, %v917
    %v935 = vadd.f32 %v905, %v921
    %v936 = vadd.f32 %v910, %v925
    %v937 = vadd.f32 %v910, %v929
    %s938 = sld [smem:[#allocation6 + $0x280]]
    %v939 = vstv %s938
    %v940 = vmul.f32 %v939, %v84
    %v941 = vmul.f32 %v939, %v86
    %943 = vset.pattern.permute.xlu0 0
    %944 = vperm.xlu0 %943, %v896
    %v945 = vpop.permute.xlu0 %944
    %948 = vset.pattern.permute.xlu0 0
    %949 = vperm.xlu0 %948, %v897
    %v950 = vpop.permute.xlu0 %949
    %v954 = vlaneseq
    %v955 = vshrl.u32 %v954, 7
    %v956 = vsub.s32 0, %v955
    %v957 = vrot.slane %v940, %v956
    %v958 = vlaneseq
    %v959 = vshrl.u32 %v958, 7
    %v960 = vsub.s32 1, %v959
    %v961 = vrot.slane %v940, %v960
    %v962 = vlaneseq
    %v963 = vshrl.u32 %v962, 7
    %v964 = vsub.s32 0, %v963
    %v965 = vrot.slane %v941, %v964
    %v966 = vlaneseq
    %v967 = vshrl.u32 %v966, 7
    %v968 = vsub.s32 1, %v967
    %v969 = vrot.slane %v941, %v968
    %v974 = vadd.f32 %v945, %v957
    %v975 = vadd.f32 %v945, %v961
    %v976 = vadd.f32 %v950, %v965
    %v977 = vadd.f32 %v950, %v969
    %s978 = sld [smem:[#allocation6 + $0x81]]
    %v979 = vstv %s978
    %v980 = vmul.f32 %v979, %v88
    %v981 = vmul.f32 %v979, %v90
    %v984 = vlaneseq
    %v985 = vshrl.u32 %v984, 7
    %v986 = vsub.s32 0, %v985
    %v987 = vrot.slane %v980, %v986
    %v988 = vlaneseq
    %v989 = vshrl.u32 %v988, 7
    %v990 = vsub.s32 1, %v989
    %v991 = vrot.slane %v980, %v990
    %v992 = vlaneseq
    %v993 = vshrl.u32 %v992, 7
    %v994 = vsub.s32 0, %v993
    %v995 = vrot.slane %v981, %v994
    %v996 = vlaneseq
    %v997 = vshrl.u32 %v996, 7
    %v998 = vsub.s32 1, %v997
    %v999 = vrot.slane %v981, %v998
    %v1004 = vadd.f32 %v934, %v987
    %v1005 = vadd.f32 %v935, %v991
    %v1006 = vadd.f32 %v936, %v995
    %v1007 = vadd.f32 %v937, %v999
    %s1008 = sld [smem:[#allocation6 + $0x281]]
    %v1009 = vstv %s1008
    %v1010 = vmul.f32 %v1009, %v88
    %v1011 = vmul.f32 %v1009, %v90
    %v1014 = vlaneseq
    %v1015 = vshrl.u32 %v1014, 7
    %v1016 = vsub.s32 0, %v1015
    %v1017 = vrot.slane %v1010, %v1016
    %v1018 = vlaneseq
    %v1019 = vshrl.u32 %v1018, 7
    %v1020 = vsub.s32 1, %v1019
    %v1021 = vrot.slane %v1010, %v1020
    %v1022 = vlaneseq
    %v1023 = vshrl.u32 %v1022, 7
    %v1024 = vsub.s32 0, %v1023
    %v1025 = vrot.slane %v1011, %v1024
    %v1026 = vlaneseq
    %v1027 = vshrl.u32 %v1026, 7
    %v1028 = vsub.s32 1, %v1027
    %v1029 = vrot.slane %v1011, %v1028
    %v1034 = vadd.f32 %v974, %v1017
    %v1035 = vadd.f32 %v975, %v1021
    %v1036 = vadd.f32 %v976, %v1025
    %v1037 = vadd.f32 %v977, %v1029
    %s1038 = sld [smem:[#allocation6 + $0x82]]
    %v1039 = vstv %s1038
    %v1040 = vmul.f32 %v1039, %v92
    %v1041 = vmul.f32 %v1039, %v94
    %v1044 = vlaneseq
    %v1045 = vshrl.u32 %v1044, 7
    %v1046 = vsub.s32 0, %v1045
    %v1047 = vrot.slane %v1040, %v1046
    %v1048 = vlaneseq
    %v1049 = vshrl.u32 %v1048, 7
    %v1050 = vsub.s32 1, %v1049
    %v1051 = vrot.slane %v1040, %v1050
    %v1052 = vlaneseq
    %v1053 = vshrl.u32 %v1052, 7
    %v1054 = vsub.s32 0, %v1053
    %v1055 = vrot.slane %v1041, %v1054
    %v1056 = vlaneseq
    %v1057 = vshrl.u32 %v1056, 7
    %v1058 = vsub.s32 1, %v1057
    %v1059 = vrot.slane %v1041, %v1058
    %v1064 = vadd.f32 %v1004, %v1047
    %v1065 = vadd.f32 %v1005, %v1051
    %v1066 = vadd.f32 %v1006, %v1055
    %v1067 = vadd.f32 %v1007, %v1059
    %s1068 = sld [smem:[#allocation6 + $0x282]]
    %v1069 = vstv %s1068
    %v1070 = vmul.f32 %v1069, %v92
    %v1071 = vmul.f32 %v1069, %v94
    %v1074 = vlaneseq
    %v1075 = vshrl.u32 %v1074, 7
    %v1076 = vsub.s32 0, %v1075
    %v1077 = vrot.slane %v1070, %v1076
    %v1078 = vlaneseq
    %v1079 = vshrl.u32 %v1078, 7
    %v1080 = vsub.s32 1, %v1079
    %v1081 = vrot.slane %v1070, %v1080
    %v1082 = vlaneseq
    %v1083 = vshrl.u32 %v1082, 7
    %v1084 = vsub.s32 0, %v1083
    %v1085 = vrot.slane %v1071, %v1084
    %v1086 = vlaneseq
    %v1087 = vshrl.u32 %v1086, 7
    %v1088 = vsub.s32 1, %v1087
    %v1089 = vrot.slane %v1071, %v1088
    %v1094 = vadd.f32 %v1034, %v1077
    %v1095 = vadd.f32 %v1035, %v1081
    %v1096 = vadd.f32 %v1036, %v1085
    %v1097 = vadd.f32 %v1037, %v1089
    %s1098 = sld [smem:[#allocation6 + $0x83]]
    %v1099 = vstv %s1098
    %v1100 = vmul.f32 %v1099, %v96
    %v1101 = vmul.f32 %v1099, %v98
    %v1104 = vlaneseq
    %v1105 = vshrl.u32 %v1104, 7
    %v1106 = vsub.s32 0, %v1105
    %v1107 = vrot.slane %v1100, %v1106
    %v1108 = vlaneseq
    %v1109 = vshrl.u32 %v1108, 7
    %v1110 = vsub.s32 1, %v1109
    %v1111 = vrot.slane %v1100, %v1110
    %v1112 = vlaneseq
    %v1113 = vshrl.u32 %v1112, 7
    %v1114 = vsub.s32 0, %v1113
    %v1115 = vrot.slane %v1101, %v1114
    %v1116 = vlaneseq
    %v1117 = vshrl.u32 %v1116, 7
    %v1118 = vsub.s32 1, %v1117
    %v1119 = vrot.slane %v1101, %v1118
    %v1124 = vadd.f32 %v1064, %v1107
    %v1125 = vadd.f32 %v1065, %v1111
    %v1126 = vadd.f32 %v1066, %v1115
    %v1127 = vadd.f32 %v1067, %v1119
    %s1128 = sld [smem:[#allocation6 + $0x283]]
    %v1129 = vstv %s1128
    %v1130 = vmul.f32 %v1129, %v96
    %v1131 = vmul.f32 %v1129, %v98
    %v1134 = vlaneseq
    %v1135 = vshrl.u32 %v1134, 7
    %v1136 = vsub.s32 0, %v1135
    %v1137 = vrot.slane %v1130, %v1136
    %v1138 = vlaneseq
    %v1139 = vshrl.u32 %v1138, 7
    %v1140 = vsub.s32 1, %v1139
    %v1141 = vrot.slane %v1130, %v1140
    %v1142 = vlaneseq
    %v1143 = vshrl.u32 %v1142, 7
    %v1144 = vsub.s32 0, %v1143
    %v1145 = vrot.slane %v1131, %v1144
    %v1146 = vlaneseq
    %v1147 = vshrl.u32 %v1146, 7
    %v1148 = vsub.s32 1, %v1147
    %v1149 = vrot.slane %v1131, %v1148
    %v1154 = vadd.f32 %v1094, %v1137
    %v1155 = vadd.f32 %v1095, %v1141
    %v1156 = vadd.f32 %v1096, %v1145
    %v1157 = vadd.f32 %v1097, %v1149
    %v1158 = vmax.f32 %v1154, 1e-07
    %v1159 = vmax.f32 %v1155, 1e-07
    %v1160 = vmax.f32 %v1156, 1e-07
    %v1161 = vmax.f32 %v1157, 1e-07
    %s1162 = scalar_lea.vmem %s2, 1
    %v1163 = vld [vmem:[%s1162] ss:$4 sm:$0x3]
    %s1164 = scalar_lea.vmem %s2, 9
    %v1165 = vld [vmem:[%s1164] ss:$4 sm:$0x3]
    %v1166 = vmul.f32 %v1158, 0.5
    %v1167 = vmul.f32 %v1159, 0.5
    %v1168 = vmul.f32 %v1160, 0.5
    %v1169 = vmul.f32 %v1161, 0.5
    %v1170 = vmul.f32 %v1166, %v1158
    %v1171 = vmul.f32 %v1167, %v1159
    %v1172 = vmul.f32 %v1168, %v1160
    %v1173 = vmul.f32 %v1169, %v1161
    %v1174 = vadd.f32 %v1124, %v1170
    %v1175 = vadd.f32 %v1125, %v1171
    %v1176 = vadd.f32 %v1126, %v1172
    %v1177 = vadd.f32 %v1127, %v1173
    %v1180 = vlaneseq
    %v1181 = vshrl.u32 %v1180, 7
    %v1182 = vsub.s32 0, %v1181
    %v1183 = vrot.slane %v1163, %v1182
    %v1184 = vlaneseq
    %v1185 = vshrl.u32 %v1184, 7
    %v1186 = vsub.s32 1, %v1185
    %v1187 = vrot.slane %v1163, %v1186
    %v1188 = vlaneseq
    %v1189 = vshrl.u32 %v1188, 7
    %v1190 = vsub.s32 0, %v1189
    %v1191 = vrot.slane %v1165, %v1190
    %v1192 = vlaneseq
    %v1193 = vshrl.u32 %v1192, 7
    %v1194 = vsub.s32 1, %v1193
    %v1195 = vrot.slane %v1165, %v1194
    %v1200 = vmul.f32 %v1158, %v1183
    %v1201 = vmul.f32 %v1159, %v1187
    %v1202 = vmul.f32 %v1160, %v1191
    %v1203 = vmul.f32 %v1161, %v1195
    %v1204 = vadd.f32 %v1174, %v1200
    %v1205 = vadd.f32 %v1175, %v1201
    %v1206 = vadd.f32 %v1176, %v1202
    %v1207 = vadd.f32 %v1177, %v1203
    %v1208 = vmul.f32 %v1204, 1.442695
    %v1209 = vpow.pop %v1208
    %v1210 = vmul.f32 %v1205, 1.442695
    %v1211 = vpow.pop %v1210
    %v1212 = vmul.f32 %v1206, 1.442695
    %v1213 = vpow.pop %v1212
    %v1214 = vmul.f32 %v1207, 1.442695
    %v1215 = vpow.pop %v1214
    %v1220 = vcombine.low %v1209, %v1211
    %v1222 = vunpack.c.l.s4 1966171168
    %v1223 = vunpack.c.0.s8 %v1222
    %v1224 = vlaneseq
    %v1225 = vshrl.u32 %v1224, 7
    %v1226 = vsub.s32 %v1223, %v1225
    %v1227 = vrot.slane %v1220, %v1226
    %v1229 = vunpack.c.l.s4 1966171168
    %v1230 = vunpack.c.0.s8 %v1229
    %v1231 = vlaneseq
    %v1232 = vshrl.u32 %v1231, 7
    %v1233 = vsub.s32 %v1230, %v1232
    %v1234 = vrot.slane %v1227, %v1233
    %v1235 = vcombine.low %v1213, %v1215
    %v1237 = vunpack.c.l.s4 1966171168
    %v1238 = vunpack.c.0.s8 %v1237
    %v1239 = vlaneseq
    %v1240 = vshrl.u32 %v1239, 7
    %v1241 = vsub.s32 %v1238, %v1240
    %v1242 = vrot.slane %v1235, %v1241
    %v1244 = vunpack.c.l.s4 1966171168
    %v1245 = vunpack.c.0.s8 %v1244
    %v1246 = vlaneseq
    %v1247 = vshrl.u32 %v1246, 7
    %v1248 = vsub.s32 %v1245, %v1247
    %v1249 = vrot.slane %v1242, %v1248
    %v1252 = vmul.f32 %v88, %v1234
    %v1253 = vmul.f32 %v90, %v1249
    %v1254 = vsub.f32 %v1252, %v807
    %v1255 = vsub.f32 %v1253, %v809
    %v1256 = vand.u32 2147483647, %v1254
    %v1257 = vand.u32 2147483647, %v1255
    %v1260 = vcombine.low %v1256, %v1257
    %v1262 = vunpack.c.l.s4 1966171168
    %v1263 = vunpack.c.0.s8 %v1262
    %v1264 = vlaneseq
    %v1265 = vshrl.u32 %v1264, 7
    %v1266 = vsub.s32 %v1263, %v1265
    %v1267 = vrot.slane %v1260, %v1266
    %v1268 = vcombine.high %v1267, %v1267
    %v1270 = vunpack.c.l.s4 1966171168
    %v1271 = vunpack.c.0.s8 %v1270
    %v1272 = vlaneseq
    %v1273 = vshrl.u32 %v1272, 7
    %v1274 = vsub.s32 %v1271, %v1273
    %v1275 = vrot.slane %v1267, %v1274
    %v1277 = vunpack.c.l.s4 1966171168
    %v1278 = vunpack.c.0.s8 %v1277
    %v1279 = vlaneseq
    %v1280 = vshrl.u32 %v1279, 7
    %v1281 = vsub.s32 %v1278, %v1280
    %v1282 = vrot.slane %v1268, %v1281
    %v1285 = vsel %vm584, %v1275, 0.0
    %v1286 = vsel %vm584, %v1282, 0.0
    %v1287 = vadd.f32 %v1285, %v1286
    %1288 = vadd.xlane.f32.xlu0 %v1287
    %v1289 = vpop.xlane.xlu0 %1288
    %v1290 = vrot.slane %v1289, 4
    %v1291 = vadd.f32 %v1289, %v1290
    %v1292 = vrot.slane %v1291, 2
    %v1293 = vadd.f32 %v1291, %v1292
    %v1294 = vrot.slane %v1293, 1
    %v1295 = vadd.f32 %v1293, %v1294
    %s1296 = vtos %v1295
    %s1297 = sadd.f32 %s597, %s1296
    %v1298 = vrcp.pop %v892
    %v1299 = vrcp.pop %v893
    %v1300 = vlog2.pop %v892
    %v1301 = vmul.f32 %v1300, 0.6931472
    %v1302 = vlog2.pop %v893
    %v1303 = vmul.f32 %v1302, 0.6931472
    %v1304 = vlog2.pop %v1158
    %v1305 = vmul.f32 %v1304, 0.6931472
    %v1306 = vlog2.pop %v1159
    %v1307 = vmul.f32 %v1306, 0.6931472
    %v1308 = vlog2.pop %v1160
    %v1309 = vmul.f32 %v1308, 0.6931472
    %v1310 = vlog2.pop %v1161
    %v1311 = vmul.f32 %v1310, 0.6931472
    %v1316 = vcombine.low %v1305, %v1307
    %v1318 = vunpack.c.l.s4 1966171168
    %v1319 = vunpack.c.0.s8 %v1318
    %v1320 = vlaneseq
    %v1321 = vshrl.u32 %v1320, 7
    %v1322 = vsub.s32 %v1319, %v1321
    %v1323 = vrot.slane %v1316, %v1322
    %v1325 = vunpack.c.l.s4 1966171168
    %v1326 = vunpack.c.0.s8 %v1325
    %v1327 = vlaneseq
    %v1328 = vshrl.u32 %v1327, 7
    %v1329 = vsub.s32 %v1326, %v1328
    %v1330 = vrot.slane %v1323, %v1329
    %v1331 = vcombine.low %v1309, %v1311
    %v1333 = vunpack.c.l.s4 1966171168
    %v1334 = vunpack.c.0.s8 %v1333
    %v1335 = vlaneseq
    %v1336 = vshrl.u32 %v1335, 7
    %v1337 = vsub.s32 %v1334, %v1336
    %v1338 = vrot.slane %v1331, %v1337
    %v1340 = vunpack.c.l.s4 1966171168
    %v1341 = vunpack.c.0.s8 %v1340
    %v1342 = vlaneseq
    %v1343 = vshrl.u32 %v1342, 7
    %v1344 = vsub.s32 %v1341, %v1343
    %v1345 = vrot.slane %v1338, %v1344
    %v1348 = vsub.f32 %v1301, %v1330
    %v1349 = vsub.f32 %v1303, %v1345
    %v1350 = vmul.f32 %v1158, %v1158
    %v1351 = vmul.f32 %v1159, %v1159
    %v1352 = vmul.f32 %v1160, %v1160
    %v1353 = vmul.f32 %v1161, %v1161
    %v1356 = vlaneseq
    %v1357 = vshrl.u32 %v1356, 7
    %v1358 = vsub.s32 0, %v1357
    %v1359 = vrot.slane %v834, %v1358
    %v1360 = vlaneseq
    %v1361 = vshrl.u32 %v1360, 7
    %v1362 = vsub.s32 1, %v1361
    %v1363 = vrot.slane %v834, %v1362
    %v1364 = vlaneseq
    %v1365 = vshrl.u32 %v1364, 7
    %v1366 = vsub.s32 0, %v1365
    %v1367 = vrot.slane %v835, %v1366
    %v1368 = vlaneseq
    %v1369 = vshrl.u32 %v1368, 7
    %v1370 = vsub.s32 1, %v1369
    %v1371 = vrot.slane %v835, %v1370
    %v1376 = vsub.f32 %v1124, %v1359
    %v1377 = vsub.f32 %v1125, %v1363
    %v1378 = vsub.f32 %v1126, %v1367
    %v1379 = vsub.f32 %v1127, %v1371
    %v1380 = vmul.f32 %v1376, %v1376
    %v1381 = vmul.f32 %v1377, %v1377
    %v1382 = vmul.f32 %v1378, %v1378
    %v1383 = vmul.f32 %v1379, %v1379
    %v1384 = vadd.f32 %v1350, %v1380
    %v1385 = vadd.f32 %v1351, %v1381
    %v1386 = vadd.f32 %v1352, %v1382
    %v1387 = vadd.f32 %v1353, %v1383
    %v1388 = vmul.f32 %v1298, 0.5
    %v1389 = vmul.f32 %v1299, 0.5
    %v1390 = vmul.f32 %v1388, %v1298
    %v1391 = vmul.f32 %v1389, %v1299
    %v1394 = vlaneseq
    %v1395 = vshrl.u32 %v1394, 7
    %v1396 = vsub.s32 0, %v1395
    %v1397 = vrot.slane %v1390, %v1396
    %v1398 = vlaneseq
    %v1399 = vshrl.u32 %v1398, 7
    %v1400 = vsub.s32 1, %v1399
    %v1401 = vrot.slane %v1390, %v1400
    %v1402 = vlaneseq
    %v1403 = vshrl.u32 %v1402, 7
    %v1404 = vsub.s32 0, %v1403
    %v1405 = vrot.slane %v1391, %v1404
    %v1406 = vlaneseq
    %v1407 = vshrl.u32 %v1406, 7
    %v1408 = vsub.s32 1, %v1407
    %v1409 = vrot.slane %v1391, %v1408
    %v1414 = vmul.f32 %v1384, %v1397
    %v1415 = vmul.f32 %v1385, %v1401
    %v1416 = vmul.f32 %v1386, %v1405
    %v1417 = vmul.f32 %v1387, %v1409
    %v1422 = vcombine.low %v1414, %v1415
    %v1424 = vunpack.c.l.s4 1966171168
    %v1425 = vunpack.c.0.s8 %v1424
    %v1426 = vlaneseq
    %v1427 = vshrl.u32 %v1426, 7
    %v1428 = vsub.s32 %v1425, %v1427
    %v1429 = vrot.slane %v1422, %v1428
    %v1431 = vunpack.c.l.s4 1966171168
    %v1432 = vunpack.c.0.s8 %v1431
    %v1433 = vlaneseq
    %v1434 = vshrl.u32 %v1433, 7
    %v1435 = vsub.s32 %v1432, %v1434
    %v1436 = vrot.slane %v1429, %v1435
    %v1437 = vcombine.low %v1416, %v1417
    %v1439 = vunpack.c.l.s4 1966171168
    %v1440 = vunpack.c.0.s8 %v1439
    %v1441 = vlaneseq
    %v1442 = vshrl.u32 %v1441, 7
    %v1443 = vsub.s32 %v1440, %v1442
    %v1444 = vrot.slane %v1437, %v1443
    %v1446 = vunpack.c.l.s4 1966171168
    %v1447 = vunpack.c.0.s8 %v1446
    %v1448 = vlaneseq
    %v1449 = vshrl.u32 %v1448, 7
    %v1450 = vsub.s32 %v1447, %v1449
    %v1451 = vrot.slane %v1444, %v1450
    %v1454 = vadd.f32 %v1348, %v1436
    %v1455 = vadd.f32 %v1349, %v1451
    %v1456 = vsub.f32 %v1454, 0.5
    %v1457 = vsub.f32 %v1455, 0.5
    %v1460 = vcombine.low %v1456, %v1457
    %v1462 = vunpack.c.l.s4 1966171168
    %v1463 = vunpack.c.0.s8 %v1462
    %v1464 = vlaneseq
    %v1465 = vshrl.u32 %v1464, 7
    %v1466 = vsub.s32 %v1463, %v1465
    %v1467 = vrot.slane %v1460, %v1466
    %v1468 = vcombine.high %v1467, %v1467
    %v1470 = vunpack.c.l.s4 1966171168
    %v1471 = vunpack.c.0.s8 %v1470
    %v1472 = vlaneseq
    %v1473 = vshrl.u32 %v1472, 7
    %v1474 = vsub.s32 %v1471, %v1473
    %v1475 = vrot.slane %v1467, %v1474
    %v1477 = vunpack.c.l.s4 1966171168
    %v1478 = vunpack.c.0.s8 %v1477
    %v1479 = vlaneseq
    %v1480 = vshrl.u32 %v1479, 7
    %v1481 = vsub.s32 %v1478, %v1480
    %v1482 = vrot.slane %v1468, %v1481
    %v1485 = vsel %vm584, %v1475, 0.0
    %v1486 = vsel %vm584, %v1482, 0.0
    %v1487 = vadd.f32 %v1485, %v1486
    %1488 = vadd.xlane.f32.xlu0 %v1487
    %v1489 = vpop.xlane.xlu0 %1488
    %v1490 = vrot.slane %v1489, 4
    %v1491 = vadd.f32 %v1489, %v1490
    %v1492 = vrot.slane %v1491, 2
    %v1493 = vadd.f32 %v1491, %v1492
    %v1494 = vrot.slane %v1493, 1
    %v1495 = vadd.f32 %v1493, %v1494
    %s1496 = vtos %v1495
    %s1497 = sadd.f32 %s797, %s1496
    %s1498 = scalar_lea.vmem [#allocation2], 2
    %v1499 = vld [vmem:[%s1498] ss:$4 sm:$0x3]
    %s1500 = scalar_lea.vmem [#allocation2], 58
    %v1501 = vld [vmem:[%s1500] ss:$4 sm:$0x3]
    %s1502 = scalar_lea.vmem %s102, 2 [#allocation2]
    %v1503 = vld [vmem:[%s1502] ss:$4 sm:$0x3]
    %s1504 = scalar_lea.vmem %s102, 58 [#allocation2]
    %v1505 = vld [vmem:[%s1504] ss:$4 sm:$0x3]
    %s1506 = scalar_lea.vmem %s106, 2 [#allocation2]
    %v1507 = vld [vmem:[%s1506] ss:$4 sm:$0x3]
    %s1508 = scalar_lea.vmem %s106, 58 [#allocation2]
    %v1509 = vld [vmem:[%s1508] ss:$4 sm:$0x3]
    %s1510 = scalar_lea.vmem %s110, 2 [#allocation2]
    %v1511 = vld [vmem:[%s1510] ss:$4 sm:$0x3]
    %s1512 = scalar_lea.vmem %s110, 58 [#allocation2]
    %v1513 = vld [vmem:[%s1512] ss:$4 sm:$0x3]
    %s1514 = scalar_lea.vmem %s114, 2 [#allocation2]
    %v1515 = vld [vmem:[%s1514] ss:$4 sm:$0x3]
    %s1516 = scalar_lea.vmem %s114, 58 [#allocation2]
    %v1517 = vld [vmem:[%s1516] ss:$4 sm:$0x3]
    %s1518 = scalar_lea.vmem %s118, 2 [#allocation2]
    %v1519 = vld [vmem:[%s1518] ss:$4 sm:$0x3]
    %s1520 = scalar_lea.vmem %s118, 58 [#allocation2]
    %v1521 = vld [vmem:[%s1520] ss:$4 sm:$0x3]
    %v1522 = vadd.f32 %v1499, %v1503
    %v1523 = vadd.f32 %v1501, %v1505
    %v1524 = vadd.f32 %v1522, %v92
    %v1525 = vadd.f32 %v1523, %v94
    %v1526 = vadd.f32 %v1524, %v1507
    %v1527 = vadd.f32 %v1525, %v1509
    %v1528 = vadd.f32 %v1526, %v1511
    %v1529 = vadd.f32 %v1527, %v1513
    %v1530 = vadd.f32 %v1528, %v1515
    %v1531 = vadd.f32 %v1529, %v1517
    %v1532 = vadd.f32 %v1530, %v1519
    %v1533 = vadd.f32 %v1531, %v1521
    %v1534 = vmul.f32 %v1532, 0.14285715
    %v1535 = vmul.f32 %v1533, 0.14285715
    %v1536 = vsub.f32 %v1499, %v1534
    %v1537 = vsub.f32 %v1501, %v1535
    %v1538 = vmul.f32 %v1536, %v1536
    %v1539 = vmul.f32 %v1537, %v1537
    %v1540 = vsub.f32 %v1503, %v1534
    %v1541 = vsub.f32 %v1505, %v1535
    %v1542 = vmul.f32 %v1540, %v1540
    %v1543 = vmul.f32 %v1541, %v1541
    %v1544 = vadd.f32 %v1538, %v1542
    %v1545 = vadd.f32 %v1539, %v1543
    %v1546 = vsub.f32 %v92, %v1534
    %v1547 = vsub.f32 %v94, %v1535
    %v1548 = vmul.f32 %v1546, %v1546
    %v1549 = vmul.f32 %v1547, %v1547
    %v1550 = vadd.f32 %v1544, %v1548
    %v1551 = vadd.f32 %v1545, %v1549
    %v1552 = vsub.f32 %v1507, %v1534
    %v1553 = vsub.f32 %v1509, %v1535
    %v1554 = vmul.f32 %v1552, %v1552
    %v1555 = vmul.f32 %v1553, %v1553
    %v1556 = vadd.f32 %v1550, %v1554
    %v1557 = vadd.f32 %v1551, %v1555
    %v1558 = vsub.f32 %v1511, %v1534
    %v1559 = vsub.f32 %v1513, %v1535
    %v1560 = vmul.f32 %v1558, %v1558
    %v1561 = vmul.f32 %v1559, %v1559
    %v1562 = vadd.f32 %v1556, %v1560
    %v1563 = vadd.f32 %v1557, %v1561
    %v1564 = vsub.f32 %v1515, %v1534
    %v1565 = vsub.f32 %v1517, %v1535
    %v1566 = vmul.f32 %v1564, %v1564
    %v1567 = vmul.f32 %v1565, %v1565
    %v1568 = vadd.f32 %v1562, %v1566
    %v1569 = vadd.f32 %v1563, %v1567
    %v1570 = vsub.f32 %v1519, %v1534
    %v1571 = vsub.f32 %v1521, %v1535
    %v1572 = vmul.f32 %v1570, %v1570
    %v1573 = vmul.f32 %v1571, %v1571
    %v1574 = vadd.f32 %v1568, %v1572
    %v1575 = vadd.f32 %v1569, %v1573
    %v1576 = vmul.f32 %v1574, 0.16666667
    %v1577 = vmul.f32 %v1575, 0.16666667
    %v1578 = vrsqrt.pop %v1576
    %v1579 = vmul.f32 %v1576, %v1578
    %vm1580 = vcmp.eq.f32.partialorder %v1576, inf
    %v1581 = vsel %vm1580, %v1576, %v1579
    %vm1582 = vcmp.eq.f32.partialorder %v1576, 0.0
    %v1583 = vand.u32 %v1576, 2147483648
    %v1584 = vsel %vm1582, %v1583, %v1581
    %v1585 = vrsqrt.pop %v1577
    %v1586 = vmul.f32 %v1577, %v1585
    %vm1587 = vcmp.eq.f32.partialorder %v1577, inf
    %v1588 = vsel %vm1587, %v1577, %v1586
    %vm1589 = vcmp.eq.f32.partialorder %v1577, 0.0
    %v1590 = vand.u32 %v1577, 2147483648
    %v1591 = vsel %vm1589, %v1590, %v1588
    %v1592 = vmax.f32 %v1584, 1e-07
    %v1593 = vmax.f32 %v1591, 1e-07
    %v1594 = vld [vmem:[%s3 + $0x2] sm:$0x1]
    %v1595 = vld [vmem:[%s3 + $0xa] sm:$0x1]
    %v1596 = vld [vmem:[%s3 + $0x6] sm:$0x1]
    %v1597 = vld [vmem:[%s3 + $0xe] sm:$0x1]
    %s1598 = sld [smem:[#allocation6 + $0x100]]
    %v1599 = vstv %s1598
    %v1600 = vmul.f32 %v1599, %v84
    %v1601 = vmul.f32 %v1599, %v86
    %1603 = vset.pattern.permute.xlu0 0
    %1604 = vperm.xlu0 %1603, %v1594
    %v1605 = vpop.permute.xlu0 %1604
    %1608 = vset.pattern.permute.xlu0 0
    %1609 = vperm.xlu0 %1608, %v1595
    %v1610 = vpop.permute.xlu0 %1609
    %v1614 = vlaneseq
    %v1615 = vshrl.u32 %v1614, 7
    %v1616 = vsub.s32 0, %v1615
    %v1617 = vrot.slane %v1600, %v1616
    %v1618 = vlaneseq
    %v1619 = vshrl.u32 %v1618, 7
    %v1620 = vsub.s32 1, %v1619
    %v1621 = vrot.slane %v1600, %v1620
    %v1622 = vlaneseq
    %v1623 = vshrl.u32 %v1622, 7
    %v1624 = vsub.s32 0, %v1623
    %v1625 = vrot.slane %v1601, %v1624
    %v1626 = vlaneseq
    %v1627 = vshrl.u32 %v1626, 7
    %v1628 = vsub.s32 1, %v1627
    %v1629 = vrot.slane %v1601, %v1628
    %v1634 = vadd.f32 %v1605, %v1617
    %v1635 = vadd.f32 %v1605, %v1621
    %v1636 = vadd.f32 %v1610, %v1625
    %v1637 = vadd.f32 %v1610, %v1629
    %s1638 = sld [smem:[#allocation6 + $0x300]]
    %v1639 = vstv %s1638
    %v1640 = vmul.f32 %v1639, %v84
    %v1641 = vmul.f32 %v1639, %v86
    %1643 = vset.pattern.permute.xlu0 0
    %1644 = vperm.xlu0 %1643, %v1596
    %v1645 = vpop.permute.xlu0 %1644
    %1648 = vset.pattern.permute.xlu0 0
    %1649 = vperm.xlu0 %1648, %v1597
    %v1650 = vpop.permute.xlu0 %1649
    %v1654 = vlaneseq
    %v1655 = vshrl.u32 %v1654, 7
    %v1656 = vsub.s32 0, %v1655
    %v1657 = vrot.slane %v1640, %v1656
    %v1658 = vlaneseq
    %v1659 = vshrl.u32 %v1658, 7
    %v1660 = vsub.s32 1, %v1659
    %v1661 = vrot.slane %v1640, %v1660
    %v1662 = vlaneseq
    %v1663 = vshrl.u32 %v1662, 7
    %v1664 = vsub.s32 0, %v1663
    %v1665 = vrot.slane %v1641, %v1664
    %v1666 = vlaneseq
    %v1667 = vshrl.u32 %v1666, 7
    %v1668 = vsub.s32 1, %v1667
    %v1669 = vrot.slane %v1641, %v1668
    %v1674 = vadd.f32 %v1645, %v1657
    %v1675 = vadd.f32 %v1645, %v1661
    %v1676 = vadd.f32 %v1650, %v1665
    %v1677 = vadd.f32 %v1650, %v1669
    %s1678 = sld [smem:[#allocation6 + $0x101]]
    %v1679 = vstv %s1678
    %v1680 = vmul.f32 %v1679, %v88
    %v1681 = vmul.f32 %v1679, %v90
    %v1684 = vlaneseq
    %v1685 = vshrl.u32 %v1684, 7
    %v1686 = vsub.s32 0, %v1685
    %v1687 = vrot.slane %v1680, %v1686
    %v1688 = vlaneseq
    %v1689 = vshrl.u32 %v1688, 7
    %v1690 = vsub.s32 1, %v1689
    %v1691 = vrot.slane %v1680, %v1690
    %v1692 = vlaneseq
    %v1693 = vshrl.u32 %v1692, 7
    %v1694 = vsub.s32 0, %v1693
    %v1695 = vrot.slane %v1681, %v1694
    %v1696 = vlaneseq
    %v1697 = vshrl.u32 %v1696, 7
    %v1698 = vsub.s32 1, %v1697
    %v1699 = vrot.slane %v1681, %v1698
    %v1704 = vadd.f32 %v1634, %v1687
    %v1705 = vadd.f32 %v1635, %v1691
    %v1706 = vadd.f32 %v1636, %v1695
    %v1707 = vadd.f32 %v1637, %v1699
    %s1708 = sld [smem:[#allocation6 + $0x301]]
    %v1709 = vstv %s1708
    %v1710 = vmul.f32 %v1709, %v88
    %v1711 = vmul.f32 %v1709, %v90
    %v1714 = vlaneseq
    %v1715 = vshrl.u32 %v1714, 7
    %v1716 = vsub.s32 0, %v1715
    %v1717 = vrot.slane %v1710, %v1716
    %v1718 = vlaneseq
    %v1719 = vshrl.u32 %v1718, 7
    %v1720 = vsub.s32 1, %v1719
    %v1721 = vrot.slane %v1710, %v1720
    %v1722 = vlaneseq
    %v1723 = vshrl.u32 %v1722, 7
    %v1724 = vsub.s32 0, %v1723
    %v1725 = vrot.slane %v1711, %v1724
    %v1726 = vlaneseq
    %v1727 = vshrl.u32 %v1726, 7
    %v1728 = vsub.s32 1, %v1727
    %v1729 = vrot.slane %v1711, %v1728
    %v1734 = vadd.f32 %v1674, %v1717
    %v1735 = vadd.f32 %v1675, %v1721
    %v1736 = vadd.f32 %v1676, %v1725
    %v1737 = vadd.f32 %v1677, %v1729
    %s1738 = sld [smem:[#allocation6 + $0x102]]
    %v1739 = vstv %s1738
    %v1740 = vmul.f32 %v1739, %v92
    %v1741 = vmul.f32 %v1739, %v94
    %v1744 = vlaneseq
    %v1745 = vshrl.u32 %v1744, 7
    %v1746 = vsub.s32 0, %v1745
    %v1747 = vrot.slane %v1740, %v1746
    %v1748 = vlaneseq
    %v1749 = vshrl.u32 %v1748, 7
    %v1750 = vsub.s32 1, %v1749
    %v1751 = vrot.slane %v1740, %v1750
    %v1752 = vlaneseq
    %v1753 = vshrl.u32 %v1752, 7
    %v1754 = vsub.s32 0, %v1753
    %v1755 = vrot.slane %v1741, %v1754
    %v1756 = vlaneseq
    %v1757 = vshrl.u32 %v1756, 7
    %v1758 = vsub.s32 1, %v1757
    %v1759 = vrot.slane %v1741, %v1758
    %v1764 = vadd.f32 %v1704, %v1747
    %v1765 = vadd.f32 %v1705, %v1751
    %v1766 = vadd.f32 %v1706, %v1755
    %v1767 = vadd.f32 %v1707, %v1759
    %s1768 = sld [smem:[#allocation6 + $0x302]]
    %v1769 = vstv %s1768
    %v1770 = vmul.f32 %v1769, %v92
    %v1771 = vmul.f32 %v1769, %v94
    %v1774 = vlaneseq
    %v1775 = vshrl.u32 %v1774, 7
    %v1776 = vsub.s32 0, %v1775
    %v1777 = vrot.slane %v1770, %v1776
    %v1778 = vlaneseq
    %v1779 = vshrl.u32 %v1778, 7
    %v1780 = vsub.s32 1, %v1779
    %v1781 = vrot.slane %v1770, %v1780
    %v1782 = vlaneseq
    %v1783 = vshrl.u32 %v1782, 7
    %v1784 = vsub.s32 0, %v1783
    %v1785 = vrot.slane %v1771, %v1784
    %v1786 = vlaneseq
    %v1787 = vshrl.u32 %v1786, 7
    %v1788 = vsub.s32 1, %v1787
    %v1789 = vrot.slane %v1771, %v1788
    %v1794 = vadd.f32 %v1734, %v1777
    %v1795 = vadd.f32 %v1735, %v1781
    %v1796 = vadd.f32 %v1736, %v1785
    %v1797 = vadd.f32 %v1737, %v1789
    %s1798 = sld [smem:[#allocation6 + $0x103]]
    %v1799 = vstv %s1798
    %v1800 = vmul.f32 %v1799, %v96
    %v1801 = vmul.f32 %v1799, %v98
    %v1804 = vlaneseq
    %v1805 = vshrl.u32 %v1804, 7
    %v1806 = vsub.s32 0, %v1805
    %v1807 = vrot.slane %v1800, %v1806
    %v1808 = vlaneseq
    %v1809 = vshrl.u32 %v1808, 7
    %v1810 = vsub.s32 1, %v1809
    %v1811 = vrot.slane %v1800, %v1810
    %v1812 = vlaneseq
    %v1813 = vshrl.u32 %v1812, 7
    %v1814 = vsub.s32 0, %v1813
    %v1815 = vrot.slane %v1801, %v1814
    %v1816 = vlaneseq
    %v1817 = vshrl.u32 %v1816, 7
    %v1818 = vsub.s32 1, %v1817
    %v1819 = vrot.slane %v1801, %v1818
    %v1824 = vadd.f32 %v1764, %v1807
    %v1825 = vadd.f32 %v1765, %v1811
    %v1826 = vadd.f32 %v1766, %v1815
    %v1827 = vadd.f32 %v1767, %v1819
    %s1828 = sld [smem:[#allocation6 + $0x303]]
    %v1829 = vstv %s1828
    %v1830 = vmul.f32 %v1829, %v96
    %v1831 = vmul.f32 %v1829, %v98
    %v1834 = vlaneseq
    %v1835 = vshrl.u32 %v1834, 7
    %v1836 = vsub.s32 0, %v1835
    %v1837 = vrot.slane %v1830, %v1836
    %v1838 = vlaneseq
    %v1839 = vshrl.u32 %v1838, 7
    %v1840 = vsub.s32 1, %v1839
    %v1841 = vrot.slane %v1830, %v1840
    %v1842 = vlaneseq
    %v1843 = vshrl.u32 %v1842, 7
    %v1844 = vsub.s32 0, %v1843
    %v1845 = vrot.slane %v1831, %v1844
    %v1846 = vlaneseq
    %v1847 = vshrl.u32 %v1846, 7
    %v1848 = vsub.s32 1, %v1847
    %v1849 = vrot.slane %v1831, %v1848
    %v1854 = vadd.f32 %v1794, %v1837
    %v1855 = vadd.f32 %v1795, %v1841
    %v1856 = vadd.f32 %v1796, %v1845
    %v1857 = vadd.f32 %v1797, %v1849
    %v1858 = vmax.f32 %v1854, 1e-07
    %v1859 = vmax.f32 %v1855, 1e-07
    %v1860 = vmax.f32 %v1856, 1e-07
    %v1861 = vmax.f32 %v1857, 1e-07
    %s1862 = scalar_lea.vmem %s2, 2
    %v1863 = vld [vmem:[%s1862] ss:$4 sm:$0x3]
    %s1864 = scalar_lea.vmem %s2, 10
    %v1865 = vld [vmem:[%s1864] ss:$4 sm:$0x3]
    %v1866 = vmul.f32 %v1858, 0.5
    %v1867 = vmul.f32 %v1859, 0.5
    %v1868 = vmul.f32 %v1860, 0.5
    %v1869 = vmul.f32 %v1861, 0.5
    %v1870 = vmul.f32 %v1866, %v1858
    %v1871 = vmul.f32 %v1867, %v1859
    %v1872 = vmul.f32 %v1868, %v1860
    %v1873 = vmul.f32 %v1869, %v1861
    %v1874 = vadd.f32 %v1824, %v1870
    %v1875 = vadd.f32 %v1825, %v1871
    %v1876 = vadd.f32 %v1826, %v1872
    %v1877 = vadd.f32 %v1827, %v1873
    %v1880 = vlaneseq
    %v1881 = vshrl.u32 %v1880, 7
    %v1882 = vsub.s32 0, %v1881
    %v1883 = vrot.slane %v1863, %v1882
    %v1884 = vlaneseq
    %v1885 = vshrl.u32 %v1884, 7
    %v1886 = vsub.s32 1, %v1885
    %v1887 = vrot.slane %v1863, %v1886
    %v1888 = vlaneseq
    %v1889 = vshrl.u32 %v1888, 7
    %v1890 = vsub.s32 0, %v1889
    %v1891 = vrot.slane %v1865, %v1890
    %v1892 = vlaneseq
    %v1893 = vshrl.u32 %v1892, 7
    %v1894 = vsub.s32 1, %v1893
    %v1895 = vrot.slane %v1865, %v1894
    %v1900 = vmul.f32 %v1858, %v1883
    %v1901 = vmul.f32 %v1859, %v1887
    %v1902 = vmul.f32 %v1860, %v1891
    %v1903 = vmul.f32 %v1861, %v1895
    %v1904 = vadd.f32 %v1874, %v1900
    %v1905 = vadd.f32 %v1875, %v1901
    %v1906 = vadd.f32 %v1876, %v1902
    %v1907 = vadd.f32 %v1877, %v1903
    %v1908 = vmul.f32 %v1904, 1.442695
    %v1909 = vpow.pop %v1908
    %v1910 = vmul.f32 %v1905, 1.442695
    %v1911 = vpow.pop %v1910
    %v1912 = vmul.f32 %v1906, 1.442695
    %v1913 = vpow.pop %v1912
    %v1914 = vmul.f32 %v1907, 1.442695
    %v1915 = vpow.pop %v1914
    %v1920 = vcombine.low %v1909, %v1911
    %v1922 = vunpack.c.l.s4 1966171168
    %v1923 = vunpack.c.0.s8 %v1922
    %v1924 = vlaneseq
    %v1925 = vshrl.u32 %v1924, 7
    %v1926 = vsub.s32 %v1923, %v1925
    %v1927 = vrot.slane %v1920, %v1926
    %v1929 = vunpack.c.l.s4 1966171168
    %v1930 = vunpack.c.0.s8 %v1929
    %v1931 = vlaneseq
    %v1932 = vshrl.u32 %v1931, 7
    %v1933 = vsub.s32 %v1930, %v1932
    %v1934 = vrot.slane %v1927, %v1933
    %v1935 = vcombine.low %v1913, %v1915
    %v1937 = vunpack.c.l.s4 1966171168
    %v1938 = vunpack.c.0.s8 %v1937
    %v1939 = vlaneseq
    %v1940 = vshrl.u32 %v1939, 7
    %v1941 = vsub.s32 %v1938, %v1940
    %v1942 = vrot.slane %v1935, %v1941
    %v1944 = vunpack.c.l.s4 1966171168
    %v1945 = vunpack.c.0.s8 %v1944
    %v1946 = vlaneseq
    %v1947 = vshrl.u32 %v1946, 7
    %v1948 = vsub.s32 %v1945, %v1947
    %v1949 = vrot.slane %v1942, %v1948
    %v1952 = vmul.f32 %v92, %v1934
    %v1953 = vmul.f32 %v94, %v1949
    %v1954 = vsub.f32 %v1952, %v1507
    %v1955 = vsub.f32 %v1953, %v1509
    %v1956 = vand.u32 2147483647, %v1954
    %v1957 = vand.u32 2147483647, %v1955
    %v1960 = vcombine.low %v1956, %v1957
    %v1962 = vunpack.c.l.s4 1966171168
    %v1963 = vunpack.c.0.s8 %v1962
    %v1964 = vlaneseq
    %v1965 = vshrl.u32 %v1964, 7
    %v1966 = vsub.s32 %v1963, %v1965
    %v1967 = vrot.slane %v1960, %v1966
    %v1968 = vcombine.high %v1967, %v1967
    %v1970 = vunpack.c.l.s4 1966171168
    %v1971 = vunpack.c.0.s8 %v1970
    %v1972 = vlaneseq
    %v1973 = vshrl.u32 %v1972, 7
    %v1974 = vsub.s32 %v1971, %v1973
    %v1975 = vrot.slane %v1967, %v1974
    %v1977 = vunpack.c.l.s4 1966171168
    %v1978 = vunpack.c.0.s8 %v1977
    %v1979 = vlaneseq
    %v1980 = vshrl.u32 %v1979, 7
    %v1981 = vsub.s32 %v1978, %v1980
    %v1982 = vrot.slane %v1968, %v1981
    %v1985 = vsel %vm584, %v1975, 0.0
    %v1986 = vsel %vm584, %v1982, 0.0
    %v1987 = vadd.f32 %v1985, %v1986
    %1988 = vadd.xlane.f32.xlu0 %v1987
    %v1989 = vpop.xlane.xlu0 %1988
    %v1990 = vrot.slane %v1989, 4
    %v1991 = vadd.f32 %v1989, %v1990
    %v1992 = vrot.slane %v1991, 2
    %v1993 = vadd.f32 %v1991, %v1992
    %v1994 = vrot.slane %v1993, 1
    %v1995 = vadd.f32 %v1993, %v1994
    %s1996 = vtos %v1995
    %s1997 = sadd.f32 %s1297, %s1996
    %v1998 = vrcp.pop %v1592
    %v1999 = vrcp.pop %v1593
    %v2000 = vlog2.pop %v1592
    %v2001 = vmul.f32 %v2000, 0.6931472
    %v2002 = vlog2.pop %v1593
    %v2003 = vmul.f32 %v2002, 0.6931472
    %v2004 = vlog2.pop %v1858
    %v2005 = vmul.f32 %v2004, 0.6931472
    %v2006 = vlog2.pop %v1859
    %v2007 = vmul.f32 %v2006, 0.6931472
    %v2008 = vlog2.pop %v1860
    %v2009 = vmul.f32 %v2008, 0.6931472
    %v2010 = vlog2.pop %v1861
    %v2011 = vmul.f32 %v2010, 0.6931472
    %v2016 = vcombine.low %v2005, %v2007
    %v2018 = vunpack.c.l.s4 1966171168
    %v2019 = vunpack.c.0.s8 %v2018
    %v2020 = vlaneseq
    %v2021 = vshrl.u32 %v2020, 7
    %v2022 = vsub.s32 %v2019, %v2021
    %v2023 = vrot.slane %v2016, %v2022
    %v2025 = vunpack.c.l.s4 1966171168
    %v2026 = vunpack.c.0.s8 %v2025
    %v2027 = vlaneseq
    %v2028 = vshrl.u32 %v2027, 7
    %v2029 = vsub.s32 %v2026, %v2028
    %v2030 = vrot.slane %v2023, %v2029
    %v2031 = vcombine.low %v2009, %v2011
    %v2033 = vunpack.c.l.s4 1966171168
    %v2034 = vunpack.c.0.s8 %v2033
    %v2035 = vlaneseq
    %v2036 = vshrl.u32 %v2035, 7
    %v2037 = vsub.s32 %v2034, %v2036
    %v2038 = vrot.slane %v2031, %v2037
    %v2040 = vunpack.c.l.s4 1966171168
    %v2041 = vunpack.c.0.s8 %v2040
    %v2042 = vlaneseq
    %v2043 = vshrl.u32 %v2042, 7
    %v2044 = vsub.s32 %v2041, %v2043
    %v2045 = vrot.slane %v2038, %v2044
    %v2048 = vsub.f32 %v2001, %v2030
    %v2049 = vsub.f32 %v2003, %v2045
    %v2050 = vmul.f32 %v1858, %v1858
    %v2051 = vmul.f32 %v1859, %v1859
    %v2052 = vmul.f32 %v1860, %v1860
    %v2053 = vmul.f32 %v1861, %v1861
    %v2056 = vlaneseq
    %v2057 = vshrl.u32 %v2056, 7
    %v2058 = vsub.s32 0, %v2057
    %v2059 = vrot.slane %v1534, %v2058
    %v2060 = vlaneseq
    %v2061 = vshrl.u32 %v2060, 7
    %v2062 = vsub.s32 1, %v2061
    %v2063 = vrot.slane %v1534, %v2062
    %v2064 = vlaneseq
    %v2065 = vshrl.u32 %v2064, 7
    %v2066 = vsub.s32 0, %v2065
    %v2067 = vrot.slane %v1535, %v2066
    %v2068 = vlaneseq
    %v2069 = vshrl.u32 %v2068, 7
    %v2070 = vsub.s32 1, %v2069
    %v2071 = vrot.slane %v1535, %v2070
    %v2076 = vsub.f32 %v1824, %v2059
    %v2077 = vsub.f32 %v1825, %v2063
    %v2078 = vsub.f32 %v1826, %v2067
    %v2079 = vsub.f32 %v1827, %v2071
    %v2080 = vmul.f32 %v2076, %v2076
    %v2081 = vmul.f32 %v2077, %v2077
    %v2082 = vmul.f32 %v2078, %v2078
    %v2083 = vmul.f32 %v2079, %v2079
    %v2084 = vadd.f32 %v2050, %v2080
    %v2085 = vadd.f32 %v2051, %v2081
    %v2086 = vadd.f32 %v2052, %v2082
    %v2087 = vadd.f32 %v2053, %v2083
    %v2088 = vmul.f32 %v1998, 0.5
    %v2089 = vmul.f32 %v1999, 0.5
    %v2090 = vmul.f32 %v2088, %v1998
    %v2091 = vmul.f32 %v2089, %v1999
    %v2094 = vlaneseq
    %v2095 = vshrl.u32 %v2094, 7
    %v2096 = vsub.s32 0, %v2095
    %v2097 = vrot.slane %v2090, %v2096
    %v2098 = vlaneseq
    %v2099 = vshrl.u32 %v2098, 7
    %v2100 = vsub.s32 1, %v2099
    %v2101 = vrot.slane %v2090, %v2100
    %v2102 = vlaneseq
    %v2103 = vshrl.u32 %v2102, 7
    %v2104 = vsub.s32 0, %v2103
    %v2105 = vrot.slane %v2091, %v2104
    %v2106 = vlaneseq
    %v2107 = vshrl.u32 %v2106, 7
    %v2108 = vsub.s32 1, %v2107
    %v2109 = vrot.slane %v2091, %v2108
    %v2114 = vmul.f32 %v2084, %v2097
    %v2115 = vmul.f32 %v2085, %v2101
    %v2116 = vmul.f32 %v2086, %v2105
    %v2117 = vmul.f32 %v2087, %v2109
    %v2122 = vcombine.low %v2114, %v2115
    %v2124 = vunpack.c.l.s4 1966171168
    %v2125 = vunpack.c.0.s8 %v2124
    %v2126 = vlaneseq
    %v2127 = vshrl.u32 %v2126, 7
    %v2128 = vsub.s32 %v2125, %v2127
    %v2129 = vrot.slane %v2122, %v2128
    %v2131 = vunpack.c.l.s4 1966171168
    %v2132 = vunpack.c.0.s8 %v2131
    %v2133 = vlaneseq
    %v2134 = vshrl.u32 %v2133, 7
    %v2135 = vsub.s32 %v2132, %v2134
    %v2136 = vrot.slane %v2129, %v2135
    %v2137 = vcombine.low %v2116, %v2117
    %v2139 = vunpack.c.l.s4 1966171168
    %v2140 = vunpack.c.0.s8 %v2139
    %v2141 = vlaneseq
    %v2142 = vshrl.u32 %v2141, 7
    %v2143 = vsub.s32 %v2140, %v2142
    %v2144 = vrot.slane %v2137, %v2143
    %v2146 = vunpack.c.l.s4 1966171168
    %v2147 = vunpack.c.0.s8 %v2146
    %v2148 = vlaneseq
    %v2149 = vshrl.u32 %v2148, 7
    %v2150 = vsub.s32 %v2147, %v2149
    %v2151 = vrot.slane %v2144, %v2150
    %v2154 = vadd.f32 %v2048, %v2136
    %v2155 = vadd.f32 %v2049, %v2151
    %v2156 = vsub.f32 %v2154, 0.5
    %v2157 = vsub.f32 %v2155, 0.5
    %v2160 = vcombine.low %v2156, %v2157
    %v2162 = vunpack.c.l.s4 1966171168
    %v2163 = vunpack.c.0.s8 %v2162
    %v2164 = vlaneseq
    %v2165 = vshrl.u32 %v2164, 7
    %v2166 = vsub.s32 %v2163, %v2165
    %v2167 = vrot.slane %v2160, %v2166
    %v2168 = vcombine.high %v2167, %v2167
    %v2170 = vunpack.c.l.s4 1966171168
    %v2171 = vunpack.c.0.s8 %v2170
    %v2172 = vlaneseq
    %v2173 = vshrl.u32 %v2172, 7
    %v2174 = vsub.s32 %v2171, %v2173
    %v2175 = vrot.slane %v2167, %v2174
    %v2177 = vunpack.c.l.s4 1966171168
    %v2178 = vunpack.c.0.s8 %v2177
    %v2179 = vlaneseq
    %v2180 = vshrl.u32 %v2179, 7
    %v2181 = vsub.s32 %v2178, %v2180
    %v2182 = vrot.slane %v2168, %v2181
    %v2185 = vsel %vm584, %v2175, 0.0
    %v2186 = vsel %vm584, %v2182, 0.0
    %v2187 = vadd.f32 %v2185, %v2186
    %2188 = vadd.xlane.f32.xlu0 %v2187
    %v2189 = vpop.xlane.xlu0 %2188
    %v2190 = vrot.slane %v2189, 4
    %v2191 = vadd.f32 %v2189, %v2190
    %v2192 = vrot.slane %v2191, 2
    %v2193 = vadd.f32 %v2191, %v2192
    %v2194 = vrot.slane %v2193, 1
    %v2195 = vadd.f32 %v2193, %v2194
    %s2196 = vtos %v2195
    %s2197 = sadd.f32 %s1497, %s2196
    %s2198 = scalar_lea.vmem [#allocation2], 3
    %v2199 = vld [vmem:[%s2198] ss:$4 sm:$0x3]
    %s2200 = scalar_lea.vmem [#allocation2], 59
    %v2201 = vld [vmem:[%s2200] ss:$4 sm:$0x3]
    %s2202 = scalar_lea.vmem %s102, 3 [#allocation2]
    %v2203 = vld [vmem:[%s2202] ss:$4 sm:$0x3]
    %s2204 = scalar_lea.vmem %s102, 59 [#allocation2]
    %v2205 = vld [vmem:[%s2204] ss:$4 sm:$0x3]
    %s2206 = scalar_lea.vmem %s106, 3 [#allocation2]
    %v2207 = vld [vmem:[%s2206] ss:$4 sm:$0x3]
    %s2208 = scalar_lea.vmem %s106, 59 [#allocation2]
    %v2209 = vld [vmem:[%s2208] ss:$4 sm:$0x3]
    %s2210 = scalar_lea.vmem %s110, 3 [#allocation2]
    %v2211 = vld [vmem:[%s2210] ss:$4 sm:$0x3]
    %s2212 = scalar_lea.vmem %s110, 59 [#allocation2]
    %v2213 = vld [vmem:[%s2212] ss:$4 sm:$0x3]
    %s2214 = scalar_lea.vmem %s114, 3 [#allocation2]
    %v2215 = vld [vmem:[%s2214] ss:$4 sm:$0x3]
    %s2216 = scalar_lea.vmem %s114, 59 [#allocation2]
    %v2217 = vld [vmem:[%s2216] ss:$4 sm:$0x3]
    %s2218 = scalar_lea.vmem %s118, 3 [#allocation2]
    %v2219 = vld [vmem:[%s2218] ss:$4 sm:$0x3]
    %s2220 = scalar_lea.vmem %s118, 59 [#allocation2]
    %v2221 = vld [vmem:[%s2220] ss:$4 sm:$0x3]
    %v2222 = vadd.f32 %v2199, %v2203
    %v2223 = vadd.f32 %v2201, %v2205
    %v2224 = vadd.f32 %v2222, %v96
    %v2225 = vadd.f32 %v2223, %v98
    %v2226 = vadd.f32 %v2224, %v2207
    %v2227 = vadd.f32 %v2225, %v2209
    %v2228 = vadd.f32 %v2226, %v2211
    %v2229 = vadd.f32 %v2227, %v2213
    %v2230 = vadd.f32 %v2228, %v2215
    %v2231 = vadd.f32 %v2229, %v2217
    %v2232 = vadd.f32 %v2230, %v2219
    %v2233 = vadd.f32 %v2231, %v2221
    %v2234 = vmul.f32 %v2232, 0.14285715
    %v2235 = vmul.f32 %v2233, 0.14285715
    %v2236 = vsub.f32 %v2199, %v2234
    %v2237 = vsub.f32 %v2201, %v2235
    %v2238 = vmul.f32 %v2236, %v2236
    %v2239 = vmul.f32 %v2237, %v2237
    %v2240 = vsub.f32 %v2203, %v2234
    %v2241 = vsub.f32 %v2205, %v2235
    %v2242 = vmul.f32 %v2240, %v2240
    %v2243 = vmul.f32 %v2241, %v2241
    %v2244 = vadd.f32 %v2238, %v2242
    %v2245 = vadd.f32 %v2239, %v2243
    %v2246 = vsub.f32 %v96, %v2234
    %v2247 = vsub.f32 %v98, %v2235
    %v2248 = vmul.f32 %v2246, %v2246
    %v2249 = vmul.f32 %v2247, %v2247
    %v2250 = vadd.f32 %v2244, %v2248
    %v2251 = vadd.f32 %v2245, %v2249
    %v2252 = vsub.f32 %v2207, %v2234
    %v2253 = vsub.f32 %v2209, %v2235
    %v2254 = vmul.f32 %v2252, %v2252
    %v2255 = vmul.f32 %v2253, %v2253
    %v2256 = vadd.f32 %v2250, %v2254
    %v2257 = vadd.f32 %v2251, %v2255
    %v2258 = vsub.f32 %v2211, %v2234
    %v2259 = vsub.f32 %v2213, %v2235
    %v2260 = vmul.f32 %v2258, %v2258
    %v2261 = vmul.f32 %v2259, %v2259
    %v2262 = vadd.f32 %v2256, %v2260
    %v2263 = vadd.f32 %v2257, %v2261
    %v2264 = vsub.f32 %v2215, %v2234
    %v2265 = vsub.f32 %v2217, %v2235
    %v2266 = vmul.f32 %v2264, %v2264
    %v2267 = vmul.f32 %v2265, %v2265
    %v2268 = vadd.f32 %v2262, %v2266
    %v2269 = vadd.f32 %v2263, %v2267
    %v2270 = vsub.f32 %v2219, %v2234
    %v2271 = vsub.f32 %v2221, %v2235
    %v2272 = vmul.f32 %v2270, %v2270
    %v2273 = vmul.f32 %v2271, %v2271
    %v2274 = vadd.f32 %v2268, %v2272
    %v2275 = vadd.f32 %v2269, %v2273
    %v2276 = vmul.f32 %v2274, 0.16666667
    %v2277 = vmul.f32 %v2275, 0.16666667
    %v2278 = vrsqrt.pop %v2276
    %v2279 = vmul.f32 %v2276, %v2278
    %vm2280 = vcmp.eq.f32.partialorder %v2276, inf
    %v2281 = vsel %vm2280, %v2276, %v2279
    %vm2282 = vcmp.eq.f32.partialorder %v2276, 0.0
    %v2283 = vand.u32 %v2276, 2147483648
    %v2284 = vsel %vm2282, %v2283, %v2281
    %v2285 = vrsqrt.pop %v2277
    %v2286 = vmul.f32 %v2277, %v2285
    %vm2287 = vcmp.eq.f32.partialorder %v2277, inf
    %v2288 = vsel %vm2287, %v2277, %v2286
    %vm2289 = vcmp.eq.f32.partialorder %v2277, 0.0
    %v2290 = vand.u32 %v2277, 2147483648
    %v2291 = vsel %vm2289, %v2290, %v2288
    %v2292 = vmax.f32 %v2284, 1e-07
    %v2293 = vmax.f32 %v2291, 1e-07
    %v2294 = vld [vmem:[%s3 + $0x3] sm:$0x1]
    %v2295 = vld [vmem:[%s3 + $0xb] sm:$0x1]
    %v2296 = vld [vmem:[%s3 + $0x7] sm:$0x1]
    %v2297 = vld [vmem:[%s3 + $0xf] sm:$0x1]
    %s2298 = sld [smem:[#allocation6 + $0x180]]
    %v2299 = vstv %s2298
    %v2300 = vmul.f32 %v2299, %v84
    %v2301 = vmul.f32 %v2299, %v86
    %2303 = vset.pattern.permute.xlu0 0
    %2304 = vperm.xlu0 %2303, %v2294
    %v2305 = vpop.permute.xlu0 %2304
    %2308 = vset.pattern.permute.xlu0 0
    %2309 = vperm.xlu0 %2308, %v2295
    %v2310 = vpop.permute.xlu0 %2309
    %v2314 = vlaneseq
    %v2315 = vshrl.u32 %v2314, 7
    %v2316 = vsub.s32 0, %v2315
    %v2317 = vrot.slane %v2300, %v2316
    %v2318 = vlaneseq
    %v2319 = vshrl.u32 %v2318, 7
    %v2320 = vsub.s32 1, %v2319
    %v2321 = vrot.slane %v2300, %v2320
    %v2322 = vlaneseq
    %v2323 = vshrl.u32 %v2322, 7
    %v2324 = vsub.s32 0, %v2323
    %v2325 = vrot.slane %v2301, %v2324
    %v2326 = vlaneseq
    %v2327 = vshrl.u32 %v2326, 7
    %v2328 = vsub.s32 1, %v2327
    %v2329 = vrot.slane %v2301, %v2328
    %v2334 = vadd.f32 %v2305, %v2317
    %v2335 = vadd.f32 %v2305, %v2321
    %v2336 = vadd.f32 %v2310, %v2325
    %v2337 = vadd.f32 %v2310, %v2329
    %s2338 = sld [smem:[#allocation6 + $0x380]]
    %v2339 = vstv %s2338
    %v2340 = vmul.f32 %v2339, %v84
    %v2341 = vmul.f32 %v2339, %v86
    %2343 = vset.pattern.permute.xlu0 0
    %2344 = vperm.xlu0 %2343, %v2296
    %v2345 = vpop.permute.xlu0 %2344
    %2348 = vset.pattern.permute.xlu0 0
    %2349 = vperm.xlu0 %2348, %v2297
    %v2350 = vpop.permute.xlu0 %2349
    %v2354 = vlaneseq
    %v2355 = vshrl.u32 %v2354, 7
    %v2356 = vsub.s32 0, %v2355
    %v2357 = vrot.slane %v2340, %v2356
    %v2358 = vlaneseq
    %v2359 = vshrl.u32 %v2358, 7
    %v2360 = vsub.s32 1, %v2359
    %v2361 = vrot.slane %v2340, %v2360
    %v2362 = vlaneseq
    %v2363 = vshrl.u32 %v2362, 7
    %v2364 = vsub.s32 0, %v2363
    %v2365 = vrot.slane %v2341, %v2364
    %v2366 = vlaneseq
    %v2367 = vshrl.u32 %v2366, 7
    %v2368 = vsub.s32 1, %v2367
    %v2369 = vrot.slane %v2341, %v2368
    %v2374 = vadd.f32 %v2345, %v2357
    %v2375 = vadd.f32 %v2345, %v2361
    %v2376 = vadd.f32 %v2350, %v2365
    %v2377 = vadd.f32 %v2350, %v2369
    %s2378 = sld [smem:[#allocation6 + $0x181]]
    %v2379 = vstv %s2378
    %v2380 = vmul.f32 %v2379, %v88
    %v2381 = vmul.f32 %v2379, %v90
    %v2384 = vlaneseq
    %v2385 = vshrl.u32 %v2384, 7
    %v2386 = vsub.s32 0, %v2385
    %v2387 = vrot.slane %v2380, %v2386
    %v2388 = vlaneseq
    %v2389 = vshrl.u32 %v2388, 7
    %v2390 = vsub.s32 1, %v2389
    %v2391 = vrot.slane %v2380, %v2390
    %v2392 = vlaneseq
    %v2393 = vshrl.u32 %v2392, 7
    %v2394 = vsub.s32 0, %v2393
    %v2395 = vrot.slane %v2381, %v2394
    %v2396 = vlaneseq
    %v2397 = vshrl.u32 %v2396, 7
    %v2398 = vsub.s32 1, %v2397
    %v2399 = vrot.slane %v2381, %v2398
    %v2404 = vadd.f32 %v2334, %v2387
    %v2405 = vadd.f32 %v2335, %v2391
    %v2406 = vadd.f32 %v2336, %v2395
    %v2407 = vadd.f32 %v2337, %v2399
    %s2408 = sld [smem:[#allocation6 + $0x381]]
    %v2409 = vstv %s2408
    %v2410 = vmul.f32 %v2409, %v88
    %v2411 = vmul.f32 %v2409, %v90
    %v2414 = vlaneseq
    %v2415 = vshrl.u32 %v2414, 7
    %v2416 = vsub.s32 0, %v2415
    %v2417 = vrot.slane %v2410, %v2416
    %v2418 = vlaneseq
    %v2419 = vshrl.u32 %v2418, 7
    %v2420 = vsub.s32 1, %v2419
    %v2421 = vrot.slane %v2410, %v2420
    %v2422 = vlaneseq
    %v2423 = vshrl.u32 %v2422, 7
    %v2424 = vsub.s32 0, %v2423
    %v2425 = vrot.slane %v2411, %v2424
    %v2426 = vlaneseq
    %v2427 = vshrl.u32 %v2426, 7
    %v2428 = vsub.s32 1, %v2427
    %v2429 = vrot.slane %v2411, %v2428
    %v2434 = vadd.f32 %v2374, %v2417
    %v2435 = vadd.f32 %v2375, %v2421
    %v2436 = vadd.f32 %v2376, %v2425
    %v2437 = vadd.f32 %v2377, %v2429
    %s2438 = sld [smem:[#allocation6 + $0x182]]
    %v2439 = vstv %s2438
    %v2440 = vmul.f32 %v2439, %v92
    %v2441 = vmul.f32 %v2439, %v94
    %v2444 = vlaneseq
    %v2445 = vshrl.u32 %v2444, 7
    %v2446 = vsub.s32 0, %v2445
    %v2447 = vrot.slane %v2440, %v2446
    %v2448 = vlaneseq
    %v2449 = vshrl.u32 %v2448, 7
    %v2450 = vsub.s32 1, %v2449
    %v2451 = vrot.slane %v2440, %v2450
    %v2452 = vlaneseq
    %v2453 = vshrl.u32 %v2452, 7
    %v2454 = vsub.s32 0, %v2453
    %v2455 = vrot.slane %v2441, %v2454
    %v2456 = vlaneseq
    %v2457 = vshrl.u32 %v2456, 7
    %v2458 = vsub.s32 1, %v2457
    %v2459 = vrot.slane %v2441, %v2458
    %v2464 = vadd.f32 %v2404, %v2447
    %v2465 = vadd.f32 %v2405, %v2451
    %v2466 = vadd.f32 %v2406, %v2455
    %v2467 = vadd.f32 %v2407, %v2459
    %s2468 = sld [smem:[#allocation6 + $0x382]]
    %v2469 = vstv %s2468
    %v2470 = vmul.f32 %v2469, %v92
    %v2471 = vmul.f32 %v2469, %v94
    %v2474 = vlaneseq
    %v2475 = vshrl.u32 %v2474, 7
    %v2476 = vsub.s32 0, %v2475
    %v2477 = vrot.slane %v2470, %v2476
    %v2478 = vlaneseq
    %v2479 = vshrl.u32 %v2478, 7
    %v2480 = vsub.s32 1, %v2479
    %v2481 = vrot.slane %v2470, %v2480
    %v2482 = vlaneseq
    %v2483 = vshrl.u32 %v2482, 7
    %v2484 = vsub.s32 0, %v2483
    %v2485 = vrot.slane %v2471, %v2484
    %v2486 = vlaneseq
    %v2487 = vshrl.u32 %v2486, 7
    %v2488 = vsub.s32 1, %v2487
    %v2489 = vrot.slane %v2471, %v2488
    %v2494 = vadd.f32 %v2434, %v2477
    %v2495 = vadd.f32 %v2435, %v2481
    %v2496 = vadd.f32 %v2436, %v2485
    %v2497 = vadd.f32 %v2437, %v2489
    %s2498 = sld [smem:[#allocation6 + $0x183]]
    %v2499 = vstv %s2498
    %v2500 = vmul.f32 %v2499, %v96
    %v2501 = vmul.f32 %v2499, %v98
    %v2504 = vlaneseq
    %v2505 = vshrl.u32 %v2504, 7
    %v2506 = vsub.s32 0, %v2505
    %v2507 = vrot.slane %v2500, %v2506
    %v2508 = vlaneseq
    %v2509 = vshrl.u32 %v2508, 7
    %v2510 = vsub.s32 1, %v2509
    %v2511 = vrot.slane %v2500, %v2510
    %v2512 = vlaneseq
    %v2513 = vshrl.u32 %v2512, 7
    %v2514 = vsub.s32 0, %v2513
    %v2515 = vrot.slane %v2501, %v2514
    %v2516 = vlaneseq
    %v2517 = vshrl.u32 %v2516, 7
    %v2518 = vsub.s32 1, %v2517
    %v2519 = vrot.slane %v2501, %v2518
    %v2524 = vadd.f32 %v2464, %v2507
    %v2525 = vadd.f32 %v2465, %v2511
    %v2526 = vadd.f32 %v2466, %v2515
    %v2527 = vadd.f32 %v2467, %v2519
    %s2528 = sld [smem:[#allocation6 + $0x383]]
    %v2529 = vstv %s2528
    %v2530 = vmul.f32 %v2529, %v96
    %v2531 = vmul.f32 %v2529, %v98
    %v2534 = vlaneseq
    %v2535 = vshrl.u32 %v2534, 7
    %v2536 = vsub.s32 0, %v2535
    %v2537 = vrot.slane %v2530, %v2536
    %v2538 = vlaneseq
    %v2539 = vshrl.u32 %v2538, 7
    %v2540 = vsub.s32 1, %v2539
    %v2541 = vrot.slane %v2530, %v2540
    %v2542 = vlaneseq
    %v2543 = vshrl.u32 %v2542, 7
    %v2544 = vsub.s32 0, %v2543
    %v2545 = vrot.slane %v2531, %v2544
    %v2546 = vlaneseq
    %v2547 = vshrl.u32 %v2546, 7
    %v2548 = vsub.s32 1, %v2547
    %v2549 = vrot.slane %v2531, %v2548
    %v2554 = vadd.f32 %v2494, %v2537
    %v2555 = vadd.f32 %v2495, %v2541
    %v2556 = vadd.f32 %v2496, %v2545
    %v2557 = vadd.f32 %v2497, %v2549
    %v2558 = vmax.f32 %v2554, 1e-07
    %v2559 = vmax.f32 %v2555, 1e-07
    %v2560 = vmax.f32 %v2556, 1e-07
    %v2561 = vmax.f32 %v2557, 1e-07
    %s2562 = scalar_lea.vmem %s2, 3
    %v2563 = vld [vmem:[%s2562] ss:$4 sm:$0x3]
    %s2564 = scalar_lea.vmem %s2, 11
    %v2565 = vld [vmem:[%s2564] ss:$4 sm:$0x3]
    %v2566 = vmul.f32 %v2558, 0.5
    %v2567 = vmul.f32 %v2559, 0.5
    %v2568 = vmul.f32 %v2560, 0.5
    %v2569 = vmul.f32 %v2561, 0.5
    %v2570 = vmul.f32 %v2566, %v2558
    %v2571 = vmul.f32 %v2567, %v2559
    %v2572 = vmul.f32 %v2568, %v2560
    %v2573 = vmul.f32 %v2569, %v2561
    %v2574 = vadd.f32 %v2524, %v2570
    %v2575 = vadd.f32 %v2525, %v2571
    %v2576 = vadd.f32 %v2526, %v2572
    %v2577 = vadd.f32 %v2527, %v2573
    %v2580 = vlaneseq
    %v2581 = vshrl.u32 %v2580, 7
    %v2582 = vsub.s32 0, %v2581
    %v2583 = vrot.slane %v2563, %v2582
    %v2584 = vlaneseq
    %v2585 = vshrl.u32 %v2584, 7
    %v2586 = vsub.s32 1, %v2585
    %v2587 = vrot.slane %v2563, %v2586
    %v2588 = vlaneseq
    %v2589 = vshrl.u32 %v2588, 7
    %v2590 = vsub.s32 0, %v2589
    %v2591 = vrot.slane %v2565, %v2590
    %v2592 = vlaneseq
    %v2593 = vshrl.u32 %v2592, 7
    %v2594 = vsub.s32 1, %v2593
    %v2595 = vrot.slane %v2565, %v2594
    %v2600 = vmul.f32 %v2558, %v2583
    %v2601 = vmul.f32 %v2559, %v2587
    %v2602 = vmul.f32 %v2560, %v2591
    %v2603 = vmul.f32 %v2561, %v2595
    %v2604 = vadd.f32 %v2574, %v2600
    %v2605 = vadd.f32 %v2575, %v2601
    %v2606 = vadd.f32 %v2576, %v2602
    %v2607 = vadd.f32 %v2577, %v2603
    %v2608 = vmul.f32 %v2604, 1.442695
    %v2609 = vpow.pop %v2608
    %v2610 = vmul.f32 %v2605, 1.442695
    %v2611 = vpow.pop %v2610
    %v2612 = vmul.f32 %v2606, 1.442695
    %v2613 = vpow.pop %v2612
    %v2614 = vmul.f32 %v2607, 1.442695
    %v2615 = vpow.pop %v2614
    %v2620 = vcombine.low %v2609, %v2611
    %v2622 = vunpack.c.l.s4 1966171168
    %v2623 = vunpack.c.0.s8 %v2622
    %v2624 = vlaneseq
    %v2625 = vshrl.u32 %v2624, 7
    %v2626 = vsub.s32 %v2623, %v2625
    %v2627 = vrot.slane %v2620, %v2626
    %v2629 = vunpack.c.l.s4 1966171168
    %v2630 = vunpack.c.0.s8 %v2629
    %v2631 = vlaneseq
    %v2632 = vshrl.u32 %v2631, 7
    %v2633 = vsub.s32 %v2630, %v2632
    %v2634 = vrot.slane %v2627, %v2633
    %v2635 = vcombine.low %v2613, %v2615
    %v2637 = vunpack.c.l.s4 1966171168
    %v2638 = vunpack.c.0.s8 %v2637
    %v2639 = vlaneseq
    %v2640 = vshrl.u32 %v2639, 7
    %v2641 = vsub.s32 %v2638, %v2640
    %v2642 = vrot.slane %v2635, %v2641
    %v2644 = vunpack.c.l.s4 1966171168
    %v2645 = vunpack.c.0.s8 %v2644
    %v2646 = vlaneseq
    %v2647 = vshrl.u32 %v2646, 7
    %v2648 = vsub.s32 %v2645, %v2647
    %v2649 = vrot.slane %v2642, %v2648
    %v2652 = vmul.f32 %v96, %v2634
    %v2653 = vmul.f32 %v98, %v2649
    %v2654 = vsub.f32 %v2652, %v2207
    %v2655 = vsub.f32 %v2653, %v2209
    %v2656 = vand.u32 2147483647, %v2654
    %v2657 = vand.u32 2147483647, %v2655
    %v2660 = vcombine.low %v2656, %v2657
    %v2662 = vunpack.c.l.s4 1966171168
    %v2663 = vunpack.c.0.s8 %v2662
    %v2664 = vlaneseq
    %v2665 = vshrl.u32 %v2664, 7
    %v2666 = vsub.s32 %v2663, %v2665
    %v2667 = vrot.slane %v2660, %v2666
    %v2668 = vcombine.high %v2667, %v2667
    %v2670 = vunpack.c.l.s4 1966171168
    %v2671 = vunpack.c.0.s8 %v2670
    %v2672 = vlaneseq
    %v2673 = vshrl.u32 %v2672, 7
    %v2674 = vsub.s32 %v2671, %v2673
    %v2675 = vrot.slane %v2667, %v2674
    %v2677 = vunpack.c.l.s4 1966171168
    %v2678 = vunpack.c.0.s8 %v2677
    %v2679 = vlaneseq
    %v2680 = vshrl.u32 %v2679, 7
    %v2681 = vsub.s32 %v2678, %v2680
    %v2682 = vrot.slane %v2668, %v2681
    %v2685 = vsel %vm584, %v2675, 0.0
    %v2686 = vsel %vm584, %v2682, 0.0
    %v2687 = vadd.f32 %v2685, %v2686
    %2688 = vadd.xlane.f32.xlu0 %v2687
    %v2689 = vpop.xlane.xlu0 %2688
    %v2690 = vrot.slane %v2689, 4
    %v2691 = vadd.f32 %v2689, %v2690
    %v2692 = vrot.slane %v2691, 2
    %v2693 = vadd.f32 %v2691, %v2692
    %v2694 = vrot.slane %v2693, 1
    %v2695 = vadd.f32 %v2693, %v2694
    %s2696 = vtos %v2695
    %s2697 = sadd.f32 %s1997, %s2696
    %v2698 = vrcp.pop %v2292
    %v2699 = vrcp.pop %v2293
    %v2700 = vlog2.pop %v2292
    %v2701 = vmul.f32 %v2700, 0.6931472
    %v2702 = vlog2.pop %v2293
    %v2703 = vmul.f32 %v2702, 0.6931472
    %v2704 = vlog2.pop %v2558
    %v2705 = vmul.f32 %v2704, 0.6931472
    %v2706 = vlog2.pop %v2559
    %v2707 = vmul.f32 %v2706, 0.6931472
    %v2708 = vlog2.pop %v2560
    %v2709 = vmul.f32 %v2708, 0.6931472
    %v2710 = vlog2.pop %v2561
    %v2711 = vmul.f32 %v2710, 0.6931472
    %v2716 = vcombine.low %v2705, %v2707
    %v2718 = vunpack.c.l.s4 1966171168
    %v2719 = vunpack.c.0.s8 %v2718
    %v2720 = vlaneseq
    %v2721 = vshrl.u32 %v2720, 7
    %v2722 = vsub.s32 %v2719, %v2721
    %v2723 = vrot.slane %v2716, %v2722
    %v2725 = vunpack.c.l.s4 1966171168
    %v2726 = vunpack.c.0.s8 %v2725
    %v2727 = vlaneseq
    %v2728 = vshrl.u32 %v2727, 7
    %v2729 = vsub.s32 %v2726, %v2728
    %v2730 = vrot.slane %v2723, %v2729
    %v2731 = vcombine.low %v2709, %v2711
    %v2733 = vunpack.c.l.s4 1966171168
    %v2734 = vunpack.c.0.s8 %v2733
    %v2735 = vlaneseq
    %v2736 = vshrl.u32 %v2735, 7
    %v2737 = vsub.s32 %v2734, %v2736
    %v2738 = vrot.slane %v2731, %v2737
    %v2740 = vunpack.c.l.s4 1966171168
    %v2741 = vunpack.c.0.s8 %v2740
    %v2742 = vlaneseq
    %v2743 = vshrl.u32 %v2742, 7
    %v2744 = vsub.s32 %v2741, %v2743
    %v2745 = vrot.slane %v2738, %v2744
    %v2748 = vsub.f32 %v2701, %v2730
    %v2749 = vsub.f32 %v2703, %v2745
    %v2750 = vmul.f32 %v2558, %v2558
    %v2751 = vmul.f32 %v2559, %v2559
    %v2752 = vmul.f32 %v2560, %v2560
    %v2753 = vmul.f32 %v2561, %v2561
    %v2756 = vlaneseq
    %v2757 = vshrl.u32 %v2756, 7
    %v2758 = vsub.s32 0, %v2757
    %v2759 = vrot.slane %v2234, %v2758
    %v2760 = vlaneseq
    %v2761 = vshrl.u32 %v2760, 7
    %v2762 = vsub.s32 1, %v2761
    %v2763 = vrot.slane %v2234, %v2762
    %v2764 = vlaneseq
    %v2765 = vshrl.u32 %v2764, 7
    %v2766 = vsub.s32 0, %v2765
    %v2767 = vrot.slane %v2235, %v2766
    %v2768 = vlaneseq
    %v2769 = vshrl.u32 %v2768, 7
    %v2770 = vsub.s32 1, %v2769
    %v2771 = vrot.slane %v2235, %v2770
    %v2776 = vsub.f32 %v2524, %v2759
    %v2777 = vsub.f32 %v2525, %v2763
    %v2778 = vsub.f32 %v2526, %v2767
    %v2779 = vsub.f32 %v2527, %v2771
    %v2780 = vmul.f32 %v2776, %v2776
    %v2781 = vmul.f32 %v2777, %v2777
    %v2782 = vmul.f32 %v2778, %v2778
    %v2783 = vmul.f32 %v2779, %v2779
    %v2784 = vadd.f32 %v2750, %v2780
    %v2785 = vadd.f32 %v2751, %v2781
    %v2786 = vadd.f32 %v2752, %v2782
    %v2787 = vadd.f32 %v2753, %v2783
    %v2788 = vmul.f32 %v2698, 0.5
    %v2789 = vmul.f32 %v2699, 0.5
    %v2790 = vmul.f32 %v2788, %v2698
    %v2791 = vmul.f32 %v2789, %v2699
    %v2794 = vlaneseq
    %v2795 = vshrl.u32 %v2794, 7
    %v2796 = vsub.s32 0, %v2795
    %v2797 = vrot.slane %v2790, %v2796
    %v2798 = vlaneseq
    %v2799 = vshrl.u32 %v2798, 7
    %v2800 = vsub.s32 1, %v2799
    %v2801 = vrot.slane %v2790, %v2800
    %v2802 = vlaneseq
    %v2803 = vshrl.u32 %v2802, 7
    %v2804 = vsub.s32 0, %v2803
    %v2805 = vrot.slane %v2791, %v2804
    %v2806 = vlaneseq
    %v2807 = vshrl.u32 %v2806, 7
    %v2808 = vsub.s32 1, %v2807
    %v2809 = vrot.slane %v2791, %v2808
    %v2814 = vmul.f32 %v2784, %v2797
    %v2815 = vmul.f32 %v2785, %v2801
    %v2816 = vmul.f32 %v2786, %v2805
    %v2817 = vmul.f32 %v2787, %v2809
    %v2822 = vcombine.low %v2814, %v2815
    %v2824 = vunpack.c.l.s4 1966171168
    %v2825 = vunpack.c.0.s8 %v2824
    %v2826 = vlaneseq
    %v2827 = vshrl.u32 %v2826, 7
    %v2828 = vsub.s32 %v2825, %v2827
    %v2829 = vrot.slane %v2822, %v2828
    %v2831 = vunpack.c.l.s4 1966171168
    %v2832 = vunpack.c.0.s8 %v2831
    %v2833 = vlaneseq
    %v2834 = vshrl.u32 %v2833, 7
    %v2835 = vsub.s32 %v2832, %v2834
    %v2836 = vrot.slane %v2829, %v2835
    %v2837 = vcombine.low %v2816, %v2817
    %v2839 = vunpack.c.l.s4 1966171168
    %v2840 = vunpack.c.0.s8 %v2839
    %v2841 = vlaneseq
    %v2842 = vshrl.u32 %v2841, 7
    %v2843 = vsub.s32 %v2840, %v2842
    %v2844 = vrot.slane %v2837, %v2843
    %v2846 = vunpack.c.l.s4 1966171168
    %v2847 = vunpack.c.0.s8 %v2846
    %v2848 = vlaneseq
    %v2849 = vshrl.u32 %v2848, 7
    %v2850 = vsub.s32 %v2847, %v2849
    %v2851 = vrot.slane %v2844, %v2850
    %v2854 = vadd.f32 %v2748, %v2836
    %v2855 = vadd.f32 %v2749, %v2851
    %v2856 = vsub.f32 %v2854, 0.5
    %v2857 = vsub.f32 %v2855, 0.5
    %v2860 = vcombine.low %v2856, %v2857
    %v2862 = vunpack.c.l.s4 1966171168
    %v2863 = vunpack.c.0.s8 %v2862
    %v2864 = vlaneseq
    %v2865 = vshrl.u32 %v2864, 7
    %v2866 = vsub.s32 %v2863, %v2865
    %v2867 = vrot.slane %v2860, %v2866
    %v2868 = vcombine.high %v2867, %v2867
    %v2870 = vunpack.c.l.s4 1966171168
    %v2871 = vunpack.c.0.s8 %v2870
    %v2872 = vlaneseq
    %v2873 = vshrl.u32 %v2872, 7
    %v2874 = vsub.s32 %v2871, %v2873
    %v2875 = vrot.slane %v2867, %v2874
    %v2877 = vunpack.c.l.s4 1966171168
    %v2878 = vunpack.c.0.s8 %v2877
    %v2879 = vlaneseq
    %v2880 = vshrl.u32 %v2879, 7
    %v2881 = vsub.s32 %v2878, %v2880
    %v2882 = vrot.slane %v2868, %v2881
    %v2885 = vsel %vm584, %v2875, 0.0
    %v2886 = vsel %vm584, %v2882, 0.0
    %v2887 = vadd.f32 %v2885, %v2886
    %2888 = vadd.xlane.f32.xlu0 %v2887
    %v2889 = vpop.xlane.xlu0 %2888
    %v2890 = vrot.slane %v2889, 4
    %v2891 = vadd.f32 %v2889, %v2890
    %v2892 = vrot.slane %v2891, 2
    %v2893 = vadd.f32 %v2891, %v2892
    %v2894 = vrot.slane %v2893, 1
    %v2895 = vadd.f32 %v2893, %v2894
    %s2896 = vtos %v2895
    %s2897 = sadd.f32 %s2197, %s2896
    %v2898 = vlaneseq
    %v2899 = vshrl.u32 %v2898, 7
    %vm2900 = vcmp.eq.s32.totalorder %v2899, 0
    %vm2901 = vcmp.eq.s32.totalorder %v2899, 1
    %v2902 = vstv %s2897
    %v2903 = vsel %vm2901, %v2902, 0.0
    %v2904 = vstv %s2697
    %v2905 = vsel %vm2900, %v2904, %v2903
    %2906 = vst [vmem:[#allocation9] sm:$0xff] %v2905
    // Predicated region
    $region26: #{tpu_custom_call.1} parent=1 // pred_check
      _
    $region27: #{tpu_custom_call.1} parent=1 // pred_check_branch
      %2908 = sbr.rel (0) target = $region29
    $region28: #{tpu_custom_call.1} parent=1 // pred_region
      %s2910 = ssub.s32 128, 128
      %2911 = vsyncadd [#allocation7], %s2910
      %s2913 = sshll.u32 [#allocation9], 4
      %s2914 = int_to_ptr.vmem [resolvable:$true] %s2913
      %2916 = dma.vmem_to_hbm [thread:$0]  %s2914, 128, %s5, [#allocation7]
    $region29: #{tpu_custom_call.1} parent=1 // pred_fallthru
      _
    // Predicated region
    $region30: #{tpu_custom_call.1} parent=1 // pred_check
      _
    $region31: #{tpu_custom_call.1} parent=1 // pred_check_branch
      %2918 = sbr.rel (0) target = $region33
    $region32: #{tpu_custom_call.1} parent=1 // pred_region
      %2919 = dma.done [#allocation7], 128
    $region33: #{tpu_custom_call.1} parent=1 // pred_fallthru
      _
    %2920 = vsyncpa [#allocation7], 1
    %2921 = vsyncpa [#allocation8], 1
  %2922 = vsyncmov [#allocation3]
  %s2923 = vpop.sfrf %2922
  %p2924 = scmp.eq.s32.totalorder %s2923, 0
  %p2925 = pneg %p2924
  %2927 = shalt.err (%p2925)
  %s2928 = scalar_lea.sflag [#allocation3], 1
  %2929 = vsyncmov %s2928
  %s2930 = vpop.sfrf %2929
  %p2931 = scmp.eq.s32.totalorder %s2930, 0
  %p2932 = pneg %p2931
  %2934 = shalt.err (%p2932)

</llo_original>
